<compile_context>
chip_gen: v7x
topology: tpu7x:2x2x1
jax: 0.10.0
libtpu: 0.0.40
codegen_flags: <defaults>
</compile_context>

<pallas_src>
import functools

import jax
import jax.numpy as jnp
from jax.experimental import pallas as pl
from jax.experimental.pallas import tpu as pltpu


# Channel widths.  *_P are lane-dense padded widths (multiples of 128); the
# padded weight rows/columns are zero so the math equals the logical
# 48/192/48/1792-wide network exactly.
C_IN = 3
K_RAW = 9 * C_IN            # 27 = 3x3 taps * 3 input channels
K_PAD = 128                 # stem im2col contraction padded to a full lane tile
C_STEM, C_STEM_P = 48, 128
C_EXP, C_EXP_P = 192, 256
C_SE, C_SE_P = 48, 128
C_HEAD = 1792               # already 14 * 128
HEAD_CHUNK = 256            # head processed in 7 lane-aligned chunks
W_OFF = 8                   # sublane-aligned offset of the dw-conv interior


def _silu(v):
    return v * jax.nn.sigmoid(v)


# ---------------------------------------------------------------------------
# One fused kernel: stem + MBConv-SE + head + pool + classifier (per image)
# ---------------------------------------------------------------------------

def _b4se_fused_kernel(
        patches_ref,
        stem_w_ref, stem_s_ref, stem_b_ref,
        exp_w_ref, exp_s_ref, exp_b_ref,
        dw_w_ref, dw_s_ref, dw_b_ref,
        se_w1_ref, se_b1_ref, se_w2_ref, se_b2_ref,
        proj_w_ref, proj_s_ref, proj_b_ref,
        head_w_ref, head_s_ref, head_b_ref,
        fc_w_ref, fc_b_ref,
        out_ref,
        dw_pad_ref,                      # VMEM scratch (H+2, 2*W_OFF+W, C_EXP_P)
        *, H, W, head_chunk):
    f32 = jnp.float32
    bf16 = jnp.bfloat16
    HW = H * W

    # ---- stem: 3x3/s2 conv (matmul on pre-gathered patches) + BN + SiLU ----
    patches = patches_ref[0].astype(bf16)                          # (HW, K_PAD)
    stem = jnp.dot(patches, stem_w_ref[...], preferred_element_type=f32)
    stem = _silu(stem * stem_s_ref[...] + stem_b_ref[...])         # (HW, 128)

    # ---- MBConv expand 1x1 + BN + SiLU ----
    expd = jnp.dot(stem.astype(bf16), exp_w_ref[...], preferred_element_type=f32)
    expd = _silu(expd * exp_s_ref[...] + exp_b_ref[...])           # (HW, 256)
    C = expd.shape[-1]

    # ---- depthwise 3x3 (stride 1, zero pad 1) + BN + SiLU ----
    # Spatially padded activation lives in a VMEM scratch with the interior at
    # a sublane-aligned offset (W_OFF), so the store is fully aligned; the 3
    # shifted column reads are hoisted out of the tap loop (3 sub-tile reads
    # instead of 9), all other shifts are on the untiled leading (H) axis.
    dw_pad_ref[...] = jnp.zeros_like(dw_pad_ref)
    dw_pad_ref[1:H + 1, W_OFF:W_OFF + W, :] = expd.reshape(H, W, C)
    taps = dw_w_ref[...]                                           # (9, C)
    acc = jnp.zeros((H, W, C), f32)
    for dx in range(3):
        col = dw_pad_ref[:, W_OFF - 1 + dx:W_OFF - 1 + dx + W, :]  # (H+2, W, C)
        for dy in range(3):
            acc = acc + col[dy:dy + H] * taps[3 * dy + dx]
    dw = _silu(acc * dw_s_ref[...] + dw_b_ref[...])                # (H, W, C)

    # ---- wide squeeze-excite: GAP -> FC -> SiLU -> FC -> sigmoid -> scale ----
    pooled = (jnp.sum(dw, axis=(0, 1)) * (1.0 / HW)).reshape(1, C)
    h1 = jnp.dot(pooled.astype(bf16), se_w1_ref[...], preferred_element_type=f32)
    h1 = _silu(h1 + se_b1_ref[...])                                # (1, 128)
    gate = jax.nn.sigmoid(
        jnp.dot(h1.astype(bf16), se_w2_ref[...], preferred_element_type=f32)
        + se_b2_ref[...])                                          # (1, C)
    se = dw * gate

    # ---- project 1x1 + BN (no act) + residual (stem stays in vregs) ----
    proj = jnp.dot(se.reshape(HW, C).astype(bf16), proj_w_ref[...],
                   preferred_element_type=f32)
    proj = proj * proj_s_ref[...] + proj_b_ref[...] + stem         # (HW, 128)

    # ---- head 1x1 -> 1792 + BN + SiLU, global avg pool, Linear(1792 -> 1) ----
    # Chunked over N so the (HW, 1792) feature map never materializes; the
    # classifier is a VPU multiply-reduce, not an N=1 MXU matmul.
    xb = proj.astype(bf16)
    n_out = head_w_ref.shape[1]
    y = jnp.zeros((1, 1), f32)
    for n0 in range(0, n_out, head_chunk):
        h = jnp.dot(xb, head_w_ref[:, n0:n0 + head_chunk],
                    preferred_element_type=f32)                    # (HW, chunk)
        h = _silu(h * head_s_ref[:, n0:n0 + head_chunk]
                  + head_b_ref[:, n0:n0 + head_chunk])
        y = y + jnp.sum(h * fc_w_ref[:, n0:n0 + head_chunk],
                        axis=(0, 1), keepdims=True)
    y = y * (1.0 / HW) + fc_b_ref[...]                             # (1, 1)

    # Lane-dense output tile; wrapper slices [:, 0, :1].
    out_ref[...] = jnp.broadcast_to(y.reshape(1, 1, 1), out_ref.shape)


def _full_spec(a):
    nd = a.ndim
    return pl.BlockSpec(a.shape, lambda b, _nd=nd: (0,) * _nd)


def b4se_forward_fused(patches, weights, *, H, W):
    B, HW, KP = patches.shape
    kernel = functools.partial(_b4se_fused_kernel, H=H, W=W,
                               head_chunk=HEAD_CHUNK)
    return pl.pallas_call(
        kernel,
        out_shape=jax.ShapeDtypeStruct((B, 8, 128), jnp.float32),
        grid_spec=pltpu.PrefetchScalarGridSpec(
            num_scalar_prefetch=0,
            grid=(B,),
            in_specs=[pl.BlockSpec((1, HW, KP), lambda b: (b, 0, 0))]
                     + [_full_spec(w) for w in weights],
            out_specs=pl.BlockSpec((1, 8, 128), lambda b: (b, 0, 0)),
            scratch_shapes=[
                pltpu.VMEM((H + 2, 2 * W_OFF + W, C_EXP_P), jnp.float32)]),
        compiler_params=pltpu.CompilerParams(
            dimension_semantics=("parallel",)),   # shards batch over v7x TCs
    )(patches, *weights)


# ---------------------------------------------------------------------------
# Parameters (deterministic synthetic init; BN pre-folded; zero-padded lanes)
# ---------------------------------------------------------------------------

def _pad2(a, rows, cols):
    return jnp.pad(a, ((0, rows - a.shape[0]), (0, cols - a.shape[1])))


def init_params(key):
    ks = jax.random.split(key, 20)

    def nrm(k, shape, s=0.05):
        return jax.random.normal(k, shape, jnp.float32) * s

    bf16 = jnp.bfloat16
    p = {}
    # stem: Conv2d(3, 48, 3x3, stride 2, pad 1, bias=False) as im2col matmul.
    # TODO(synk): if real pretrained weights were loaded, the (ky, kx, cin)
    # flatten order must match a permutation of torch's (cout, cin, kh, kw).
    p["stem_w"] = _pad2(nrm(ks[0], (K_RAW, C_STEM)), K_PAD, C_STEM_P).astype(bf16)
    p["stem_scale"] = _pad2(1.0 + nrm(ks[1], (1, C_STEM), 0.1), 1, C_STEM_P)
    p["stem_bias"] = _pad2(nrm(ks[2], (1, C_STEM), 0.1), 1, C_STEM_P)

    # MBConv expand 1x1: 48 -> 192 (+BN+SiLU)
    p["exp_w"] = _pad2(nrm(ks[3], (C_STEM, C_EXP)), C_STEM_P, C_EXP_P).astype(bf16)
    p["exp_scale"] = _pad2(1.0 + nrm(ks[4], (1, C_EXP), 0.1), 1, C_EXP_P)
    p["exp_bias"] = _pad2(nrm(ks[5], (1, C_EXP), 0.1), 1, C_EXP_P)

    # depthwise 3x3 on 192 channels (+BN+SiLU); taps stored as (9, C)
    p["dw_w"] = _pad2(nrm(ks[6], (9, C_EXP), 0.1), 9, C_EXP_P)
    p["dw_scale"] = _pad2(1.0 + nrm(ks[7], (1, C_EXP), 0.1), 1, C_EXP_P)
    p["dw_bias"] = _pad2(nrm(ks[8], (1, C_EXP), 0.1), 1, C_EXP_P)

    # wide squeeze-excite: 192 -> 48 -> 192
    p["se_w1"] = _pad2(nrm(ks[9], (C_EXP, C_SE)), C_EXP_P, C_SE_P).astype(bf16)
    p["se_b1"] = _pad2(nrm(ks[10], (1, C_SE), 0.1), 1, C_SE_P)
    p["se_w2"] = _pad2(nrm(ks[11], (C_SE, C_EXP)), C_SE_P, C_EXP_P).astype(bf16)
    p["se_b2"] = _pad2(nrm(ks[12], (1, C_EXP), 0.1), 1, C_EXP_P)

    # project 1x1: 192 -> 48 (+BN, no act, residual)
    p["proj_w"] = _pad2(nrm(ks[13], (C_EXP, C_STEM)), C_EXP_P, C_STEM_P).astype(bf16)
    p["proj_scale"] = _pad2(1.0 + nrm(ks[14], (1, C_STEM), 0.1), 1, C_STEM_P)
    p["proj_bias"] = _pad2(nrm(ks[15], (1, C_STEM), 0.1), 1, C_STEM_P)

    # features head 1x1: 48 -> 1792 (+BN+SiLU)
    p["head_w"] = _pad2(nrm(ks[16], (C_STEM, C_HEAD), 0.02),
                        C_STEM_P, C_HEAD).astype(bf16)
    p["head_scale"] = 1.0 + nrm(ks[17], (1, C_HEAD), 0.1)
    p["head_bias"] = nrm(ks[18], (1, C_HEAD), 0.1)

    # classifier: Linear(1792, 1, bias=True); weight kept (1, 1792) for the
    # in-kernel VPU multiply-reduce.
    p["fc_w"] = nrm(ks[19], (1, C_HEAD), 0.02)
    p["fc_b"] = jnp.zeros((1, 1), jnp.float32)
    return p


_WEIGHT_ORDER = ("stem_w", "stem_scale", "stem_bias",
                 "exp_w", "exp_scale", "exp_bias",
                 "dw_w", "dw_scale", "dw_bias",
                 "se_w1", "se_b1", "se_w2", "se_b2",
                 "proj_w", "proj_scale", "proj_bias",
                 "head_w", "head_scale", "head_bias",
                 "fc_w", "fc_b")


# ---------------------------------------------------------------------------
# Forward pass: wrapper-side im2col (lane-dense K) + one fused Pallas kernel
# ---------------------------------------------------------------------------

def forward(x_nchw, p):
    x = jnp.transpose(x_nchw, (0, 2, 3, 1)).astype(jnp.float32)     # NHWC
    B, H, W, C = x.shape
    Ho, Wo = H // 2, W // 2

    # stem im2col (3x3, stride 2, pad 1); K padded 27 -> 128 (lane dense).
    xp = jnp.pad(x, ((0, 0), (1, 1), (1, 1), (0, 0)))
    cols = []
    for dy in range(3):
        for dx in range(3):
            cols.append(xp[:, dy:dy + 2 * Ho:2, dx:dx + 2 * Wo:2, :])
    patches = jnp.concatenate(cols, axis=-1).reshape(B, Ho * Wo, 9 * C)
    patches = jnp.pad(patches, ((0, 0), (0, 0), (0, K_PAD - 9 * C)))

    weights = [p[k] for k in _WEIGHT_ORDER]
    out = b4se_forward_fused(patches, weights, H=Ho, W=Wo)          # (B, 8, 128)
    return out[:, 0, :1]                                            # (B, 1)


if __name__ == "__main__":
    key = jax.random.PRNGKey(0)
    k_x, k_p = jax.random.split(key)
    x = jax.random.normal(k_x, (2, 3, 16, 16), jnp.float32)         # NCHW input
    params = init_params(k_p)

    fwd = jax.jit(forward)
    y = fwd(x, params)
    jax.block_until_ready(y)
    assert y.shape == (2, 1) and y.dtype == jnp.float32
    assert bool(jnp.all(jnp.isfinite(y)))
    print("KERNEL_OK")
</pallas_src>

<mosaic_0001>
module attributes {stable_mosaic.version = 11 : i64} {
  func.func @_b4se_fused_kernel(%arg0: i32, %arg1: memref<1x64x128xf32, #tpu.memory_space<vmem>>, %arg2: memref<128x128xbf16, #tpu.memory_space<vmem>>, %arg3: memref<1x128xf32, #tpu.memory_space<vmem>>, %arg4: memref<1x128xf32, #tpu.memory_space<vmem>>, %arg5: memref<128x256xbf16, #tpu.memory_space<vmem>>, %arg6: memref<1x256xf32, #tpu.memory_space<vmem>>, %arg7: memref<1x256xf32, #tpu.memory_space<vmem>>, %arg8: memref<9x256xf32, #tpu.memory_space<vmem>>, %arg9: memref<1x256xf32, #tpu.memory_space<vmem>>, %arg10: memref<1x256xf32, #tpu.memory_space<vmem>>, %arg11: memref<256x128xbf16, #tpu.memory_space<vmem>>, %arg12: memref<1x128xf32, #tpu.memory_space<vmem>>, %arg13: memref<128x256xbf16, #tpu.memory_space<vmem>>, %arg14: memref<1x256xf32, #tpu.memory_space<vmem>>, %arg15: memref<256x128xbf16, #tpu.memory_space<vmem>>, %arg16: memref<1x128xf32, #tpu.memory_space<vmem>>, %arg17: memref<1x128xf32, #tpu.memory_space<vmem>>, %arg18: memref<128x1792xbf16, #tpu.memory_space<vmem>>, %arg19: memref<1x1792xf32, #tpu.memory_space<vmem>>, %arg20: memref<1x1792xf32, #tpu.memory_space<vmem>>, %arg21: memref<1x1792xf32, #tpu.memory_space<vmem>>, %arg22: memref<1x1xf32, #tpu.memory_space<vmem>>, %arg23: memref<1x8x128xf32, #tpu.memory_space<vmem>>, %arg24: memref<10x24x256xf32, #tpu.memory_space<vmem>>) attributes {dimension_semantics = [#tpu.dimension_semantics<parallel>], iteration_bounds = array<i64: 2>, scalar_prefetch = 0 : i64, scratch_operands = 1 : i64, tpu.core_type = #tpu.core_type<tc>, window_params = [{transform_indices = @transform_0, window_bounds = array<i64: 1, 64, 128>}, {pipeline_mode = #tpu.pipeline_mode<synchronous>, transform_indices = @transform_1, window_bounds = array<i64: 128, 128>}, {pipeline_mode = #tpu.pipeline_mode<synchronous>, transform_indices = @transform_2, window_bounds = array<i64: 1, 128>}, {pipeline_mode = #tpu.pipeline_mode<synchronous>, transform_indices = @transform_3, window_bounds = array<i64: 1, 128>}, {pipeline_mode = #tpu.pipeline_mode<synchronous>, transform_indices = @transform_4, window_bounds = array<i64: 128, 256>}, {pipeline_mode = #tpu.pipeline_mode<synchronous>, transform_indices = @transform_5, window_bounds = array<i64: 1, 256>}, {pipeline_mode = #tpu.pipeline_mode<synchronous>, transform_indices = @transform_6, window_bounds = array<i64: 1, 256>}, {pipeline_mode = #tpu.pipeline_mode<synchronous>, transform_indices = @transform_7, window_bounds = array<i64: 9, 256>}, {pipeline_mode = #tpu.pipeline_mode<synchronous>, transform_indices = @transform_8, window_bounds = array<i64: 1, 256>}, {pipeline_mode = #tpu.pipeline_mode<synchronous>, transform_indices = @transform_9, window_bounds = array<i64: 1, 256>}, {pipeline_mode = #tpu.pipeline_mode<synchronous>, transform_indices = @transform_10, window_bounds = array<i64: 256, 128>}, {pipeline_mode = #tpu.pipeline_mode<synchronous>, transform_indices = @transform_11, window_bounds = array<i64: 1, 128>}, {pipeline_mode = #tpu.pipeline_mode<synchronous>, transform_indices = @transform_12, window_bounds = array<i64: 128, 256>}, {pipeline_mode = #tpu.pipeline_mode<synchronous>, transform_indices = @transform_13, window_bounds = array<i64: 1, 256>}, {pipeline_mode = #tpu.pipeline_mode<synchronous>, transform_indices = @transform_14, window_bounds = array<i64: 256, 128>}, {pipeline_mode = #tpu.pipeline_mode<synchronous>, transform_indices = @transform_15, window_bounds = array<i64: 1, 128>}, {pipeline_mode = #tpu.pipeline_mode<synchronous>, transform_indices = @transform_16, window_bounds = array<i64: 1, 128>}, {pipeline_mode = #tpu.pipeline_mode<synchronous>, transform_indices = @transform_17, window_bounds = array<i64: 128, 1792>}, {pipeline_mode = #tpu.pipeline_mode<synchronous>, transform_indices = @transform_18, window_bounds = array<i64: 1, 1792>}, {pipeline_mode = #tpu.pipeline_mode<synchronous>, transform_indices = @transform_19, window_bounds = array<i64: 1, 1792>}, {pipeline_mode = #tpu.pipeline_mode<synchronous>, transform_indices = @transform_20, window_bounds = array<i64: 1, 1792>}, {pipeline_mode = #tpu.pipeline_mode<synchronous>, transform_indices = @transform_21, window_bounds = array<i64: 1, 1>}, {transform_indices = @transform_22, window_bounds = array<i64: 1, 8, 128>}]} {
    %c0 = arith.constant 0 : index
    %c0_0 = arith.constant 0 : index
    %c0_1 = arith.constant 0 : index
    %0 = vector.load %arg1[%c0, %c0_0, %c0_1] : memref<1x64x128xf32, #tpu.memory_space<vmem>>, vector<1x64x128xf32>
    %1 = vector.shape_cast %0 : vector<1x64x128xf32> to vector<64x128xf32>
    %2 = arith.truncf %1 : vector<64x128xf32> to vector<64x128xbf16>
    %c0_2 = arith.constant 0 : index
    %c0_3 = arith.constant 0 : index
    %3 = vector.load %arg2[%c0_2, %c0_3] : memref<128x128xbf16, #tpu.memory_space<vmem>>, vector<128x128xbf16>
    %cst = arith.constant dense<0.000000e+00> : vector<64x128xf32>
    %4 = tpu.matmul %2, %3, %cst {dimension_numbers = #tpu.dot_dimension_numbers<[1], [0], [0], [1], [0, 0, 1, 1], [], []>} : vector<64x128xbf16>, vector<128x128xbf16>, vector<64x128xf32> -> vector<64x128xf32>
    %c0_4 = arith.constant 0 : index
    %c0_5 = arith.constant 0 : index
    %5 = vector.load %arg3[%c0_4, %c0_5] : memref<1x128xf32, #tpu.memory_space<vmem>>, vector<1x128xf32>
    %6 = vector.broadcast %5 : vector<1x128xf32> to vector<64x128xf32>
    %7 = arith.mulf %4, %6 : vector<64x128xf32>
    %c0_6 = arith.constant 0 : index
    %c0_7 = arith.constant 0 : index
    %8 = vector.load %arg4[%c0_6, %c0_7] : memref<1x128xf32, #tpu.memory_space<vmem>>, vector<1x128xf32>
    %9 = vector.broadcast %8 : vector<1x128xf32> to vector<64x128xf32>
    %10 = arith.addf %7, %9 : vector<64x128xf32>
    %11 = arith.negf %10 : vector<64x128xf32>
    %12 = math.exp %11 : vector<64x128xf32>
    %cst_8 = arith.constant 1.000000e+00 : f32
    %13 = vector.broadcast %cst_8 : f32 to vector<64x128xf32>
    %14 = arith.addf %13, %12 : vector<64x128xf32>
    %15 = arith.divf %13, %14 : vector<64x128xf32>
    %16 = arith.mulf %10, %15 : vector<64x128xf32>
    %17 = arith.truncf %16 : vector<64x128xf32> to vector<64x128xbf16>
    %c0_9 = arith.constant 0 : index
    %c0_10 = arith.constant 0 : index
    %18 = vector.load %arg5[%c0_9, %c0_10] : memref<128x256xbf16, #tpu.memory_space<vmem>>, vector<128x256xbf16>
    %cst_11 = arith.constant dense<0.000000e+00> : vector<64x256xf32>
    %19 = tpu.matmul %17, %18, %cst_11 {dimension_numbers = #tpu.dot_dimension_numbers<[1], [0], [0], [1], [0, 0, 1, 1], [], []>} : vector<64x128xbf16>, vector<128x256xbf16>, vector<64x256xf32> -> vector<64x256xf32>
    %c0_12 = arith.constant 0 : index
    %c0_13 = arith.constant 0 : index
    %20 = vector.load %arg6[%c0_12, %c0_13] : memref<1x256xf32, #tpu.memory_space<vmem>>, vector<1x256xf32>
    %21 = vector.broadcast %20 : vector<1x256xf32> to vector<64x256xf32>
    %22 = arith.mulf %19, %21 : vector<64x256xf32>
    %c0_14 = arith.constant 0 : index
    %c0_15 = arith.constant 0 : index
    %23 = vector.load %arg7[%c0_14, %c0_15] : memref<1x256xf32, #tpu.memory_space<vmem>>, vector<1x256xf32>
    %24 = vector.broadcast %23 : vector<1x256xf32> to vector<64x256xf32>
    %25 = arith.addf %22, %24 : vector<64x256xf32>
    %26 = arith.negf %25 : vector<64x256xf32>
    %27 = math.exp %26 : vector<64x256xf32>
    %cst_16 = arith.constant 1.000000e+00 : f32
    %28 = vector.broadcast %cst_16 : f32 to vector<64x256xf32>
    %29 = arith.addf %28, %27 : vector<64x256xf32>
    %30 = arith.divf %28, %29 : vector<64x256xf32>
    %31 = arith.mulf %25, %30 : vector<64x256xf32>
    %cst_17 = arith.constant 0.000000e+00 : f32
    %32 = vector.broadcast %cst_17 : f32 to vector<10x24x256xf32>
    %c0_18 = arith.constant 0 : index
    %c0_19 = arith.constant 0 : index
    %c0_20 = arith.constant 0 : index
    %33 = vector.load %arg24[%c0_18, %c0_19, %c0_20] : memref<10x24x256xf32, #tpu.memory_space<vmem>>, vector<10x24x256xf32>
    tpu.vector_store %arg24[%c0_18, %c0_19, %c0_20], %32 {strides = array<i32>} : memref<10x24x256xf32, #tpu.memory_space<vmem>>, vector<10x24x256xf32>,
    %34 = vector.shape_cast %31 : vector<64x256xf32> to vector<8x8x256xf32>
    %c1 = arith.constant 1 : index
    %c8 = arith.constant 8 : index
    %c0_21 = arith.constant 0 : index
    %35 = vector.load %arg24[%c1, %c8, %c0_21] : memref<10x24x256xf32, #tpu.memory_space<vmem>>, vector<8x8x256xf32>
    tpu.vector_store %arg24[%c1, %c8, %c0_21], %34 {strides = array<i32>} : memref<10x24x256xf32, #tpu.memory_space<vmem>>, vector<8x8x256xf32>,
    %c0_22 = arith.constant 0 : index
    %c0_23 = arith.constant 0 : index
    %36 = vector.load %arg8[%c0_22, %c0_23] : memref<9x256xf32, #tpu.memory_space<vmem>>, vector<9x256xf32>
    %cst_24 = arith.constant 0.000000e+00 : f32
    %37 = vector.broadcast %cst_24 : f32 to vector<8x8x256xf32>
    %c0_25 = arith.constant 0 : index
    %c7 = arith.constant 7 : index
    %c0_26 = arith.constant 0 : index
    %38 = vector.load %arg24[%c0_25, %c7, %c0_26] : memref<10x24x256xf32, #tpu.memory_space<vmem>>, vector<10x8x256xf32>
    %39 = vector.extract_strided_slice %38 {offsets = [0, 0, 0], sizes = [8, 8, 256], strides = [1, 1, 1]} : vector<10x8x256xf32> to vector<8x8x256xf32>
    %40 = vector.extract_strided_slice %36 {offsets = [0, 0], sizes = [1, 256], strides = [1, 1]} : vector<9x256xf32> to vector<1x256xf32>
    %41 = vector.shape_cast %40 : vector<1x256xf32> to vector<256xf32>
    %42 = vector.shape_cast %41 : vector<256xf32> to vector<1x1x256xf32>
    %43 = vector.broadcast %42 : vector<1x1x256xf32> to vector<8x8x256xf32>
    %44 = arith.mulf %39, %43 : vector<8x8x256xf32>
    %45 = arith.addf %37, %44 : vector<8x8x256xf32>
    %46 = vector.extract_strided_slice %38 {offsets = [1, 0, 0], sizes = [8, 8, 256], strides = [1, 1, 1]} : vector<10x8x256xf32> to vector<8x8x256xf32>
    %47 = vector.extract_strided_slice %36 {offsets = [3, 0], sizes = [1, 256], strides = [1, 1]} : vector<9x256xf32> to vector<1x256xf32>
    %48 = vector.shape_cast %47 : vector<1x256xf32> to vector<256xf32>
    %49 = vector.shape_cast %48 : vector<256xf32> to vector<1x1x256xf32>
    %50 = vector.broadcast %49 : vector<1x1x256xf32> to vector<8x8x256xf32>
    %51 = arith.mulf %46, %50 : vector<8x8x256xf32>
    %52 = arith.addf %45, %51 : vector<8x8x256xf32>
    %53 = vector.extract_strided_slice %38 {offsets = [2, 0, 0], sizes = [8, 8, 256], strides = [1, 1, 1]} : vector<10x8x256xf32> to vector<8x8x256xf32>
    %54 = vector.extract_strided_slice %36 {offsets = [6, 0], sizes = [1, 256], strides = [1, 1]} : vector<9x256xf32> to vector<1x256xf32>
    %55 = vector.shape_cast %54 : vector<1x256xf32> to vector<256xf32>
    %56 = vector.shape_cast %55 : vector<256xf32> to vector<1x1x256xf32>
    %57 = vector.broadcast %56 : vector<1x1x256xf32> to vector<8x8x256xf32>
    %58 = arith.mulf %53, %57 : vector<8x8x256xf32>
    %59 = arith.addf %52, %58 : vector<8x8x256xf32>
    %c0_27 = arith.constant 0 : index
    %c8_28 = arith.constant 8 : index
    %c0_29 = arith.constant 0 : index
    %60 = vector.load %arg24[%c0_27, %c8_28, %c0_29] : memref<10x24x256xf32, #tpu.memory_space<vmem>>, vector<10x8x256xf32>
    %61 = vector.extract_strided_slice %60 {offsets = [0, 0, 0], sizes = [8, 8, 256], strides = [1, 1, 1]} : vector<10x8x256xf32> to vector<8x8x256xf32>
    %62 = vector.extract_strided_slice %36 {offsets = [1, 0], sizes = [1, 256], strides = [1, 1]} : vector<9x256xf32> to vector<1x256xf32>
    %63 = vector.shape_cast %62 : vector<1x256xf32> to vector<256xf32>
    %64 = vector.shape_cast %63 : vector<256xf32> to vector<1x1x256xf32>
    %65 = vector.broadcast %64 : vector<1x1x256xf32> to vector<8x8x256xf32>
    %66 = arith.mulf %61, %65 : vector<8x8x256xf32>
    %67 = arith.addf %59, %66 : vector<8x8x256xf32>
    %68 = vector.extract_strided_slice %60 {offsets = [1, 0, 0], sizes = [8, 8, 256], strides = [1, 1, 1]} : vector<10x8x256xf32> to vector<8x8x256xf32>
    %69 = vector.extract_strided_slice %36 {offsets = [4, 0], sizes = [1, 256], strides = [1, 1]} : vector<9x256xf32> to vector<1x256xf32>
    %70 = vector.shape_cast %69 : vector<1x256xf32> to vector<256xf32>
    %71 = vector.shape_cast %70 : vector<256xf32> to vector<1x1x256xf32>
    %72 = vector.broadcast %71 : vector<1x1x256xf32> to vector<8x8x256xf32>
    %73 = arith.mulf %68, %72 : vector<8x8x256xf32>
    %74 = arith.addf %67, %73 : vector<8x8x256xf32>
    %75 = vector.extract_strided_slice %60 {offsets = [2, 0, 0], sizes = [8, 8, 256], strides = [1, 1, 1]} : vector<10x8x256xf32> to vector<8x8x256xf32>
    %76 = vector.extract_strided_slice %36 {offsets = [7, 0], sizes = [1, 256], strides = [1, 1]} : vector<9x256xf32> to vector<1x256xf32>
    %77 = vector.shape_cast %76 : vector<1x256xf32> to vector<256xf32>
    %78 = vector.shape_cast %77 : vector<256xf32> to vector<1x1x256xf32>
    %79 = vector.broadcast %78 : vector<1x1x256xf32> to vector<8x8x256xf32>
    %80 = arith.mulf %75, %79 : vector<8x8x256xf32>
    %81 = arith.addf %74, %80 : vector<8x8x256xf32>
    %c0_30 = arith.constant 0 : index
    %c9 = arith.constant 9 : index
    %c0_31 = arith.constant 0 : index
    %82 = vector.load %arg24[%c0_30, %c9, %c0_31] : memref<10x24x256xf32, #tpu.memory_space<vmem>>, vector<10x8x256xf32>
    %83 = vector.extract_strided_slice %82 {offsets = [0, 0, 0], sizes = [8, 8, 256], strides = [1, 1, 1]} : vector<10x8x256xf32> to vector<8x8x256xf32>
    %84 = vector.extract_strided_slice %36 {offsets = [2, 0], sizes = [1, 256], strides = [1, 1]} : vector<9x256xf32> to vector<1x256xf32>
    %85 = vector.shape_cast %84 : vector<1x256xf32> to vector<256xf32>
    %86 = vector.shape_cast %85 : vector<256xf32> to vector<1x1x256xf32>
    %87 = vector.broadcast %86 : vector<1x1x256xf32> to vector<8x8x256xf32>
    %88 = arith.mulf %83, %87 : vector<8x8x256xf32>
    %89 = arith.addf %81, %88 : vector<8x8x256xf32>
    %90 = vector.extract_strided_slice %82 {offsets = [1, 0, 0], sizes = [8, 8, 256], strides = [1, 1, 1]} : vector<10x8x256xf32> to vector<8x8x256xf32>
    %91 = vector.extract_strided_slice %36 {offsets = [5, 0], sizes = [1, 256], strides = [1, 1]} : vector<9x256xf32> to vector<1x256xf32>
    %92 = vector.shape_cast %91 : vector<1x256xf32> to vector<256xf32>
    %93 = vector.shape_cast %92 : vector<256xf32> to vector<1x1x256xf32>
    %94 = vector.broadcast %93 : vector<1x1x256xf32> to vector<8x8x256xf32>
    %95 = arith.mulf %90, %94 : vector<8x8x256xf32>
    %96 = arith.addf %89, %95 : vector<8x8x256xf32>
    %97 = vector.extract_strided_slice %82 {offsets = [2, 0, 0], sizes = [8, 8, 256], strides = [1, 1, 1]} : vector<10x8x256xf32> to vector<8x8x256xf32>
    %98 = vector.extract_strided_slice %36 {offsets = [8, 0], sizes = [1, 256], strides = [1, 1]} : vector<9x256xf32> to vector<1x256xf32>
    %99 = vector.shape_cast %98 : vector<1x256xf32> to vector<256xf32>
    %100 = vector.shape_cast %99 : vector<256xf32> to vector<1x1x256xf32>
    %101 = vector.broadcast %100 : vector<1x1x256xf32> to vector<8x8x256xf32>
    %102 = arith.mulf %97, %101 : vector<8x8x256xf32>
    %103 = arith.addf %96, %102 : vector<8x8x256xf32>
    %c0_32 = arith.constant 0 : index
    %c0_33 = arith.constant 0 : index
    %104 = vector.load %arg9[%c0_32, %c0_33] : memref<1x256xf32, #tpu.memory_space<vmem>>, vector<1x256xf32>
    %105 = vector.shape_cast %104 : vector<1x256xf32> to vector<1x1x256xf32>
    %106 = vector.broadcast %105 : vector<1x1x256xf32> to vector<8x8x256xf32>
    %107 = arith.mulf %103, %106 : vector<8x8x256xf32>
    %c0_34 = arith.constant 0 : index
    %c0_35 = arith.constant 0 : index
    %108 = vector.load %arg10[%c0_34, %c0_35] : memref<1x256xf32, #tpu.memory_space<vmem>>, vector<1x256xf32>
    %109 = vector.shape_cast %108 : vector<1x256xf32> to vector<1x1x256xf32>
    %110 = vector.broadcast %109 : vector<1x1x256xf32> to vector<8x8x256xf32>
    %111 = arith.addf %107, %110 : vector<8x8x256xf32>
    %112 = arith.negf %111 : vector<8x8x256xf32>
    %113 = math.exp %112 : vector<8x8x256xf32>
    %cst_36 = arith.constant 1.000000e+00 : f32
    %114 = vector.broadcast %cst_36 : f32 to vector<8x8x256xf32>
    %115 = arith.addf %114, %113 : vector<8x8x256xf32>
    %116 = arith.divf %114, %115 : vector<8x8x256xf32>
    %117 = arith.mulf %111, %116 : vector<8x8x256xf32>
    %cst_37 = arith.constant dense<0.000000e+00> : vector<256xf32>
    %118 = vector.multi_reduction <add>, %117, %cst_37 [0, 1] : vector<8x8x256xf32> to vector<256xf32>
    %cst_38 = arith.constant 1.562500e-02 : f32
    %119 = vector.broadcast %cst_38 : f32 to vector<256xf32>
    %120 = arith.mulf %118, %119 : vector<256xf32>
    %121 = vector.shape_cast %120 : vector<256xf32> to vector<1x256xf32>
    %122 = arith.truncf %121 : vector<1x256xf32> to vector<1x256xbf16>
    %c0_39 = arith.constant 0 : index
    %c0_40 = arith.constant 0 : index
    %123 = vector.load %arg11[%c0_39, %c0_40] : memref<256x128xbf16, #tpu.memory_space<vmem>>, vector<256x128xbf16>
    %cst_41 = arith.constant dense<0.000000e+00> : vector<1x128xf32>
    %124 = tpu.matmul %122, %123, %cst_41 {dimension_numbers = #tpu.dot_dimension_numbers<[1], [0], [0], [1], [0, 0, 1, 1], [], []>} : vector<1x256xbf16>, vector<256x128xbf16>, vector<1x128xf32> -> vector<1x128xf32>
    %c0_42 = arith.constant 0 : index
    %c0_43 = arith.constant 0 : index
    %125 = vector.load %arg12[%c0_42, %c0_43] : memref<1x128xf32, #tpu.memory_space<vmem>>, vector<1x128xf32>
    %126 = arith.addf %124, %125 : vector<1x128xf32>
    %127 = arith.negf %126 : vector<1x128xf32>
    %128 = math.exp %127 : vector<1x128xf32>
    %cst_44 = arith.constant 1.000000e+00 : f32
    %129 = vector.broadcast %cst_44 : f32 to vector<1x128xf32>
    %130 = arith.addf %129, %128 : vector<1x128xf32>
    %131 = arith.divf %129, %130 : vector<1x128xf32>
    %132 = arith.mulf %126, %131 : vector<1x128xf32>
    %133 = arith.truncf %132 : vector<1x128xf32> to vector<1x128xbf16>
    %c0_45 = arith.constant 0 : index
    %c0_46 = arith.constant 0 : index
    %134 = vector.load %arg13[%c0_45, %c0_46] : memref<128x256xbf16, #tpu.memory_space<vmem>>, vector<128x256xbf16>
    %cst_47 = arith.constant dense<0.000000e+00> : vector<1x256xf32>
    %135 = tpu.matmul %133, %134, %cst_47 {dimension_numbers = #tpu.dot_dimension_numbers<[1], [0], [0], [1], [0, 0, 1, 1], [], []>} : vector<1x128xbf16>, vector<128x256xbf16>, vector<1x256xf32> -> vector<1x256xf32>
    %c0_48 = arith.constant 0 : index
    %c0_49 = arith.constant 0 : index
    %136 = vector.load %arg14[%c0_48, %c0_49] : memref<1x256xf32, #tpu.memory_space<vmem>>, vector<1x256xf32>
    %137 = arith.addf %135, %136 : vector<1x256xf32>
    %138 = arith.negf %137 : vector<1x256xf32>
    %139 = math.exp %138 : vector<1x256xf32>
    %cst_50 = arith.constant 1.000000e+00 : f32
    %140 = vector.broadcast %cst_50 : f32 to vector<1x256xf32>
    %141 = arith.addf %140, %139 : vector<1x256xf32>
    %142 = arith.divf %140, %141 : vector<1x256xf32>
    %143 = vector.shape_cast %142 : vector<1x256xf32> to vector<1x1x256xf32>
    %144 = vector.broadcast %143 : vector<1x1x256xf32> to vector<8x8x256xf32>
    %145 = arith.mulf %117, %144 : vector<8x8x256xf32>
    %146 = vector.shape_cast %145 : vector<8x8x256xf32> to vector<64x256xf32>
    %147 = arith.truncf %146 : vector<64x256xf32> to vector<64x256xbf16>
    %c0_51 = arith.constant 0 : index
    %c0_52 = arith.constant 0 : index
    %148 = vector.load %arg15[%c0_51, %c0_52] : memref<256x128xbf16, #tpu.memory_space<vmem>>, vector<256x128xbf16>
    %cst_53 = arith.constant dense<0.000000e+00> : vector<64x128xf32>
    %149 = tpu.matmul %147, %148, %cst_53 {dimension_numbers = #tpu.dot_dimension_numbers<[1], [0], [0], [1], [0, 0, 1, 1], [], []>} : vector<64x256xbf16>, vector<256x128xbf16>, vector<64x128xf32> -> vector<64x128xf32>
    %c0_54 = arith.constant 0 : index
    %c0_55 = arith.constant 0 : index
    %150 = vector.load %arg16[%c0_54, %c0_55] : memref<1x128xf32, #tpu.memory_space<vmem>>, vector<1x128xf32>
    %151 = vector.broadcast %150 : vector<1x128xf32> to vector<64x128xf32>
    %152 = arith.mulf %149, %151 : vector<64x128xf32>
    %c0_56 = arith.constant 0 : index
    %c0_57 = arith.constant 0 : index
    %153 = vector.load %arg17[%c0_56, %c0_57] : memref<1x128xf32, #tpu.memory_space<vmem>>, vector<1x128xf32>
    %154 = vector.broadcast %153 : vector<1x128xf32> to vector<64x128xf32>
    %155 = arith.addf %152, %154 : vector<64x128xf32>
    %156 = arith.addf %155, %16 : vector<64x128xf32>
    %157 = arith.truncf %156 : vector<64x128xf32> to vector<64x128xbf16>
    %cst_58 = arith.constant 0.000000e+00 : f32
    %158 = vector.broadcast %cst_58 : f32 to vector<1x1xf32>
    %c0_59 = arith.constant 0 : index
    %c0_60 = arith.constant 0 : index
    %159 = vector.load %arg18[%c0_59, %c0_60] : memref<128x1792xbf16, #tpu.memory_space<vmem>>, vector<128x256xbf16>
    %cst_61 = arith.constant dense<0.000000e+00> : vector<64x256xf32>
    %160 = tpu.matmul %157, %159, %cst_61 {dimension_numbers = #tpu.dot_dimension_numbers<[1], [0], [0], [1], [0, 0, 1, 1], [], []>} : vector<64x128xbf16>, vector<128x256xbf16>, vector<64x256xf32> -> vector<64x256xf32>
    %c0_62 = arith.constant 0 : index
    %c0_63 = arith.constant 0 : index
    %161 = vector.load %arg19[%c0_62, %c0_63] : memref<1x1792xf32, #tpu.memory_space<vmem>>, vector<1x256xf32>
    %162 = vector.broadcast %161 : vector<1x256xf32> to vector<64x256xf32>
    %163 = arith.mulf %160, %162 : vector<64x256xf32>
    %c0_64 = arith.constant 0 : index
    %c0_65 = arith.constant 0 : index
    %164 = vector.load %arg20[%c0_64, %c0_65] : memref<1x1792xf32, #tpu.memory_space<vmem>>, vector<1x256xf32>
    %165 = vector.broadcast %164 : vector<1x256xf32> to vector<64x256xf32>
    %166 = arith.addf %163, %165 : vector<64x256xf32>
    %167 = arith.negf %166 : vector<64x256xf32>
    %168 = math.exp %167 : vector<64x256xf32>
    %cst_66 = arith.constant 1.000000e+00 : f32
    %169 = vector.broadcast %cst_66 : f32 to vector<64x256xf32>
    %170 = arith.addf %169, %168 : vector<64x256xf32>
    %171 = arith.divf %169, %170 : vector<64x256xf32>
    %172 = arith.mulf %166, %171 : vector<64x256xf32>
    %c0_67 = arith.constant 0 : index
    %c0_68 = arith.constant 0 : index
    %173 = vector.load %arg21[%c0_67, %c0_68] : memref<1x1792xf32, #tpu.memory_space<vmem>>, vector<1x256xf32>
    %174 = vector.broadcast %173 : vector<1x256xf32> to vector<64x256xf32>
    %175 = arith.mulf %172, %174 : vector<64x256xf32>
    %176 = vector.shape_cast %175 : vector<64x256xf32> to vector<1x64x256xf32>
    %cst_69 = arith.constant dense<0.000000e+00> : vector<1xf32>
    %177 = vector.multi_reduction <add>, %176, %cst_69 [1, 2] : vector<1x64x256xf32> to vector<1xf32>
    %178 = vector.shape_cast %177 : vector<1xf32> to vector<1x1x1xf32>
    %179 = vector.extract %178[0, 0, 0] : f32 from vector<1x1x1xf32>
    %180 = vector.broadcast %179 : f32 to vector<1x1xf32>
    %181 = arith.addf %158, %180 : vector<1x1xf32>
    %c0_70 = arith.constant 0 : index
    %c256 = arith.constant 256 : index
    %182 = vector.load %arg18[%c0_70, %c256] : memref<128x1792xbf16, #tpu.memory_space<vmem>>, vector<128x256xbf16>
    %cst_71 = arith.constant dense<0.000000e+00> : vector<64x256xf32>
    %183 = tpu.matmul %157, %182, %cst_71 {dimension_numbers = #tpu.dot_dimension_numbers<[1], [0], [0], [1], [0, 0, 1, 1], [], []>} : vector<64x128xbf16>, vector<128x256xbf16>, vector<64x256xf32> -> vector<64x256xf32>
    %c0_72 = arith.constant 0 : index
    %c256_73 = arith.constant 256 : index
    %184 = vector.load %arg19[%c0_72, %c256_73] : memref<1x1792xf32, #tpu.memory_space<vmem>>, vector<1x256xf32>
    %185 = vector.broadcast %184 : vector<1x256xf32> to vector<64x256xf32>
    %186 = arith.mulf %183, %185 : vector<64x256xf32>
    %c0_74 = arith.constant 0 : index
    %c256_75 = arith.constant 256 : index
    %187 = vector.load %arg20[%c0_74, %c256_75] : memref<1x1792xf32, #tpu.memory_space<vmem>>, vector<1x256xf32>
    %188 = vector.broadcast %187 : vector<1x256xf32> to vector<64x256xf32>
    %189 = arith.addf %186, %188 : vector<64x256xf32>
    %190 = arith.negf %189 : vector<64x256xf32>
    %191 = math.exp %190 : vector<64x256xf32>
    %cst_76 = arith.constant 1.000000e+00 : f32
    %192 = vector.broadcast %cst_76 : f32 to vector<64x256xf32>
    %193 = arith.addf %192, %191 : vector<64x256xf32>
    %194 = arith.divf %192, %193 : vector<64x256xf32>
    %195 = arith.mulf %189, %194 : vector<64x256xf32>
    %c0_77 = arith.constant 0 : index
    %c256_78 = arith.constant 256 : index
    %196 = vector.load %arg21[%c0_77, %c256_78] : memref<1x1792xf32, #tpu.memory_space<vmem>>, vector<1x256xf32>
    %197 = vector.broadcast %196 : vector<1x256xf32> to vector<64x256xf32>
    %198 = arith.mulf %195, %197 : vector<64x256xf32>
    %199 = vector.shape_cast %198 : vector<64x256xf32> to vector<1x64x256xf32>
    %cst_79 = arith.constant dense<0.000000e+00> : vector<1xf32>
    %200 = vector.multi_reduction <add>, %199, %cst_79 [1, 2] : vector<1x64x256xf32> to vector<1xf32>
    %201 = vector.shape_cast %200 : vector<1xf32> to vector<1x1x1xf32>
    %202 = vector.extract %201[0, 0, 0] : f32 from vector<1x1x1xf32>
    %203 = vector.broadcast %202 : f32 to vector<1x1xf32>
    %204 = arith.addf %181, %203 : vector<1x1xf32>
    %c0_80 = arith.constant 0 : index
    %c512 = arith.constant 512 : index
    %205 = vector.load %arg18[%c0_80, %c512] : memref<128x1792xbf16, #tpu.memory_space<vmem>>, vector<128x256xbf16>
    %cst_81 = arith.constant dense<0.000000e+00> : vector<64x256xf32>
    %206 = tpu.matmul %157, %205, %cst_81 {dimension_numbers = #tpu.dot_dimension_numbers<[1], [0], [0], [1], [0, 0, 1, 1], [], []>} : vector<64x128xbf16>, vector<128x256xbf16>, vector<64x256xf32> -> vector<64x256xf32>
    %c0_82 = arith.constant 0 : index
    %c512_83 = arith.constant 512 : index
    %207 = vector.load %arg19[%c0_82, %c512_83] : memref<1x1792xf32, #tpu.memory_space<vmem>>, vector<1x256xf32>
    %208 = vector.broadcast %207 : vector<1x256xf32> to vector<64x256xf32>
    %209 = arith.mulf %206, %208 : vector<64x256xf32>
    %c0_84 = arith.constant 0 : index
    %c512_85 = arith.constant 512 : index
    %210 = vector.load %arg20[%c0_84, %c512_85] : memref<1x1792xf32, #tpu.memory_space<vmem>>, vector<1x256xf32>
    %211 = vector.broadcast %210 : vector<1x256xf32> to vector<64x256xf32>
    %212 = arith.addf %209, %211 : vector<64x256xf32>
    %213 = arith.negf %212 : vector<64x256xf32>
    %214 = math.exp %213 : vector<64x256xf32>
    %cst_86 = arith.constant 1.000000e+00 : f32
    %215 = vector.broadcast %cst_86 : f32 to vector<64x256xf32>
    %216 = arith.addf %215, %214 : vector<64x256xf32>
    %217 = arith.divf %215, %216 : vector<64x256xf32>
    %218 = arith.mulf %212, %217 : vector<64x256xf32>
    %c0_87 = arith.constant 0 : index
    %c512_88 = arith.constant 512 : index
    %219 = vector.load %arg21[%c0_87, %c512_88] : memref<1x1792xf32, #tpu.memory_space<vmem>>, vector<1x256xf32>
    %220 = vector.broadcast %219 : vector<1x256xf32> to vector<64x256xf32>
    %221 = arith.mulf %218, %220 : vector<64x256xf32>
    %222 = vector.shape_cast %221 : vector<64x256xf32> to vector<1x64x256xf32>
    %cst_89 = arith.constant dense<0.000000e+00> : vector<1xf32>
    %223 = vector.multi_reduction <add>, %222, %cst_89 [1, 2] : vector<1x64x256xf32> to vector<1xf32>
    %224 = vector.shape_cast %223 : vector<1xf32> to vector<1x1x1xf32>
    %225 = vector.extract %224[0, 0, 0] : f32 from vector<1x1x1xf32>
    %226 = vector.broadcast %225 : f32 to vector<1x1xf32>
    %227 = arith.addf %204, %226 : vector<1x1xf32>
    %c0_90 = arith.constant 0 : index
    %c768 = arith.constant 768 : index
    %228 = vector.load %arg18[%c0_90, %c768] : memref<128x1792xbf16, #tpu.memory_space<vmem>>, vector<128x256xbf16>
    %cst_91 = arith.constant dense<0.000000e+00> : vector<64x256xf32>
    %229 = tpu.matmul %157, %228, %cst_91 {dimension_numbers = #tpu.dot_dimension_numbers<[1], [0], [0], [1], [0, 0, 1, 1], [], []>} : vector<64x128xbf16>, vector<128x256xbf16>, vector<64x256xf32> -> vector<64x256xf32>
    %c0_92 = arith.constant 0 : index
    %c768_93 = arith.constant 768 : index
    %230 = vector.load %arg19[%c0_92, %c768_93] : memref<1x1792xf32, #tpu.memory_space<vmem>>, vector<1x256xf32>
    %231 = vector.broadcast %230 : vector<1x256xf32> to vector<64x256xf32>
    %232 = arith.mulf %229, %231 : vector<64x256xf32>
    %c0_94 = arith.constant 0 : index
    %c768_95 = arith.constant 768 : index
    %233 = vector.load %arg20[%c0_94, %c768_95] : memref<1x1792xf32, #tpu.memory_space<vmem>>, vector<1x256xf32>
    %234 = vector.broadcast %233 : vector<1x256xf32> to vector<64x256xf32>
    %235 = arith.addf %232, %234 : vector<64x256xf32>
    %236 = arith.negf %235 : vector<64x256xf32>
    %237 = math.exp %236 : vector<64x256xf32>
    %cst_96 = arith.constant 1.000000e+00 : f32
    %238 = vector.broadcast %cst_96 : f32 to vector<64x256xf32>
    %239 = arith.addf %238, %237 : vector<64x256xf32>
    %240 = arith.divf %238, %239 : vector<64x256xf32>
    %241 = arith.mulf %235, %240 : vector<64x256xf32>
    %c0_97 = arith.constant 0 : index
    %c768_98 = arith.constant 768 : index
    %242 = vector.load %arg21[%c0_97, %c768_98] : memref<1x1792xf32, #tpu.memory_space<vmem>>, vector<1x256xf32>
    %243 = vector.broadcast %242 : vector<1x256xf32> to vector<64x256xf32>
    %244 = arith.mulf %241, %243 : vector<64x256xf32>
    %245 = vector.shape_cast %244 : vector<64x256xf32> to vector<1x64x256xf32>
    %cst_99 = arith.constant dense<0.000000e+00> : vector<1xf32>
    %246 = vector.multi_reduction <add>, %245, %cst_99 [1, 2] : vector<1x64x256xf32> to vector<1xf32>
    %247 = vector.shape_cast %246 : vector<1xf32> to vector<1x1x1xf32>
    %248 = vector.extract %247[0, 0, 0] : f32 from vector<1x1x1xf32>
    %249 = vector.broadcast %248 : f32 to vector<1x1xf32>
    %250 = arith.addf %227, %249 : vector<1x1xf32>
    %c0_100 = arith.constant 0 : index
    %c1024 = arith.constant 1024 : index
    %251 = vector.load %arg18[%c0_100, %c1024] : memref<128x1792xbf16, #tpu.memory_space<vmem>>, vector<128x256xbf16>
    %cst_101 = arith.constant dense<0.000000e+00> : vector<64x256xf32>
    %252 = tpu.matmul %157, %251, %cst_101 {dimension_numbers = #tpu.dot_dimension_numbers<[1], [0], [0], [1], [0, 0, 1, 1], [], []>} : vector<64x128xbf16>, vector<128x256xbf16>, vector<64x256xf32> -> vector<64x256xf32>
    %c0_102 = arith.constant 0 : index
    %c1024_103 = arith.constant 1024 : index
    %253 = vector.load %arg19[%c0_102, %c1024_103] : memref<1x1792xf32, #tpu.memory_space<vmem>>, vector<1x256xf32>
    %254 = vector.broadcast %253 : vector<1x256xf32> to vector<64x256xf32>
    %255 = arith.mulf %252, %254 : vector<64x256xf32>
    %c0_104 = arith.constant 0 : index
    %c1024_105 = arith.constant 1024 : index
    %256 = vector.load %arg20[%c0_104, %c1024_105] : memref<1x1792xf32, #tpu.memory_space<vmem>>, vector<1x256xf32>
    %257 = vector.broadcast %256 : vector<1x256xf32> to vector<64x256xf32>
    %258 = arith.addf %255, %257 : vector<64x256xf32>
    %259 = arith.negf %258 : vector<64x256xf32>
    %260 = math.exp %259 : vector<64x256xf32>
    %cst_106 = arith.constant 1.000000e+00 : f32
    %261 = vector.broadcast %cst_106 : f32 to vector<64x256xf32>
    %262 = arith.addf %261, %260 : vector<64x256xf32>
    %263 = arith.divf %261, %262 : vector<64x256xf32>
    %264 = arith.mulf %258, %263 : vector<64x256xf32>
    %c0_107 = arith.constant 0 : index
    %c1024_108 = arith.constant 1024 : index
    %265 = vector.load %arg21[%c0_107, %c1024_108] : memref<1x1792xf32, #tpu.memory_space<vmem>>, vector<1x256xf32>
    %266 = vector.broadcast %265 : vector<1x256xf32> to vector<64x256xf32>
    %267 = arith.mulf %264, %266 : vector<64x256xf32>
    %268 = vector.shape_cast %267 : vector<64x256xf32> to vector<1x64x256xf32>
    %cst_109 = arith.constant dense<0.000000e+00> : vector<1xf32>
    %269 = vector.multi_reduction <add>, %268, %cst_109 [1, 2] : vector<1x64x256xf32> to vector<1xf32>
    %270 = vector.shape_cast %269 : vector<1xf32> to vector<1x1x1xf32>
    %271 = vector.extract %270[0, 0, 0] : f32 from vector<1x1x1xf32>
    %272 = vector.broadcast %271 : f32 to vector<1x1xf32>
    %273 = arith.addf %250, %272 : vector<1x1xf32>
    %c0_110 = arith.constant 0 : index
    %c1280 = arith.constant 1280 : index
    %274 = vector.load %arg18[%c0_110, %c1280] : memref<128x1792xbf16, #tpu.memory_space<vmem>>, vector<128x256xbf16>
    %cst_111 = arith.constant dense<0.000000e+00> : vector<64x256xf32>
    %275 = tpu.matmul %157, %274, %cst_111 {dimension_numbers = #tpu.dot_dimension_numbers<[1], [0], [0], [1], [0, 0, 1, 1], [], []>} : vector<64x128xbf16>, vector<128x256xbf16>, vector<64x256xf32> -> vector<64x256xf32>
    %c0_112 = arith.constant 0 : index
    %c1280_113 = arith.constant 1280 : index
    %276 = vector.load %arg19[%c0_112, %c1280_113] : memref<1x1792xf32, #tpu.memory_space<vmem>>, vector<1x256xf32>
    %277 = vector.broadcast %276 : vector<1x256xf32> to vector<64x256xf32>
    %278 = arith.mulf %275, %277 : vector<64x256xf32>
    %c0_114 = arith.constant 0 : index
    %c1280_115 = arith.constant 1280 : index
    %279 = vector.load %arg20[%c0_114, %c1280_115] : memref<1x1792xf32, #tpu.memory_space<vmem>>, vector<1x256xf32>
    %280 = vector.broadcast %279 : vector<1x256xf32> to vector<64x256xf32>
    %281 = arith.addf %278, %280 : vector<64x256xf32>
    %282 = arith.negf %281 : vector<64x256xf32>
    %283 = math.exp %282 : vector<64x256xf32>
    %cst_116 = arith.constant 1.000000e+00 : f32
    %284 = vector.broadcast %cst_116 : f32 to vector<64x256xf32>
    %285 = arith.addf %284, %283 : vector<64x256xf32>
    %286 = arith.divf %284, %285 : vector<64x256xf32>
    %287 = arith.mulf %281, %286 : vector<64x256xf32>
    %c0_117 = arith.constant 0 : index
    %c1280_118 = arith.constant 1280 : index
    %288 = vector.load %arg21[%c0_117, %c1280_118] : memref<1x1792xf32, #tpu.memory_space<vmem>>, vector<1x256xf32>
    %289 = vector.broadcast %288 : vector<1x256xf32> to vector<64x256xf32>
    %290 = arith.mulf %287, %289 : vector<64x256xf32>
    %291 = vector.shape_cast %290 : vector<64x256xf32> to vector<1x64x256xf32>
    %cst_119 = arith.constant dense<0.000000e+00> : vector<1xf32>
    %292 = vector.multi_reduction <add>, %291, %cst_119 [1, 2] : vector<1x64x256xf32> to vector<1xf32>
    %293 = vector.shape_cast %292 : vector<1xf32> to vector<1x1x1xf32>
    %294 = vector.extract %293[0, 0, 0] : f32 from vector<1x1x1xf32>
    %295 = vector.broadcast %294 : f32 to vector<1x1xf32>
    %296 = arith.addf %273, %295 : vector<1x1xf32>
    %c0_120 = arith.constant 0 : index
    %c1536 = arith.constant 1536 : index
    %297 = vector.load %arg18[%c0_120, %c1536] : memref<128x1792xbf16, #tpu.memory_space<vmem>>, vector<128x256xbf16>
    %cst_121 = arith.constant dense<0.000000e+00> : vector<64x256xf32>
    %298 = tpu.matmul %157, %297, %cst_121 {dimension_numbers = #tpu.dot_dimension_numbers<[1], [0], [0], [1], [0, 0, 1, 1], [], []>} : vector<64x128xbf16>, vector<128x256xbf16>, vector<64x256xf32> -> vector<64x256xf32>
    %c0_122 = arith.constant 0 : index
    %c1536_123 = arith.constant 1536 : index
    %299 = vector.load %arg19[%c0_122, %c1536_123] : memref<1x1792xf32, #tpu.memory_space<vmem>>, vector<1x256xf32>
    %300 = vector.broadcast %299 : vector<1x256xf32> to vector<64x256xf32>
    %301 = arith.mulf %298, %300 : vector<64x256xf32>
    %c0_124 = arith.constant 0 : index
    %c1536_125 = arith.constant 1536 : index
    %302 = vector.load %arg20[%c0_124, %c1536_125] : memref<1x1792xf32, #tpu.memory_space<vmem>>, vector<1x256xf32>
    %303 = vector.broadcast %302 : vector<1x256xf32> to vector<64x256xf32>
    %304 = arith.addf %301, %303 : vector<64x256xf32>
    %305 = arith.negf %304 : vector<64x256xf32>
    %306 = math.exp %305 : vector<64x256xf32>
    %cst_126 = arith.constant 1.000000e+00 : f32
    %307 = vector.broadcast %cst_126 : f32 to vector<64x256xf32>
    %308 = arith.addf %307, %306 : vector<64x256xf32>
    %309 = arith.divf %307, %308 : vector<64x256xf32>
    %310 = arith.mulf %304, %309 : vector<64x256xf32>
    %c0_127 = arith.constant 0 : index
    %c1536_128 = arith.constant 1536 : index
    %311 = vector.load %arg21[%c0_127, %c1536_128] : memref<1x1792xf32, #tpu.memory_space<vmem>>, vector<1x256xf32>
    %312 = vector.broadcast %311 : vector<1x256xf32> to vector<64x256xf32>
    %313 = arith.mulf %310, %312 : vector<64x256xf32>
    %314 = vector.shape_cast %313 : vector<64x256xf32> to vector<1x64x256xf32>
    %cst_129 = arith.constant dense<0.000000e+00> : vector<1xf32>
    %315 = vector.multi_reduction <add>, %314, %cst_129 [1, 2] : vector<1x64x256xf32> to vector<1xf32>
    %316 = vector.shape_cast %315 : vector<1xf32> to vector<1x1x1xf32>
    %317 = vector.extract %316[0, 0, 0] : f32 from vector<1x1x1xf32>
    %318 = vector.broadcast %317 : f32 to vector<1x1xf32>
    %319 = arith.addf %296, %318 : vector<1x1xf32>
    %cst_130 = arith.constant 1.562500e-02 : f32
    %320 = vector.broadcast %cst_130 : f32 to vector<1x1xf32>
    %321 = arith.mulf %319, %320 : vector<1x1xf32>
    %c0_131 = arith.constant 0 : index
    %c0_132 = arith.constant 0 : index
    %322 = vector.load %arg22[%c0_131, %c0_132] : memref<1x1xf32, #tpu.memory_space<vmem>>, vector<1x1xf32>
    %323 = arith.addf %321, %322 : vector<1x1xf32>
    %324 = vector.shape_cast %323 : vector<1x1xf32> to vector<1x1x1xf32>
    %325 = vector.shape_cast %324 : vector<1x1x1xf32> to vector<1x1x1xf32>
    %326 = vector.broadcast %325 : vector<1x1x1xf32> to vector<1x8x128xf32>
    %c0_133 = arith.constant 0 : index
    %c0_134 = arith.constant 0 : index
    %c0_135 = arith.constant 0 : index
    %327 = vector.load %arg23[%c0_133, %c0_134, %c0_135] : memref<1x8x128xf32, #tpu.memory_space<vmem>>, vector<1x8x128xf32>
    tpu.vector_store %arg23[%c0_133, %c0_134, %c0_135], %326 {strides = array<i32>} : memref<1x8x128xf32, #tpu.memory_space<vmem>>, vector<1x8x128xf32>,
    return
  }
  func.func @transform_0(%arg0: i32) -> (i32, i32, i32) {
    %c0_i32 = arith.constant 0 : i32
    %c0_i32_0 = arith.constant 0 : i32
    %c0_i32_1 = arith.constant 0 : i32
    return %arg0, %c0_i32, %c0_i32_0 : i32, i32, i32
  }
  func.func @transform_1(%arg0: i32) -> (i32, i32) {
    %c0_i32 = arith.constant 0 : i32
    %c0_i32_0 = arith.constant 0 : i32
    %c0_i32_1 = arith.constant 0 : i32
    return %c0_i32, %c0_i32_0 : i32, i32
  }
  func.func @transform_2(%arg0: i32) -> (i32, i32) {
    %c0_i32 = arith.constant 0 : i32
    %c0_i32_0 = arith.constant 0 : i32
    %c0_i32_1 = arith.constant 0 : i32
    return %c0_i32, %c0_i32_0 : i32, i32
  }
  func.func @transform_3(%arg0: i32) -> (i32, i32) {
    %c0_i32 = arith.constant 0 : i32
    %c0_i32_0 = arith.constant 0 : i32
    %c0_i32_1 = arith.constant 0 : i32
    return %c0_i32, %c0_i32_0 : i32, i32
  }
  func.func @transform_4(%arg0: i32) -> (i32, i32) {
    %c0_i32 = arith.constant 0 : i32
    %c0_i32_0 = arith.constant 0 : i32
    %c0_i32_1 = arith.constant 0 : i32
    return %c0_i32, %c0_i32_0 : i32, i32
  }
  func.func @transform_5(%arg0: i32) -> (i32, i32) {
    %c0_i32 = arith.constant 0 : i32
    %c0_i32_0 = arith.constant 0 : i32
    %c0_i32_1 = arith.constant 0 : i32
    return %c0_i32, %c0_i32_0 : i32, i32
  }
  func.func @transform_6(%arg0: i32) -> (i32, i32) {
    %c0_i32 = arith.constant 0 : i32
    %c0_i32_0 = arith.constant 0 : i32
    %c0_i32_1 = arith.constant 0 : i32
    return %c0_i32, %c0_i32_0 : i32, i32
  }
  func.func @transform_7(%arg0: i32) -> (i32, i32) {
    %c0_i32 = arith.constant 0 : i32
    %c0_i32_0 = arith.constant 0 : i32
    %c0_i32_1 = arith.constant 0 : i32
    return %c0_i32, %c0_i32_0 : i32, i32
  }
  func.func @transform_8(%arg0: i32) -> (i32, i32) {
    %c0_i32 = arith.constant 0 : i32
    %c0_i32_0 = arith.constant 0 : i32
    %c0_i32_1 = arith.constant 0 : i32
    return %c0_i32, %c0_i32_0 : i32, i32
  }
  func.func @transform_9(%arg0: i32) -> (i32, i32) {
    %c0_i32 = arith.constant 0 : i32
    %c0_i32_0 = arith.constant 0 : i32
    %c0_i32_1 = arith.constant 0 : i32
    return %c0_i32, %c0_i32_0 : i32, i32
  }
  func.func @transform_10(%arg0: i32) -> (i32, i32) {
    %c0_i32 = arith.constant 0 : i32
    %c0_i32_0 = arith.constant 0 : i32
    %c0_i32_1 = arith.constant 0 : i32
    return %c0_i32, %c0_i32_0 : i32, i32
  }
  func.func @transform_11(%arg0: i32) -> (i32, i32) {
    %c0_i32 = arith.constant 0 : i32
    %c0_i32_0 = arith.constant 0 : i32
    %c0_i32_1 = arith.constant 0 : i32
    return %c0_i32, %c0_i32_0 : i32, i32
  }
  func.func @transform_12(%arg0: i32) -> (i32, i32) {
    %c0_i32 = arith.constant 0 : i32
    %c0_i32_0 = arith.constant 0 : i32
    %c0_i32_1 = arith.constant 0 : i32
    return %c0_i32, %c0_i32_0 : i32, i32
  }
  func.func @transform_13(%arg0: i32) -> (i32, i32) {
    %c0_i32 = arith.constant 0 : i32
    %c0_i32_0 = arith.constant 0 : i32
    %c0_i32_1 = arith.constant 0 : i32
    return %c0_i32, %c0_i32_0 : i32, i32
  }
  func.func @transform_14(%arg0: i32) -> (i32, i32) {
    %c0_i32 = arith.constant 0 : i32
    %c0_i32_0 = arith.constant 0 : i32
    %c0_i32_1 = arith.constant 0 : i32
    return %c0_i32, %c0_i32_0 : i32, i32
  }
  func.func @transform_15(%arg0: i32) -> (i32, i32) {
    %c0_i32 = arith.constant 0 : i32
    %c0_i32_0 = arith.constant 0 : i32
    %c0_i32_1 = arith.constant 0 : i32
    return %c0_i32, %c0_i32_0 : i32, i32
  }
  func.func @transform_16(%arg0: i32) -> (i32, i32) {
    %c0_i32 = arith.constant 0 : i32
    %c0_i32_0 = arith.constant 0 : i32
    %c0_i32_1 = arith.constant 0 : i32
    return %c0_i32, %c0_i32_0 : i32, i32
  }
  func.func @transform_17(%arg0: i32) -> (i32, i32) {
    %c0_i32 = arith.constant 0 : i32
    %c0_i32_0 = arith.constant 0 : i32
    %c0_i32_1 = arith.constant 0 : i32
    return %c0_i32, %c0_i32_0 : i32, i32
  }
  func.func @transform_18(%arg0: i32) -> (i32, i32) {
    %c0_i32 = arith.constant 0 : i32
    %c0_i32_0 = arith.constant 0 : i32
    %c0_i32_1 = arith.constant 0 : i32
    return %c0_i32, %c0_i32_0 : i32, i32
  }
  func.func @transform_19(%arg0: i32) -> (i32, i32) {
    %c0_i32 = arith.constant 0 : i32
    %c0_i32_0 = arith.constant 0 : i32
    %c0_i32_1 = arith.constant 0 : i32
    return %c0_i32, %c0_i32_0 : i32, i32
  }
  func.func @transform_20(%arg0: i32) -> (i32, i32) {
    %c0_i32 = arith.constant 0 : i32
    %c0_i32_0 = arith.constant 0 : i32
    %c0_i32_1 = arith.constant 0 : i32
    return %c0_i32, %c0_i32_0 : i32, i32
  }
  func.func @transform_21(%arg0: i32) -> (i32, i32) {
    %c0_i32 = arith.constant 0 : i32
    %c0_i32_0 = arith.constant 0 : i32
    %c0_i32_1 = arith.constant 0 : i32
    return %c0_i32, %c0_i32_0 : i32, i32
  }
  func.func @transform_22(%arg0: i32) -> (i32, i32, i32) {
    %c0_i32 = arith.constant 0 : i32
    %c0_i32_0 = arith.constant 0 : i32
    %c0_i32_1 = arith.constant 0 : i32
    return %arg0, %c0_i32, %c0_i32_0 : i32, i32, i32
  }
}

</mosaic_0001>

<llo_original>
// kernel: forward.1
$region0: #{forward.1}
  #allocation0 [shape = 'u32[]', space=smem, size = 0x4, offset = 0x4, fixed_abs, tag = 'smem constant byte address 0x4 - core index']
  #allocation1 [shape = 'u32[144,128]{1,0:T(1,128)}', space=vmem, size = 0x12000, scoped, tag = 'internal scratch']
  #allocation2 [shape = 'f32[10,24,256]{2,1,0:T(8,128)}', space=vmem, size = 0x3c000, scoped, tag = 'scratch operand']
  #allocation3 [shape = 'f32[1,1]{1,0:T(1,128)S(1)}', space=vmem, size = 0x200, scoped, tag = 'scoped memory for forward.1']
  %s0 = inlined_call_operand.vmem [shape: f32[2,64,128], index: 0, kind: input, shape index: {}]
  %s1 = inlined_call_operand.vmem [shape: bf16[128,128], index: 1, kind: input, shape index: {}]
  %s2 = inlined_call_operand.vmem [shape: f32[1,128], index: 2, kind: input, shape index: {}]
  %s3 = inlined_call_operand.vmem [shape: f32[1,128], index: 3, kind: input, shape index: {}]
  %s4 = inlined_call_operand.vmem [shape: bf16[128,256], index: 4, kind: input, shape index: {}]
  %s5 = inlined_call_operand.vmem [shape: f32[1,256], index: 5, kind: input, shape index: {}]
  %s6 = inlined_call_operand.vmem [shape: f32[1,256], index: 6, kind: input, shape index: {}]
  %s7 = inlined_call_operand.vmem [shape: f32[9,256], index: 7, kind: input, shape index: {}]
  %s8 = inlined_call_operand.vmem [shape: f32[1,256], index: 8, kind: input, shape index: {}]
  %s9 = inlined_call_operand.vmem [shape: f32[1,256], index: 9, kind: input, shape index: {}]
  %s10 = inlined_call_operand.vmem [shape: bf16[256,128], index: 10, kind: input, shape index: {}]
  %s11 = inlined_call_operand.vmem [shape: f32[1,128], index: 11, kind: input, shape index: {}]
  %s12 = inlined_call_operand.vmem [shape: bf16[128,256], index: 12, kind: input, shape index: {}]
  %s13 = inlined_call_operand.vmem [shape: f32[1,256], index: 13, kind: input, shape index: {}]
  %s14 = inlined_call_operand.vmem [shape: bf16[256,128], index: 14, kind: input, shape index: {}]
  %s15 = inlined_call_operand.vmem [shape: f32[1,128], index: 15, kind: input, shape index: {}]
  %s16 = inlined_call_operand.vmem [shape: f32[1,128], index: 16, kind: input, shape index: {}]
  %s17 = inlined_call_operand.vmem [shape: bf16[128,1792], index: 17, kind: input, shape index: {}]
  %s18 = inlined_call_operand.vmem [shape: f32[1,1792], index: 18, kind: input, shape index: {}]
  %s19 = inlined_call_operand.vmem [shape: f32[1,1792], index: 19, kind: input, shape index: {}]
  %s20 = inlined_call_operand.vmem [shape: f32[1,1792], index: 20, kind: input, shape index: {}]
  %s21 = inlined_call_operand.<no memory space> [shape: f32[1,1], index: 21, kind: input, shape index: {}]
  %s22 = inlined_call_operand.vmem [shape: f32[2,8,128], index: 22, kind: output, shape index: {}]
  %s23 = sld [smem:[#allocation0]]
  $region121: #{forward.1} parent=0
    _
  %s25 = ssub.s32 1, %s23
  %s26 = scalar_select 0, %s25, %s23
  %v27 = vstv %s21
  %28 = vst [vmem:[#allocation3] sm:$0x1] %v27
  loop: start=0, step=1, limit=4
  $region2: #{forward.1} parent=0 // loop_pre_header
    _
  $region3: #{forward.1} parent=0 // loop_header
    %s30 = sphi 0, %s34
    %p31 = scmp.ge.s32.totalorder %s30, 4
    %s40 = sphi 0, %s42
    %s43 = sphi 0, %s40
    %s44 = sphi 0, %s43
    %s60 = sphi 0, %s44
    %s64 = sphi 0, %s64
    %s66 = sphi 0, %s64
    %s67 = sphi 0, %s66
    %s81 = sphi 0, %s67
    %s85 = sphi 0, %s85
    %s87 = sphi 0, %s85
    %s88 = sphi 0, %s87
    %s102 = sphi 0, %s88
    %s106 = sphi 0, %s106
    %s108 = sphi 0, %s106
    %s109 = sphi 0, %s108
    %s123 = sphi 0, %s109
    %s127 = sphi 0, %s127
    %s129 = sphi 0, %s127
    %s130 = sphi 0, %s129
    %s144 = sphi 0, %s130
    %s148 = sphi 0, %s148
    %s150 = sphi 0, %s148
    %s151 = sphi 0, %s150
    %s165 = sphi 0, %s151
    %s169 = sphi 0, %s169
    %s171 = sphi 0, %s169
    %s172 = sphi 0, %s171
    %s186 = sphi 0, %s172
    %s190 = sphi 0, %s190
    %s192 = sphi 0, %s190
    %s193 = sphi 0, %s192
    %s207 = sphi 0, %s193
    %s211 = sphi 0, %s211
    %s213 = sphi 0, %s211
    %s214 = sphi 0, %s213
    %s228 = sphi 0, %s214
    %s232 = sphi 0, %s232
    %s234 = sphi 0, %s232
    %s235 = sphi 0, %s234
    %s249 = sphi 0, %s235
    %s253 = sphi 0, %s253
    %s255 = sphi 0, %s253
    %s256 = sphi 0, %s255
    %s270 = sphi 0, %s256
    %s274 = sphi 0, %s274
    %s276 = sphi 0, %s274
    %s277 = sphi 0, %s276
    %s291 = sphi 0, %s277
    %s295 = sphi 0, %s295
    %s297 = sphi 0, %s295
    %s298 = sphi 0, %s297
    %s312 = sphi 0, %s298
    %s316 = sphi 0, %s316
    %s318 = sphi 0, %s316
    %s319 = sphi 0, %s318
    %s333 = sphi 0, %s319
    %s337 = sphi 0, %s337
    %s339 = sphi 0, %s337
    %s340 = sphi 0, %s339
    %s354 = sphi 0, %s340
    %s358 = sphi 0, %s358
    %s360 = sphi 0, %s358
    %s361 = sphi 0, %s360
    %s375 = sphi 0, %s361
    %s379 = sphi 0, %s379
    %s381 = sphi 0, %s379
    %s382 = sphi 0, %s381
    %s396 = sphi 0, %s382
    %s400 = sphi 0, %s400
    %s402 = sphi 0, %s400
    %s403 = sphi 0, %s402
    %s417 = sphi 0, %s403
    %s421 = sphi 0, %s421
    %s423 = sphi 0, %s421
    %s424 = sphi 0, %s423
    %s438 = sphi 0, %s424
    %s442 = sphi 0, %s442
    %s444 = sphi 0, %s442
    %s445 = sphi 0, %s444
    %s459 = sphi 0, %s445
    %s463 = sphi 0, %s463
    %s465 = sphi 0, %s463
    %s466 = sphi 0, %s465
    %s480 = sphi 0, %s466
    %s484 = sphi 0, %s484
    %s486 = sphi 0, %s484
    %s487 = sphi 0, %s486
    %s501 = sphi 0, %s487
    %s507 = sphi 0, %s509
    %s510 = sphi 0, %s507
    %s511 = sphi 0, %s510
    %s527 = sphi 0, %s511
  $region4: #{forward.1} parent=0 // loop_header_branch
    %33 = sbr.rel (%p31) target = $region8
  $region5: #{forward.1} parent=0 // loop_body
    %s35 = ssub.s32 %s30, 1
    %s36 = ssub.s32 %s30, 2
    %s37 = sadd.s32 %s30, 1
    %s38 = ssub.s32 %s30, %s37
    %p39 = scmp.eq.s32.totalorder %s38, 0
    %s41 = sadd.s32 %s40, 1
    %s42 = scalar_select %p39, %s40, %s41
    %p45 = pneg %p39
    %p46 = scmp.eq.s32.totalorder %s30, 1
    %p47 = por %p45, %p46
    %p48 = scmp.ne.s32.totalorder %s40, %s43
    %p49 = scmp.eq.s32.totalorder %s30, 0
    %p50 = por %p48, %p49
    %p51 = scmp.ne.s32.totalorder %s40, %s43
    %p52 = scmp.eq.s32.totalorder %s35, 1
    %p53 = por %p51, %p52
    %p54 = scmp.ne.s32.totalorder %s43, %s44
    %p55 = scmp.eq.s32.totalorder %s35, 0
    %p56 = por %p54, %p55
    %p57 = scmp.ne.s32.totalorder %s43, %s44
    %p58 = scmp.eq.s32.totalorder %s36, 1
    %p59 = por %p57, %p58
    %p61 = scmp.ne.s32.totalorder %s44, %s60
    %p62 = scmp.eq.s32.totalorder %s36, 0
    %p63 = por %p61, %p62
    %s65 = sadd.s32 %s64, 1
    %p68 = scmp.eq.s32.totalorder %s30, 1
    %p69 = scmp.ne.s32.totalorder %s64, %s66
    %p70 = scmp.eq.s32.totalorder %s30, 0
    %p71 = por %p69, %p70
    %p72 = scmp.ne.s32.totalorder %s64, %s66
    %p73 = scmp.eq.s32.totalorder %s35, 1
    %p74 = por %p72, %p73
    %p75 = scmp.ne.s32.totalorder %s66, %s67
    %p76 = scmp.eq.s32.totalorder %s35, 0
    %p77 = por %p75, %p76
    %p78 = scmp.ne.s32.totalorder %s66, %s67
    %p79 = scmp.eq.s32.totalorder %s36, 1
    %p80 = por %p78, %p79
    %p82 = scmp.ne.s32.totalorder %s67, %s81
    %p83 = scmp.eq.s32.totalorder %s36, 0
    %p84 = por %p82, %p83
    %s86 = sadd.s32 %s85, 1
    %p89 = scmp.eq.s32.totalorder %s30, 1
    %p90 = scmp.ne.s32.totalorder %s85, %s87
    %p91 = scmp.eq.s32.totalorder %s30, 0
    %p92 = por %p90, %p91
    %p93 = scmp.ne.s32.totalorder %s85, %s87
    %p94 = scmp.eq.s32.totalorder %s35, 1
    %p95 = por %p93, %p94
    %p96 = scmp.ne.s32.totalorder %s87, %s88
    %p97 = scmp.eq.s32.totalorder %s35, 0
    %p98 = por %p96, %p97
    %p99 = scmp.ne.s32.totalorder %s87, %s88
    %p100 = scmp.eq.s32.totalorder %s36, 1
    %p101 = por %p99, %p100
    %p103 = scmp.ne.s32.totalorder %s88, %s102
    %p104 = scmp.eq.s32.totalorder %s36, 0
    %p105 = por %p103, %p104
    %s107 = sadd.s32 %s106, 1
    %p110 = scmp.eq.s32.totalorder %s30, 1
    %p111 = scmp.ne.s32.totalorder %s106, %s108
    %p112 = scmp.eq.s32.totalorder %s30, 0
    %p113 = por %p111, %p112
    %p114 = scmp.ne.s32.totalorder %s106, %s108
    %p115 = scmp.eq.s32.totalorder %s35, 1
    %p116 = por %p114, %p115
    %p117 = scmp.ne.s32.totalorder %s108, %s109
    %p118 = scmp.eq.s32.totalorder %s35, 0
    %p119 = por %p117, %p118
    %p120 = scmp.ne.s32.totalorder %s108, %s109
    %p121 = scmp.eq.s32.totalorder %s36, 1
    %p122 = por %p120, %p121
    %p124 = scmp.ne.s32.totalorder %s109, %s123
    %p125 = scmp.eq.s32.totalorder %s36, 0
    %p126 = por %p124, %p125
    %s128 = sadd.s32 %s127, 1
    %p131 = scmp.eq.s32.totalorder %s30, 1
    %p132 = scmp.ne.s32.totalorder %s127, %s129
    %p133 = scmp.eq.s32.totalorder %s30, 0
    %p134 = por %p132, %p133
    %p135 = scmp.ne.s32.totalorder %s127, %s129
    %p136 = scmp.eq.s32.totalorder %s35, 1
    %p137 = por %p135, %p136
    %p138 = scmp.ne.s32.totalorder %s129, %s130
    %p139 = scmp.eq.s32.totalorder %s35, 0
    %p140 = por %p138, %p139
    %p141 = scmp.ne.s32.totalorder %s129, %s130
    %p142 = scmp.eq.s32.totalorder %s36, 1
    %p143 = por %p141, %p142
    %p145 = scmp.ne.s32.totalorder %s130, %s144
    %p146 = scmp.eq.s32.totalorder %s36, 0
    %p147 = por %p145, %p146
    %s149 = sadd.s32 %s148, 1
    %p152 = scmp.eq.s32.totalorder %s30, 1
    %p153 = scmp.ne.s32.totalorder %s148, %s150
    %p154 = scmp.eq.s32.totalorder %s30, 0
    %p155 = por %p153, %p154
    %p156 = scmp.ne.s32.totalorder %s148, %s150
    %p157 = scmp.eq.s32.totalorder %s35, 1
    %p158 = por %p156, %p157
    %p159 = scmp.ne.s32.totalorder %s150, %s151
    %p160 = scmp.eq.s32.totalorder %s35, 0
    %p161 = por %p159, %p160
    %p162 = scmp.ne.s32.totalorder %s150, %s151
    %p163 = scmp.eq.s32.totalorder %s36, 1
    %p164 = por %p162, %p163
    %p166 = scmp.ne.s32.totalorder %s151, %s165
    %p167 = scmp.eq.s32.totalorder %s36, 0
    %p168 = por %p166, %p167
    %s170 = sadd.s32 %s169, 1
    %p173 = scmp.eq.s32.totalorder %s30, 1
    %p174 = scmp.ne.s32.totalorder %s169, %s171
    %p175 = scmp.eq.s32.totalorder %s30, 0
    %p176 = por %p174, %p175
    %p177 = scmp.ne.s32.totalorder %s169, %s171
    %p178 = scmp.eq.s32.totalorder %s35, 1
    %p179 = por %p177, %p178
    %p180 = scmp.ne.s32.totalorder %s171, %s172
    %p181 = scmp.eq.s32.totalorder %s35, 0
    %p182 = por %p180, %p181
    %p183 = scmp.ne.s32.totalorder %s171, %s172
    %p184 = scmp.eq.s32.totalorder %s36, 1
    %p185 = por %p183, %p184
    %p187 = scmp.ne.s32.totalorder %s172, %s186
    %p188 = scmp.eq.s32.totalorder %s36, 0
    %p189 = por %p187, %p188
    %s191 = sadd.s32 %s190, 1
    %p194 = scmp.eq.s32.totalorder %s30, 1
    %p195 = scmp.ne.s32.totalorder %s190, %s192
    %p196 = scmp.eq.s32.totalorder %s30, 0
    %p197 = por %p195, %p196
    %p198 = scmp.ne.s32.totalorder %s190, %s192
    %p199 = scmp.eq.s32.totalorder %s35, 1
    %p200 = por %p198, %p199
    %p201 = scmp.ne.s32.totalorder %s192, %s193
    %p202 = scmp.eq.s32.totalorder %s35, 0
    %p203 = por %p201, %p202
    %p204 = scmp.ne.s32.totalorder %s192, %s193
    %p205 = scmp.eq.s32.totalorder %s36, 1
    %p206 = por %p204, %p205
    %p208 = scmp.ne.s32.totalorder %s193, %s207
    %p209 = scmp.eq.s32.totalorder %s36, 0
    %p210 = por %p208, %p209
    %s212 = sadd.s32 %s211, 1
    %p215 = scmp.eq.s32.totalorder %s30, 1
    %p216 = scmp.ne.s32.totalorder %s211, %s213
    %p217 = scmp.eq.s32.totalorder %s30, 0
    %p218 = por %p216, %p217
    %p219 = scmp.ne.s32.totalorder %s211, %s213
    %p220 = scmp.eq.s32.totalorder %s35, 1
    %p221 = por %p219, %p220
    %p222 = scmp.ne.s32.totalorder %s213, %s214
    %p223 = scmp.eq.s32.totalorder %s35, 0
    %p224 = por %p222, %p223
    %p225 = scmp.ne.s32.totalorder %s213, %s214
    %p226 = scmp.eq.s32.totalorder %s36, 1
    %p227 = por %p225, %p226
    %p229 = scmp.ne.s32.totalorder %s214, %s228
    %p230 = scmp.eq.s32.totalorder %s36, 0
    %p231 = por %p229, %p230
    %s233 = sadd.s32 %s232, 1
    %p236 = scmp.eq.s32.totalorder %s30, 1
    %p237 = scmp.ne.s32.totalorder %s232, %s234
    %p238 = scmp.eq.s32.totalorder %s30, 0
    %p239 = por %p237, %p238
    %p240 = scmp.ne.s32.totalorder %s232, %s234
    %p241 = scmp.eq.s32.totalorder %s35, 1
    %p242 = por %p240, %p241
    %p243 = scmp.ne.s32.totalorder %s234, %s235
    %p244 = scmp.eq.s32.totalorder %s35, 0
    %p245 = por %p243, %p244
    %p246 = scmp.ne.s32.totalorder %s234, %s235
    %p247 = scmp.eq.s32.totalorder %s36, 1
    %p248 = por %p246, %p247
    %p250 = scmp.ne.s32.totalorder %s235, %s249
    %p251 = scmp.eq.s32.totalorder %s36, 0
    %p252 = por %p250, %p251
    %s254 = sadd.s32 %s253, 1
    %p257 = scmp.eq.s32.totalorder %s30, 1
    %p258 = scmp.ne.s32.totalorder %s253, %s255
    %p259 = scmp.eq.s32.totalorder %s30, 0
    %p260 = por %p258, %p259
    %p261 = scmp.ne.s32.totalorder %s253, %s255
    %p262 = scmp.eq.s32.totalorder %s35, 1
    %p263 = por %p261, %p262
    %p264 = scmp.ne.s32.totalorder %s255, %s256
    %p265 = scmp.eq.s32.totalorder %s35, 0
    %p266 = por %p264, %p265
    %p267 = scmp.ne.s32.totalorder %s255, %s256
    %p268 = scmp.eq.s32.totalorder %s36, 1
    %p269 = por %p267, %p268
    %p271 = scmp.ne.s32.totalorder %s256, %s270
    %p272 = scmp.eq.s32.totalorder %s36, 0
    %p273 = por %p271, %p272
    %s275 = sadd.s32 %s274, 1
    %p278 = scmp.eq.s32.totalorder %s30, 1
    %p279 = scmp.ne.s32.totalorder %s274, %s276
    %p280 = scmp.eq.s32.totalorder %s30, 0
    %p281 = por %p279, %p280
    %p282 = scmp.ne.s32.totalorder %s274, %s276
    %p283 = scmp.eq.s32.totalorder %s35, 1
    %p284 = por %p282, %p283
    %p285 = scmp.ne.s32.totalorder %s276, %s277
    %p286 = scmp.eq.s32.totalorder %s35, 0
    %p287 = por %p285, %p286
    %p288 = scmp.ne.s32.totalorder %s276, %s277
    %p289 = scmp.eq.s32.totalorder %s36, 1
    %p290 = por %p288, %p289
    %p292 = scmp.ne.s32.totalorder %s277, %s291
    %p293 = scmp.eq.s32.totalorder %s36, 0
    %p294 = por %p292, %p293
    %s296 = sadd.s32 %s295, 1
    %p299 = scmp.eq.s32.totalorder %s30, 1
    %p300 = scmp.ne.s32.totalorder %s295, %s297
    %p301 = scmp.eq.s32.totalorder %s30, 0
    %p302 = por %p300, %p301
    %p303 = scmp.ne.s32.totalorder %s295, %s297
    %p304 = scmp.eq.s32.totalorder %s35, 1
    %p305 = por %p303, %p304
    %p306 = scmp.ne.s32.totalorder %s297, %s298
    %p307 = scmp.eq.s32.totalorder %s35, 0
    %p308 = por %p306, %p307
    %p309 = scmp.ne.s32.totalorder %s297, %s298
    %p310 = scmp.eq.s32.totalorder %s36, 1
    %p311 = por %p309, %p310
    %p313 = scmp.ne.s32.totalorder %s298, %s312
    %p314 = scmp.eq.s32.totalorder %s36, 0
    %p315 = por %p313, %p314
    %s317 = sadd.s32 %s316, 1
    %p320 = scmp.eq.s32.totalorder %s30, 1
    %p321 = scmp.ne.s32.totalorder %s316, %s318
    %p322 = scmp.eq.s32.totalorder %s30, 0
    %p323 = por %p321, %p322
    %p324 = scmp.ne.s32.totalorder %s316, %s318
    %p325 = scmp.eq.s32.totalorder %s35, 1
    %p326 = por %p324, %p325
    %p327 = scmp.ne.s32.totalorder %s318, %s319
    %p328 = scmp.eq.s32.totalorder %s35, 0
    %p329 = por %p327, %p328
    %p330 = scmp.ne.s32.totalorder %s318, %s319
    %p331 = scmp.eq.s32.totalorder %s36, 1
    %p332 = por %p330, %p331
    %p334 = scmp.ne.s32.totalorder %s319, %s333
    %p335 = scmp.eq.s32.totalorder %s36, 0
    %p336 = por %p334, %p335
    %s338 = sadd.s32 %s337, 1
    %p341 = scmp.eq.s32.totalorder %s30, 1
    %p342 = scmp.ne.s32.totalorder %s337, %s339
    %p343 = scmp.eq.s32.totalorder %s30, 0
    %p344 = por %p342, %p343
    %p345 = scmp.ne.s32.totalorder %s337, %s339
    %p346 = scmp.eq.s32.totalorder %s35, 1
    %p347 = por %p345, %p346
    %p348 = scmp.ne.s32.totalorder %s339, %s340
    %p349 = scmp.eq.s32.totalorder %s35, 0
    %p350 = por %p348, %p349
    %p351 = scmp.ne.s32.totalorder %s339, %s340
    %p352 = scmp.eq.s32.totalorder %s36, 1
    %p353 = por %p351, %p352
    %p355 = scmp.ne.s32.totalorder %s340, %s354
    %p356 = scmp.eq.s32.totalorder %s36, 0
    %p357 = por %p355, %p356
    %s359 = sadd.s32 %s358, 1
    %p362 = scmp.eq.s32.totalorder %s30, 1
    %p363 = scmp.ne.s32.totalorder %s358, %s360
    %p364 = scmp.eq.s32.totalorder %s30, 0
    %p365 = por %p363, %p364
    %p366 = scmp.ne.s32.totalorder %s358, %s360
    %p367 = scmp.eq.s32.totalorder %s35, 1
    %p368 = por %p366, %p367
    %p369 = scmp.ne.s32.totalorder %s360, %s361
    %p370 = scmp.eq.s32.totalorder %s35, 0
    %p371 = por %p369, %p370
    %p372 = scmp.ne.s32.totalorder %s360, %s361
    %p373 = scmp.eq.s32.totalorder %s36, 1
    %p374 = por %p372, %p373
    %p376 = scmp.ne.s32.totalorder %s361, %s375
    %p377 = scmp.eq.s32.totalorder %s36, 0
    %p378 = por %p376, %p377
    %s380 = sadd.s32 %s379, 1
    %p383 = scmp.eq.s32.totalorder %s30, 1
    %p384 = scmp.ne.s32.totalorder %s379, %s381
    %p385 = scmp.eq.s32.totalorder %s30, 0
    %p386 = por %p384, %p385
    %p387 = scmp.ne.s32.totalorder %s379, %s381
    %p388 = scmp.eq.s32.totalorder %s35, 1
    %p389 = por %p387, %p388
    %p390 = scmp.ne.s32.totalorder %s381, %s382
    %p391 = scmp.eq.s32.totalorder %s35, 0
    %p392 = por %p390, %p391
    %p393 = scmp.ne.s32.totalorder %s381, %s382
    %p394 = scmp.eq.s32.totalorder %s36, 1
    %p395 = por %p393, %p394
    %p397 = scmp.ne.s32.totalorder %s382, %s396
    %p398 = scmp.eq.s32.totalorder %s36, 0
    %p399 = por %p397, %p398
    %s401 = sadd.s32 %s400, 1
    %p404 = scmp.eq.s32.totalorder %s30, 1
    %p405 = scmp.ne.s32.totalorder %s400, %s402
    %p406 = scmp.eq.s32.totalorder %s30, 0
    %p407 = por %p405, %p406
    %p408 = scmp.ne.s32.totalorder %s400, %s402
    %p409 = scmp.eq.s32.totalorder %s35, 1
    %p410 = por %p408, %p409
    %p411 = scmp.ne.s32.totalorder %s402, %s403
    %p412 = scmp.eq.s32.totalorder %s35, 0
    %p413 = por %p411, %p412
    %p414 = scmp.ne.s32.totalorder %s402, %s403
    %p415 = scmp.eq.s32.totalorder %s36, 1
    %p416 = por %p414, %p415
    %p418 = scmp.ne.s32.totalorder %s403, %s417
    %p419 = scmp.eq.s32.totalorder %s36, 0
    %p420 = por %p418, %p419
    %s422 = sadd.s32 %s421, 1
    %p425 = scmp.eq.s32.totalorder %s30, 1
    %p426 = scmp.ne.s32.totalorder %s421, %s423
    %p427 = scmp.eq.s32.totalorder %s30, 0
    %p428 = por %p426, %p427
    %p429 = scmp.ne.s32.totalorder %s421, %s423
    %p430 = scmp.eq.s32.totalorder %s35, 1
    %p431 = por %p429, %p430
    %p432 = scmp.ne.s32.totalorder %s423, %s424
    %p433 = scmp.eq.s32.totalorder %s35, 0
    %p434 = por %p432, %p433
    %p435 = scmp.ne.s32.totalorder %s423, %s424
    %p436 = scmp.eq.s32.totalorder %s36, 1
    %p437 = por %p435, %p436
    %p439 = scmp.ne.s32.totalorder %s424, %s438
    %p440 = scmp.eq.s32.totalorder %s36, 0
    %p441 = por %p439, %p440
    %s443 = sadd.s32 %s442, 1
    %p446 = scmp.eq.s32.totalorder %s30, 1
    %p447 = scmp.ne.s32.totalorder %s442, %s444
    %p448 = scmp.eq.s32.totalorder %s30, 0
    %p449 = por %p447, %p448
    %p450 = scmp.ne.s32.totalorder %s442, %s444
    %p451 = scmp.eq.s32.totalorder %s35, 1
    %p452 = por %p450, %p451
    %p453 = scmp.ne.s32.totalorder %s444, %s445
    %p454 = scmp.eq.s32.totalorder %s35, 0
    %p455 = por %p453, %p454
    %p456 = scmp.ne.s32.totalorder %s444, %s445
    %p457 = scmp.eq.s32.totalorder %s36, 1
    %p458 = por %p456, %p457
    %p460 = scmp.ne.s32.totalorder %s445, %s459
    %p461 = scmp.eq.s32.totalorder %s36, 0
    %p462 = por %p460, %p461
    %s464 = sadd.s32 %s463, 1
    %p467 = scmp.eq.s32.totalorder %s30, 1
    %p468 = scmp.ne.s32.totalorder %s463, %s465
    %p469 = scmp.eq.s32.totalorder %s30, 0
    %p470 = por %p468, %p469
    %p471 = scmp.ne.s32.totalorder %s463, %s465
    %p472 = scmp.eq.s32.totalorder %s35, 1
    %p473 = por %p471, %p472
    %p474 = scmp.ne.s32.totalorder %s465, %s466
    %p475 = scmp.eq.s32.totalorder %s35, 0
    %p476 = por %p474, %p475
    %p477 = scmp.ne.s32.totalorder %s465, %s466
    %p478 = scmp.eq.s32.totalorder %s36, 1
    %p479 = por %p477, %p478
    %p481 = scmp.ne.s32.totalorder %s466, %s480
    %p482 = scmp.eq.s32.totalorder %s36, 0
    %p483 = por %p481, %p482
    %s485 = sadd.s32 %s484, 1
    %p488 = scmp.eq.s32.totalorder %s30, 1
    %p489 = scmp.ne.s32.totalorder %s484, %s486
    %p490 = scmp.eq.s32.totalorder %s30, 0
    %p491 = por %p489, %p490
    %p492 = scmp.ne.s32.totalorder %s484, %s486
    %p493 = scmp.eq.s32.totalorder %s35, 1
    %p494 = por %p492, %p493
    %p495 = scmp.ne.s32.totalorder %s486, %s487
    %p496 = scmp.eq.s32.totalorder %s35, 0
    %p497 = por %p495, %p496
    %p498 = scmp.ne.s32.totalorder %s486, %s487
    %p499 = scmp.eq.s32.totalorder %s36, 1
    %p500 = por %p498, %p499
    %p502 = scmp.ne.s32.totalorder %s487, %s501
    %p503 = scmp.eq.s32.totalorder %s36, 0
    %p504 = por %p502, %p503
    %s505 = ssub.s32 %s30, %s37
    %p506 = scmp.eq.s32.totalorder %s505, 0
    %s508 = sadd.s32 %s507, 1
    %s509 = scalar_select %p506, %s507, %s508
    %p512 = pneg %p506
    %p513 = scmp.eq.s32.totalorder %s30, 1
    %p514 = por %p512, %p513
    %p515 = scmp.ne.s32.totalorder %s507, %s510
    %p516 = scmp.eq.s32.totalorder %s30, 0
    %p517 = por %p515, %p516
    %p518 = scmp.ne.s32.totalorder %s507, %s510
    %p519 = scmp.eq.s32.totalorder %s35, 1
    %p520 = por %p518, %p519
    %p521 = scmp.ne.s32.totalorder %s510, %s511
    %p522 = scmp.eq.s32.totalorder %s35, 0
    %p523 = por %p521, %p522
    %p524 = scmp.ne.s32.totalorder %s510, %s511
    %p525 = scmp.eq.s32.totalorder %s36, 1
    %p526 = por %p524, %p525
    %p528 = scmp.ne.s32.totalorder %s511, %s527
    %p529 = scmp.eq.s32.totalorder %s36, 0
    %p530 = por %p528, %p529
    %p531 = scmp.le.s32.totalorder 1, %s30
    %p532 = scmp.lt.s32.totalorder %s30, 3
    %p533 = pnand %p531, %p532
    %p534 = pneg %p533
    // Predicated region
    $region9: #{forward.1} parent=5 // pred_check
      _
    $region10: #{forward.1} parent=5 // pred_check_branch
      %536 = sbr.rel (%p533) target = $region12
    $region11: #{forward.1} parent=5 // pred_region
      %s537 = ssub.s32 %s30, 1
      // Predicated region
      $region13: #{forward.1} parent=11 // pred_check
        %p538 = pneg %p77
      $region14: #{forward.1} parent=11 // pred_check_branch
        %540 = sbr.rel (%p538) target = $region16
      $region15: #{forward.1} parent=11 // pred_region
        _
      $region16: #{forward.1} parent=11 // pred_fallthru
        _
      // Predicated region
      $region17: #{forward.1} parent=11 // pred_check
        %p541 = pneg %p98
      $region18: #{forward.1} parent=11 // pred_check_branch
        %543 = sbr.rel (%p541) target = $region20
      $region19: #{forward.1} parent=11 // pred_region
        _
      $region20: #{forward.1} parent=11 // pred_fallthru
        _
      // Predicated region
      $region21: #{forward.1} parent=11 // pred_check
        %p544 = pneg %p119
      $region22: #{forward.1} parent=11 // pred_check_branch
        %546 = sbr.rel (%p544) target = $region24
      $region23: #{forward.1} parent=11 // pred_region
        _
      $region24: #{forward.1} parent=11 // pred_fallthru
        _
      // Predicated region
      $region25: #{forward.1} parent=11 // pred_check
        %p547 = pneg %p140
      $region26: #{forward.1} parent=11 // pred_check_branch
        %549 = sbr.rel (%p547) target = $region28
      $region27: #{forward.1} parent=11 // pred_region
        _
      $region28: #{forward.1} parent=11 // pred_fallthru
        _
      // Predicated region
      $region29: #{forward.1} parent=11 // pred_check
        %p550 = pneg %p161
      $region30: #{forward.1} parent=11 // pred_check_branch
        %552 = sbr.rel (%p550) target = $region32
      $region31: #{forward.1} parent=11 // pred_region
        _
      $region32: #{forward.1} parent=11 // pred_fallthru
        _
      // Predicated region
      $region33: #{forward.1} parent=11 // pred_check
        %p553 = pneg %p182
      $region34: #{forward.1} parent=11 // pred_check_branch
        %555 = sbr.rel (%p553) target = $region36
      $region35: #{forward.1} parent=11 // pred_region
        _
      $region36: #{forward.1} parent=11 // pred_fallthru
        _
      // Predicated region
      $region37: #{forward.1} parent=11 // pred_check
        %p556 = pneg %p203
      $region38: #{forward.1} parent=11 // pred_check_branch
        %558 = sbr.rel (%p556) target = $region40
      $region39: #{forward.1} parent=11 // pred_region
        _
      $region40: #{forward.1} parent=11 // pred_fallthru
        _
      // Predicated region
      $region41: #{forward.1} parent=11 // pred_check
        %p559 = pneg %p224
      $region42: #{forward.1} parent=11 // pred_check_branch
        %561 = sbr.rel (%p559) target = $region44
      $region43: #{forward.1} parent=11 // pred_region
        _
      $region44: #{forward.1} parent=11 // pred_fallthru
        _
      // Predicated region
      $region45: #{forward.1} parent=11 // pred_check
        %p562 = pneg %p245
      $region46: #{forward.1} parent=11 // pred_check_branch
        %564 = sbr.rel (%p562) target = $region48
      $region47: #{forward.1} parent=11 // pred_region
        _
      $region48: #{forward.1} parent=11 // pred_fallthru
        _
      // Predicated region
      $region49: #{forward.1} parent=11 // pred_check
        %p565 = pneg %p266
      $region50: #{forward.1} parent=11 // pred_check_branch
        %567 = sbr.rel (%p565) target = $region52
      $region51: #{forward.1} parent=11 // pred_region
        _
      $region52: #{forward.1} parent=11 // pred_fallthru
        _
      // Predicated region
      $region53: #{forward.1} parent=11 // pred_check
        %p568 = pneg %p287
      $region54: #{forward.1} parent=11 // pred_check_branch
        %570 = sbr.rel (%p568) target = $region56
      $region55: #{forward.1} parent=11 // pred_region
        _
      $region56: #{forward.1} parent=11 // pred_fallthru
        _
      // Predicated region
      $region57: #{forward.1} parent=11 // pred_check
        %p571 = pneg %p308
      $region58: #{forward.1} parent=11 // pred_check_branch
        %573 = sbr.rel (%p571) target = $region60
      $region59: #{forward.1} parent=11 // pred_region
        _
      $region60: #{forward.1} parent=11 // pred_fallthru
        _
      // Predicated region
      $region61: #{forward.1} parent=11 // pred_check
        %p574 = pneg %p329
      $region62: #{forward.1} parent=11 // pred_check_branch
        %576 = sbr.rel (%p574) target = $region64
      $region63: #{forward.1} parent=11 // pred_region
        _
      $region64: #{forward.1} parent=11 // pred_fallthru
        _
      // Predicated region
      $region65: #{forward.1} parent=11 // pred_check
        %p577 = pneg %p350
      $region66: #{forward.1} parent=11 // pred_check_branch
        %579 = sbr.rel (%p577) target = $region68
      $region67: #{forward.1} parent=11 // pred_region
        _
      $region68: #{forward.1} parent=11 // pred_fallthru
        _
      // Predicated region
      $region69: #{forward.1} parent=11 // pred_check
        %p580 = pneg %p371
      $region70: #{forward.1} parent=11 // pred_check_branch
        %582 = sbr.rel (%p580) target = $region72
      $region71: #{forward.1} parent=11 // pred_region
        _
      $region72: #{forward.1} parent=11 // pred_fallthru
        _
      // Predicated region
      $region73: #{forward.1} parent=11 // pred_check
        %p583 = pneg %p392
      $region74: #{forward.1} parent=11 // pred_check_branch
        %585 = sbr.rel (%p583) target = $region76
      $region75: #{forward.1} parent=11 // pred_region
        _
      $region76: #{forward.1} parent=11 // pred_fallthru
        _
      // Predicated region
      $region77: #{forward.1} parent=11 // pred_check
        %p586 = pneg %p413
      $region78: #{forward.1} parent=11 // pred_check_branch
        %588 = sbr.rel (%p586) target = $region80
      $region79: #{forward.1} parent=11 // pred_region
        _
      $region80: #{forward.1} parent=11 // pred_fallthru
        _
      // Predicated region
      $region81: #{forward.1} parent=11 // pred_check
        %p589 = pneg %p434
      $region82: #{forward.1} parent=11 // pred_check_branch
        %591 = sbr.rel (%p589) target = $region84
      $region83: #{forward.1} parent=11 // pred_region
        _
      $region84: #{forward.1} parent=11 // pred_fallthru
        _
      // Predicated region
      $region85: #{forward.1} parent=11 // pred_check
        %p592 = pneg %p455
      $region86: #{forward.1} parent=11 // pred_check_branch
        %594 = sbr.rel (%p592) target = $region88
      $region87: #{forward.1} parent=11 // pred_region
        _
      $region88: #{forward.1} parent=11 // pred_fallthru
        _
      // Predicated region
      $region89: #{forward.1} parent=11 // pred_check
        %p595 = pneg %p476
      $region90: #{forward.1} parent=11 // pred_check_branch
        %597 = sbr.rel (%p595) target = $region92
      $region91: #{forward.1} parent=11 // pred_region
        _
      $region92: #{forward.1} parent=11 // pred_fallthru
        _
      // Predicated region
      $region93: #{forward.1} parent=11 // pred_check
        %p598 = pneg %p497
      $region94: #{forward.1} parent=11 // pred_check_branch
        %600 = sbr.rel (%p598) target = $region96
      $region95: #{forward.1} parent=11 // pred_region
        _
      $region96: #{forward.1} parent=11 // pred_fallthru
        _
    $region12: #{forward.1} parent=5 // pred_fallthru
      _
    %p601 = scmp.lt.s32.totalorder %s30, 2
    // Predicated region
    $region97: #{forward.1} parent=5 // pred_check
      %p602 = pneg %p601
    $region98: #{forward.1} parent=5 // pred_check_branch
      %604 = sbr.rel (%p602) target = $region100
    $region99: #{forward.1} parent=5 // pred_region
      // Predicated region
      $region101: #{forward.1} parent=99 // pred_check
        %p605 = pneg %p50
      $region102: #{forward.1} parent=99 // pred_check_branch
        %607 = sbr.rel (%p605) target = $region104
      $region103: #{forward.1} parent=99 // pred_region
        %p608 = scmp.lt.s32.totalorder %s30, 1
        %s609 = scalar_select %p608, %s30, 1
        %s610 = smul.addr %s609, 8
        %s611 = smul.addr %s610, 8
        %s612 = scalar_lea.vmem %s0, %s611
      $region104: #{forward.1} parent=99 // pred_fallthru
        _
    $region100: #{forward.1} parent=5 // pred_fallthru
      _
    %p613 = scmp.le.s32.totalorder 1, %s30
    %p614 = scmp.lt.s32.totalorder %s30, 3
    %p615 = pnand %p613, %p614
    %p616 = pneg %p615
    // Predicated region
    $region105: #{forward.1} parent=5 // pred_check
      _
    $region106: #{forward.1} parent=5 // pred_check_branch
      %618 = sbr.rel (%p615) target = $region108
    $region107: #{forward.1} parent=5 // pred_region
      %s619 = ssub.s32 %s30, 1
      %p620 = scmp.lt.s32.totalorder %s35, 1
      %s621 = scalar_select %p620, %s35, 1
      %s622 = smul.addr %s621, 8
      %s623 = smul.addr %s622, 8
      %s624 = scalar_lea.vmem %s0, %s623
      %p625 = pneg %p56
      %p626 = pneg %p53
      %p627 = pneg %p77
      %p628 = pneg %p74
      %p629 = pneg %p98
      %p630 = pneg %p95
      %p631 = pneg %p119
      %p632 = pneg %p116
      %p633 = pneg %p140
      %p634 = pneg %p137
      %p635 = pneg %p161
      %p636 = pneg %p158
      %p637 = pneg %p182
      %p638 = pneg %p179
      %p639 = pneg %p203
      %p640 = pneg %p200
      %p641 = pneg %p224
      %p642 = pneg %p221
      %p643 = pneg %p245
      %p644 = pneg %p242
      %p645 = pneg %p266
      %p646 = pneg %p263
      %p647 = pneg %p287
      %p648 = pneg %p284
      %p649 = pneg %p308
      %p650 = pneg %p305
      %p651 = pneg %p329
      %p652 = pneg %p326
      %p653 = pneg %p350
      %p654 = pneg %p347
      %p655 = pneg %p371
      %p656 = pneg %p368
      %p657 = pneg %p392
      %p658 = pneg %p389
      %p659 = pneg %p413
      %p660 = pneg %p410
      %p661 = pneg %p434
      %p662 = pneg %p431
      %p663 = pneg %p455
      %p664 = pneg %p452
      %p665 = pneg %p476
      %p666 = pneg %p473
      %p667 = pneg %p497
      %p668 = pneg %p494
      %p669 = pneg %p523
      %p670 = pneg %p520
      %p671 = scmp.lt.s32.totalorder %s35, 1
      %s672 = scalar_select %p671, %s35, 1
      %s673 = smul.addr %s672, 8
      %s674 = scalar_lea.vmem %s22, %s673
      %p675 = scmp.lt.s32.totalorder %s35, 1
      %s676 = scalar_select %p675, %s35, 1
      %s677 = smul.addr %s676, 8
      %s678 = smul.addr %s677, 8
      %s679 = scalar_lea.vmem %s0, %s678
      %p680 = scmp.lt.s32.totalorder %s35, 1
      %s681 = scalar_select %p680, %s35, 1
      %s682 = smul.addr %s681, 8
      %s683 = scalar_lea.vmem %s22, %s682
      %v685 = vld [vmem:[%s679] sm:$0xff]
      %v686 = vld [vmem:[%s679 + $0x8] sm:$0xff]
      %v687 = vld [vmem:[%s679 + $0x10] sm:$0xff]
      %v688 = vld [vmem:[%s679 + $0x18] sm:$0xff]
      %v689 = vld [vmem:[%s679 + $0x20] sm:$0xff]
      %v690 = vld [vmem:[%s679 + $0x28] sm:$0xff]
      %v691 = vld [vmem:[%s679 + $0x30] sm:$0xff]
      %v692 = vld [vmem:[%s679 + $0x38] sm:$0xff]
      %v693 = vpack.c.bf16 %v686, %v685
      %v694 = vpack.c.bf16 %v688, %v687
      %v695 = vpack.c.bf16 %v690, %v689
      %v696 = vpack.c.bf16 %v692, %v691
      %v697 = vld [vmem:[%s1] sm:$0xf]
      %v698 = vld [vmem:[%s1 + $0x4] sm:$0xf]
      %v699 = vld [vmem:[%s1 + $0x8] sm:$0xf]
      %v700 = vld [vmem:[%s1 + $0xc] sm:$0xf]
      %v701 = vld [vmem:[%s1 + $0x10] sm:$0xf]
      %v702 = vld [vmem:[%s1 + $0x14] sm:$0xf]
      %v703 = vld [vmem:[%s1 + $0x18] sm:$0xf]
      %v704 = vld [vmem:[%s1 + $0x1c] sm:$0xf]
      %v705 = vld [vmem:[%s1 + $0x20] sm:$0xf]
      %v706 = vld [vmem:[%s1 + $0x24] sm:$0xf]
      %v707 = vld [vmem:[%s1 + $0x28] sm:$0xf]
      %v708 = vld [vmem:[%s1 + $0x2c] sm:$0xf]
      %v709 = vld [vmem:[%s1 + $0x30] sm:$0xf]
      %v710 = vld [vmem:[%s1 + $0x34] sm:$0xf]
      %v711 = vld [vmem:[%s1 + $0x38] sm:$0xf]
      %v712 = vld [vmem:[%s1 + $0x3c] sm:$0xf]
      %v729 = vunpack.c.l.b16 %v697
      %v730 = vunpack.c.l.b16 %v698
      %v731 = vunpack.c.l.b16 %v699
      %v732 = vunpack.c.l.b16 %v700
      %v733 = vunpack.c.l.b16 %v701
      %v734 = vunpack.c.l.b16 %v702
      %v735 = vunpack.c.l.b16 %v703
      %v736 = vunpack.c.l.b16 %v704
      %v737 = vunpack.c.l.b16 %v705
      %v738 = vunpack.c.l.b16 %v706
      %v739 = vunpack.c.l.b16 %v707
      %v740 = vunpack.c.l.b16 %v708
      %v741 = vunpack.c.l.b16 %v709
      %v742 = vunpack.c.l.b16 %v710
      %v743 = vunpack.c.l.b16 %v711
      %v744 = vunpack.c.l.b16 %v712
      %v745 = vpack.c.b16 %v730, %v729
      %v746 = vpack.c.b16 %v732, %v731
      %v747 = vpack.c.b16 %v734, %v733
      %v748 = vpack.c.b16 %v736, %v735
      %v749 = vpack.c.b16 %v738, %v737
      %v750 = vpack.c.b16 %v740, %v739
      %v751 = vpack.c.b16 %v742, %v741
      %v752 = vpack.c.b16 %v744, %v743
      %761 = vmatprep.subr.bf16.mxu0 0
      %762 = vmatpush1.bf16.msra.mxu0 %v745
      %763 = vmatprep.subr.bf16.mxu0 0
      %764 = vmatpush1.bf16.msra.mxu0 %v746
      %765 = vmatprep.subr.bf16.mxu0 0
      %766 = vmatpush1.bf16.msra.mxu0 %v747
      %767 = vmatprep.subr.bf16.mxu0 0
      %768 = vmatpush1.bf16.msra.mxu0 %v748
      %769 = vmatprep.subr.bf16.mxu0 0
      %770 = vmatpush1.bf16.msra.mxu0 %v749
      %771 = vmatprep.subr.bf16.mxu0 0
      %772 = vmatpush1.bf16.msra.mxu0 %v750
      %773 = vmatprep.subr.bf16.mxu0 0
      %774 = vmatpush1.bf16.msra.mxu0 %v751
      %775 = vmatprep.subr.bf16.mxu0 0
      %776 = vmatpush1.bf16.msra.mxu0 %v752
      %777 = vmatprep.subr.bf16.mxu0 0
      %778 = vmatpush1.bf16.msra.mxu0 0
      %779 = vmatprep.subr.bf16.mxu0 0
      %780 = vmatpush1.bf16.msra.mxu0 0
      %781 = vmatprep.subr.bf16.mxu0 0
      %782 = vmatpush1.bf16.msra.mxu0 0
      %783 = vmatprep.subr.bf16.mxu0 0
      %784 = vmatpush1.bf16.msra.mxu0 0
      %785 = vmatprep.subr.bf16.mxu0 0
      %786 = vmatpush1.bf16.msra.mxu0 0
      %787 = vmatprep.subr.bf16.mxu0 0
      %788 = vmatpush1.bf16.msra.mxu0 0
      %789 = vmatprep.subr.bf16.mxu0 0
      %790 = vmatpush1.bf16.msra.mxu0 0
      %791 = vmatprep.subr.bf16.mxu0 0
      %792 = vmatpush1.bf16.msra.mxu0 0
      %793 = vmatprep.mubr.bf16.mxu0 0
      %794 = vmatmul.mubr.bf16.gmra.mrb[0].mxu0 %v693
      %v795 = vpop.f32.mrb[0].mxu0
      %v796 = vadd.f32 0.0, %v795
      %v797 = vpop.f32.mrb[0].mxu0
      %v798 = vpop.f32.mrb[0].mxu0
      %v799 = vadd.f32 0.0, %v798
      %v800 = vpop.f32.mrb[0].mxu0
      %801 = vmatprep.mubr.bf16.mxu0 0
      %802 = vmatmul.mubr.bf16.gmra.mrb[0].mxu0 %v694
      %v803 = vpop.f32.mrb[0].mxu0
      %v804 = vadd.f32 0.0, %v803
      %v805 = vpop.f32.mrb[0].mxu0
      %v806 = vpop.f32.mrb[0].mxu0
      %v807 = vadd.f32 0.0, %v806
      %v808 = vpop.f32.mrb[0].mxu0
      %809 = vmatprep.mubr.bf16.mxu0 0
      %810 = vmatmul.mubr.bf16.gmra.mrb[0].mxu0 %v695
      %v811 = vpop.f32.mrb[0].mxu0
      %v812 = vadd.f32 0.0, %v811
      %v813 = vpop.f32.mrb[0].mxu0
      %v814 = vpop.f32.mrb[0].mxu0
      %v815 = vadd.f32 0.0, %v814
      %v816 = vpop.f32.mrb[0].mxu0
      %817 = vmatprep.mubr.bf16.mxu0 0
      %818 = vmatmul.mubr.bf16.gmra.mrb[0].mxu0 %v696
      %v819 = vpop.f32.mrb[0].mxu0
      %v820 = vadd.f32 0.0, %v819
      %v821 = vpop.f32.mrb[0].mxu0
      %v822 = vpop.f32.mrb[0].mxu0
      %v823 = vadd.f32 0.0, %v822
      %v824 = vpop.f32.mrb[0].mxu0
      %825 = vdwg.mxu0
      %v826 = vld [vmem:[%s2] sm:$0x1]
      %v828 = vlaneseq
      %v829 = vshrl.u32 %v828, 7
      %v830 = vsub.s32 0, %v829
      %v831 = vrot.slane %v826, %v830
      %v833 = vmul.f32 %v796, %v831
      %v834 = vmul.f32 %v799, %v831
      %v835 = vmul.f32 %v804, %v831
      %v836 = vmul.f32 %v807, %v831
      %v837 = vmul.f32 %v812, %v831
      %v838 = vmul.f32 %v815, %v831
      %v839 = vmul.f32 %v820, %v831
      %v840 = vmul.f32 %v823, %v831
      %v841 = vld [vmem:[%s3] sm:$0x1]
      %v843 = vlaneseq
      %v844 = vshrl.u32 %v843, 7
      %v845 = vsub.s32 0, %v844
      %v846 = vrot.slane %v841, %v845
      %v848 = vadd.f32 %v833, %v846
      %v849 = vadd.f32 %v834, %v846
      %v850 = vadd.f32 %v835, %v846
      %v851 = vadd.f32 %v836, %v846
      %v852 = vadd.f32 %v837, %v846
      %v853 = vadd.f32 %v838, %v846
      %v854 = vadd.f32 %v839, %v846
      %v855 = vadd.f32 %v840, %v846
      %v856 = vxor.u32 %v848, 2147483648
      %v857 = vxor.u32 %v849, 2147483648
      %v858 = vxor.u32 %v850, 2147483648
      %v859 = vxor.u32 %v851, 2147483648
      %v860 = vxor.u32 %v852, 2147483648
      %v861 = vxor.u32 %v853, 2147483648
      %v862 = vxor.u32 %v854, 2147483648
      %v863 = vxor.u32 %v855, 2147483648
      %v864 = vmul.f32 %v856, 1.442695
      %v865 = vpow.pop %v864
      %v866 = vmul.f32 %v857, 1.442695
      %v867 = vpow.pop %v866
      %v868 = vmul.f32 %v858, 1.442695
      %v869 = vpow.pop %v868
      %v870 = vmul.f32 %v859, 1.442695
      %v871 = vpow.pop %v870
      %v872 = vmul.f32 %v860, 1.442695
      %v873 = vpow.pop %v872
      %v874 = vmul.f32 %v861, 1.442695
      %v875 = vpow.pop %v874
      %v876 = vmul.f32 %v862, 1.442695
      %v877 = vpow.pop %v876
      %v878 = vmul.f32 %v863, 1.442695
      %v879 = vpow.pop %v878
      %v880 = vadd.f32 %v865, 1.0
      %v881 = vadd.f32 %v867, 1.0
      %v882 = vadd.f32 %v869, 1.0
      %v883 = vadd.f32 %v871, 1.0
      %v884 = vadd.f32 %v873, 1.0
      %v885 = vadd.f32 %v875, 1.0
      %v886 = vadd.f32 %v877, 1.0
      %v887 = vadd.f32 %v879, 1.0
      %v888 = vrcp.pop %v880
      %v889 = vmul.f32 1.0, %v888
      %v890 = vrcp.pop %v881
      %v891 = vmul.f32 1.0, %v890
      %v892 = vrcp.pop %v882
      %v893 = vmul.f32 1.0, %v892
      %v894 = vrcp.pop %v883
      %v895 = vmul.f32 1.0, %v894
      %v896 = vrcp.pop %v884
      %v897 = vmul.f32 1.0, %v896
      %v898 = vrcp.pop %v885
      %v899 = vmul.f32 1.0, %v898
      %v900 = vrcp.pop %v886
      %v901 = vmul.f32 1.0, %v900
      %v902 = vrcp.pop %v887
      %v903 = vmul.f32 1.0, %v902
      %v904 = vmul.f32 %v848, %v889
      %v905 = vmul.f32 %v849, %v891
      %v906 = vmul.f32 %v850, %v893
      %v907 = vmul.f32 %v851, %v895
      %v908 = vmul.f32 %v852, %v897
      %v909 = vmul.f32 %v853, %v899
      %v910 = vmul.f32 %v854, %v901
      %v911 = vmul.f32 %v855, %v903
      %v912 = vpack.c.bf16 %v905, %v904
      %v913 = vpack.c.bf16 %v907, %v906
      %v914 = vpack.c.bf16 %v909, %v908
      %v915 = vpack.c.bf16 %v911, %v910
      %v916 = vld [vmem:[%s4] sm:$0xff]
      %v917 = vld [vmem:[%s4 + $0x8] sm:$0xff]
      %v918 = vld [vmem:[%s4 + $0x10] sm:$0xff]
      %v919 = vld [vmem:[%s4 + $0x18] sm:$0xff]
      %v920 = vld [vmem:[%s4 + $0x20] sm:$0xff]
      %v921 = vld [vmem:[%s4 + $0x28] sm:$0xff]
      %v922 = vld [vmem:[%s4 + $0x30] sm:$0xff]
      %v923 = vld [vmem:[%s4 + $0x38] sm:$0xff]
      %v924 = vld [vmem:[%s4 + $0x40] sm:$0xff]
      %v925 = vld [vmem:[%s4 + $0x48] sm:$0xff]
      %v926 = vld [vmem:[%s4 + $0x50] sm:$0xff]
      %v927 = vld [vmem:[%s4 + $0x58] sm:$0xff]
      %v928 = vld [vmem:[%s4 + $0x60] sm:$0xff]
      %v929 = vld [vmem:[%s4 + $0x68] sm:$0xff]
      %v930 = vld [vmem:[%s4 + $0x70] sm:$0xff]
      %v931 = vld [vmem:[%s4 + $0x78] sm:$0xff]
      %v948 = vunpack.c.l.b16 %v916
      %v949 = vunpack.c.h.b16 %v916
      %v950 = vunpack.c.l.b16 %v917
      %v951 = vunpack.c.h.b16 %v917
      %v952 = vunpack.c.l.b16 %v918
      %v953 = vunpack.c.h.b16 %v918
      %v954 = vunpack.c.l.b16 %v919
      %v955 = vunpack.c.h.b16 %v919
      %v956 = vunpack.c.l.b16 %v920
      %v957 = vunpack.c.h.b16 %v920
      %v958 = vunpack.c.l.b16 %v921
      %v959 = vunpack.c.h.b16 %v921
      %v960 = vunpack.c.l.b16 %v922
      %v961 = vunpack.c.h.b16 %v922
      %v962 = vunpack.c.l.b16 %v923
      %v963 = vunpack.c.h.b16 %v923
      %v964 = vunpack.c.l.b16 %v924
      %v965 = vunpack.c.h.b16 %v924
      %v966 = vunpack.c.l.b16 %v925
      %v967 = vunpack.c.h.b16 %v925
      %v968 = vunpack.c.l.b16 %v926
      %v969 = vunpack.c.h.b16 %v926
      %v970 = vunpack.c.l.b16 %v927
      %v971 = vunpack.c.h.b16 %v927
      %v972 = vunpack.c.l.b16 %v928
      %v973 = vunpack.c.h.b16 %v928
      %v974 = vunpack.c.l.b16 %v929
      %v975 = vunpack.c.h.b16 %v929
      %v976 = vunpack.c.l.b16 %v930
      %v977 = vunpack.c.h.b16 %v930
      %v978 = vunpack.c.l.b16 %v931
      %v979 = vunpack.c.h.b16 %v931
      %v980 = vpack.c.b16 %v950, %v948
      %v981 = vpack.c.b16 %v951, %v949
      %v982 = vpack.c.b16 %v954, %v952
      %v983 = vpack.c.b16 %v955, %v953
      %v984 = vpack.c.b16 %v958, %v956
      %v985 = vpack.c.b16 %v959, %v957
      %v986 = vpack.c.b16 %v962, %v960
      %v987 = vpack.c.b16 %v963, %v961
      %v988 = vpack.c.b16 %v966, %v964
      %v989 = vpack.c.b16 %v967, %v965
      %v990 = vpack.c.b16 %v970, %v968
      %v991 = vpack.c.b16 %v971, %v969
      %v992 = vpack.c.b16 %v974, %v972
      %v993 = vpack.c.b16 %v975, %v973
      %v994 = vpack.c.b16 %v978, %v976
      %v995 = vpack.c.b16 %v979, %v977
      %1012 = vmatprep.subr.bf16.mxu0 %v981
      %1013 = vmatpush1.bf16.msra.mxu0 %v980
      %1014 = vmatprep.subr.bf16.mxu0 %v983
      %1015 = vmatpush1.bf16.msra.mxu0 %v982
      %1016 = vmatprep.subr.bf16.mxu0 %v985
      %1017 = vmatpush1.bf16.msra.mxu0 %v984
      %1018 = vmatprep.subr.bf16.mxu0 %v987
      %1019 = vmatpush1.bf16.msra.mxu0 %v986
      %1020 = vmatprep.subr.bf16.mxu0 %v989
      %1021 = vmatpush1.bf16.msra.mxu0 %v988
      %1022 = vmatprep.subr.bf16.mxu0 %v991
      %1023 = vmatpush1.bf16.msra.mxu0 %v990
      %1024 = vmatprep.subr.bf16.mxu0 %v993
      %1025 = vmatpush1.bf16.msra.mxu0 %v992
      %1026 = vmatprep.subr.bf16.mxu0 %v995
      %1027 = vmatpush1.bf16.msra.mxu0 %v994
      %1028 = vmatprep.subr.bf16.mxu0 0
      %1029 = vmatpush1.bf16.msra.mxu0 0
      %1030 = vmatprep.subr.bf16.mxu0 0
      %1031 = vmatpush1.bf16.msra.mxu0 0
      %1032 = vmatprep.subr.bf16.mxu0 0
      %1033 = vmatpush1.bf16.msra.mxu0 0
      %1034 = vmatprep.subr.bf16.mxu0 0
      %1035 = vmatpush1.bf16.msra.mxu0 0
      %1036 = vmatprep.subr.bf16.mxu0 0
      %1037 = vmatpush1.bf16.msra.mxu0 0
      %1038 = vmatprep.subr.bf16.mxu0 0
      %1039 = vmatpush1.bf16.msra.mxu0 0
      %1040 = vmatprep.subr.bf16.mxu0 0
      %1041 = vmatpush1.bf16.msra.mxu0 0
      %1042 = vmatprep.subr.bf16.mxu0 0
      %1043 = vmatpush1.bf16.msra.mxu0 0
      %1044 = vmatprep.mubr.bf16.mxu0 0
      %1045 = vmatmul.mubr.bf16.gmra.mrb[0].mxu0 %v912
      %v1046 = vpop.f32.mrb[0].mxu0
      %v1047 = vadd.f32 0.0, %v1046
      %v1048 = vpop.f32.mrb[0].mxu0
      %v1049 = vadd.f32 0.0, %v1048
      %v1050 = vpop.f32.mrb[0].mxu0
      %v1051 = vadd.f32 0.0, %v1050
      %v1052 = vpop.f32.mrb[0].mxu0
      %v1053 = vadd.f32 0.0, %v1052
      %1054 = vmatprep.mubr.bf16.mxu0 0
      %1055 = vmatmul.mubr.bf16.gmra.mrb[0].mxu0 %v913
      %v1056 = vpop.f32.mrb[0].mxu0
      %v1057 = vadd.f32 0.0, %v1056
      %v1058 = vpop.f32.mrb[0].mxu0
      %v1059 = vadd.f32 0.0, %v1058
      %v1060 = vpop.f32.mrb[0].mxu0
      %v1061 = vadd.f32 0.0, %v1060
      %v1062 = vpop.f32.mrb[0].mxu0
      %v1063 = vadd.f32 0.0, %v1062
      %1064 = vmatprep.mubr.bf16.mxu0 0
      %1065 = vmatmul.mubr.bf16.gmra.mrb[0].mxu0 %v914
      %v1066 = vpop.f32.mrb[0].mxu0
      %v1067 = vadd.f32 0.0, %v1066
      %v1068 = vpop.f32.mrb[0].mxu0
      %v1069 = vadd.f32 0.0, %v1068
      %v1070 = vpop.f32.mrb[0].mxu0
      %v1071 = vadd.f32 0.0, %v1070
      %v1072 = vpop.f32.mrb[0].mxu0
      %v1073 = vadd.f32 0.0, %v1072
      %1074 = vmatprep.mubr.bf16.mxu0 0
      %1075 = vmatmul.mubr.bf16.gmra.mrb[0].mxu0 %v915
      %v1076 = vpop.f32.mrb[0].mxu0
      %v1077 = vadd.f32 0.0, %v1076
      %v1078 = vpop.f32.mrb[0].mxu0
      %v1079 = vadd.f32 0.0, %v1078
      %v1080 = vpop.f32.mrb[0].mxu0
      %v1081 = vadd.f32 0.0, %v1080
      %v1082 = vpop.f32.mrb[0].mxu0
      %v1083 = vadd.f32 0.0, %v1082
      %1084 = vdwg.mxu0
      %v1085 = vld [vmem:[%s5] sm:$0x3]
      %v1087 = vlaneseq
      %v1088 = vshrl.u32 %v1087, 7
      %v1089 = vsub.s32 0, %v1088
      %v1090 = vrot.slane %v1085, %v1089
      %v1091 = vlaneseq
      %v1092 = vshrl.u32 %v1091, 7
      %v1093 = vsub.s32 1, %v1092
      %v1094 = vrot.slane %v1085, %v1093
      %v1097 = vmul.f32 %v1047, %v1090
      %v1098 = vmul.f32 %v1049, %v1094
      %v1099 = vmul.f32 %v1051, %v1090
      %v1100 = vmul.f32 %v1053, %v1094
      %v1101 = vmul.f32 %v1057, %v1090
      %v1102 = vmul.f32 %v1059, %v1094
      %v1103 = vmul.f32 %v1061, %v1090
      %v1104 = vmul.f32 %v1063, %v1094
      %v1105 = vmul.f32 %v1067, %v1090
      %v1106 = vmul.f32 %v1069, %v1094
      %v1107 = vmul.f32 %v1071, %v1090
      %v1108 = vmul.f32 %v1073, %v1094
      %v1109 = vmul.f32 %v1077, %v1090
      %v1110 = vmul.f32 %v1079, %v1094
      %v1111 = vmul.f32 %v1081, %v1090
      %v1112 = vmul.f32 %v1083, %v1094
      %v1113 = vld [vmem:[%s6] sm:$0x3]
      %v1115 = vlaneseq
      %v1116 = vshrl.u32 %v1115, 7
      %v1117 = vsub.s32 0, %v1116
      %v1118 = vrot.slane %v1113, %v1117
      %v1119 = vlaneseq
      %v1120 = vshrl.u32 %v1119, 7
      %v1121 = vsub.s32 1, %v1120
      %v1122 = vrot.slane %v1113, %v1121
      %v1125 = vadd.f32 %v1097, %v1118
      %v1126 = vadd.f32 %v1098, %v1122
      %v1127 = vadd.f32 %v1099, %v1118
      %v1128 = vadd.f32 %v1100, %v1122
      %v1129 = vadd.f32 %v1101, %v1118
      %v1130 = vadd.f32 %v1102, %v1122
      %v1131 = vadd.f32 %v1103, %v1118
      %v1132 = vadd.f32 %v1104, %v1122
      %v1133 = vadd.f32 %v1105, %v1118
      %v1134 = vadd.f32 %v1106, %v1122
      %v1135 = vadd.f32 %v1107, %v1118
      %v1136 = vadd.f32 %v1108, %v1122
      %v1137 = vadd.f32 %v1109, %v1118
      %v1138 = vadd.f32 %v1110, %v1122
      %v1139 = vadd.f32 %v1111, %v1118
      %v1140 = vadd.f32 %v1112, %v1122
      %v1141 = vxor.u32 %v1125, 2147483648
      %v1142 = vxor.u32 %v1126, 2147483648
      %v1143 = vxor.u32 %v1127, 2147483648
      %v1144 = vxor.u32 %v1128, 2147483648
      %v1145 = vxor.u32 %v1129, 2147483648
      %v1146 = vxor.u32 %v1130, 2147483648
      %v1147 = vxor.u32 %v1131, 2147483648
      %v1148 = vxor.u32 %v1132, 2147483648
      %v1149 = vxor.u32 %v1133, 2147483648
      %v1150 = vxor.u32 %v1134, 2147483648
      %v1151 = vxor.u32 %v1135, 2147483648
      %v1152 = vxor.u32 %v1136, 2147483648
      %v1153 = vxor.u32 %v1137, 2147483648
      %v1154 = vxor.u32 %v1138, 2147483648
      %v1155 = vxor.u32 %v1139, 2147483648
      %v1156 = vxor.u32 %v1140, 2147483648
      %v1157 = vmul.f32 %v1141, 1.442695
      %v1158 = vpow.pop %v1157
      %v1159 = vmul.f32 %v1142, 1.442695
      %v1160 = vpow.pop %v1159
      %v1161 = vmul.f32 %v1143, 1.442695
      %v1162 = vpow.pop %v1161
      %v1163 = vmul.f32 %v1144, 1.442695
      %v1164 = vpow.pop %v1163
      %v1165 = vmul.f32 %v1145, 1.442695
      %v1166 = vpow.pop %v1165
      %v1167 = vmul.f32 %v1146, 1.442695
      %v1168 = vpow.pop %v1167
      %v1169 = vmul.f32 %v1147, 1.442695
      %v1170 = vpow.pop %v1169
      %v1171 = vmul.f32 %v1148, 1.442695
      %v1172 = vpow.pop %v1171
      %v1173 = vmul.f32 %v1149, 1.442695
      %v1174 = vpow.pop %v1173
      %v1175 = vmul.f32 %v1150, 1.442695
      %v1176 = vpow.pop %v1175
      %v1177 = vmul.f32 %v1151, 1.442695
      %v1178 = vpow.pop %v1177
      %v1179 = vmul.f32 %v1152, 1.442695
      %v1180 = vpow.pop %v1179
      %v1181 = vmul.f32 %v1153, 1.442695
      %v1182 = vpow.pop %v1181
      %v1183 = vmul.f32 %v1154, 1.442695
      %v1184 = vpow.pop %v1183
      %v1185 = vmul.f32 %v1155, 1.442695
      %v1186 = vpow.pop %v1185
      %v1187 = vmul.f32 %v1156, 1.442695
      %v1188 = vpow.pop %v1187
      %v1189 = vadd.f32 %v1158, 1.0
      %v1190 = vadd.f32 %v1160, 1.0
      %v1191 = vadd.f32 %v1162, 1.0
      %v1192 = vadd.f32 %v1164, 1.0
      %v1193 = vadd.f32 %v1166, 1.0
      %v1194 = vadd.f32 %v1168, 1.0
      %v1195 = vadd.f32 %v1170, 1.0
      %v1196 = vadd.f32 %v1172, 1.0
      %v1197 = vadd.f32 %v1174, 1.0
      %v1198 = vadd.f32 %v1176, 1.0
      %v1199 = vadd.f32 %v1178, 1.0
      %v1200 = vadd.f32 %v1180, 1.0
      %v1201 = vadd.f32 %v1182, 1.0
      %v1202 = vadd.f32 %v1184, 1.0
      %v1203 = vadd.f32 %v1186, 1.0
      %v1204 = vadd.f32 %v1188, 1.0
      %v1205 = vrcp.pop %v1189
      %v1206 = vmul.f32 1.0, %v1205
      %v1207 = vrcp.pop %v1190
      %v1208 = vmul.f32 1.0, %v1207
      %v1209 = vrcp.pop %v1191
      %v1210 = vmul.f32 1.0, %v1209
      %v1211 = vrcp.pop %v1192
      %v1212 = vmul.f32 1.0, %v1211
      %v1213 = vrcp.pop %v1193
      %v1214 = vmul.f32 1.0, %v1213
      %v1215 = vrcp.pop %v1194
      %v1216 = vmul.f32 1.0, %v1215
      %v1217 = vrcp.pop %v1195
      %v1218 = vmul.f32 1.0, %v1217
      %v1219 = vrcp.pop %v1196
      %v1220 = vmul.f32 1.0, %v1219
      %v1221 = vrcp.pop %v1197
      %v1222 = vmul.f32 1.0, %v1221
      %v1223 = vrcp.pop %v1198
      %v1224 = vmul.f32 1.0, %v1223
      %v1225 = vrcp.pop %v1199
      %v1226 = vmul.f32 1.0, %v1225
      %v1227 = vrcp.pop %v1200
      %v1228 = vmul.f32 1.0, %v1227
      %v1229 = vrcp.pop %v1201
      %v1230 = vmul.f32 1.0, %v1229
      %v1231 = vrcp.pop %v1202
      %v1232 = vmul.f32 1.0, %v1231
      %v1233 = vrcp.pop %v1203
      %v1234 = vmul.f32 1.0, %v1233
      %v1235 = vrcp.pop %v1204
      %v1236 = vmul.f32 1.0, %v1235
      %v1237 = vmul.f32 %v1125, %v1206
      %v1238 = vmul.f32 %v1126, %v1208
      %v1239 = vmul.f32 %v1127, %v1210
      %v1240 = vmul.f32 %v1128, %v1212
      %v1241 = vmul.f32 %v1129, %v1214
      %v1242 = vmul.f32 %v1130, %v1216
      %v1243 = vmul.f32 %v1131, %v1218
      %v1244 = vmul.f32 %v1132, %v1220
      %v1245 = vmul.f32 %v1133, %v1222
      %v1246 = vmul.f32 %v1134, %v1224
      %v1247 = vmul.f32 %v1135, %v1226
      %v1248 = vmul.f32 %v1136, %v1228
      %v1249 = vmul.f32 %v1137, %v1230
      %v1250 = vmul.f32 %v1138, %v1232
      %v1251 = vmul.f32 %v1139, %v1234
      %v1252 = vmul.f32 %v1140, %v1236
      %1253 = vst [vmem:[#allocation2] sm:$0xff] 0.0
      %1254 = vst [vmem:[#allocation2 + $0x8] sm:$0xff] 0.0
      %1255 = vst [vmem:[#allocation2 + $0x10] sm:$0xff] 0.0
      %1256 = vst [vmem:[#allocation2 + $0x18] sm:$0xff] 0.0
      %1257 = vst [vmem:[#allocation2 + $0x20] sm:$0xff] 0.0
      %1258 = vst [vmem:[#allocation2 + $0x28] sm:$0xff] 0.0
      %1259 = vst [vmem:[#allocation2 + $0x30] sm:$0xff] 0.0
      %1260 = vst [vmem:[#allocation2 + $0x38] sm:$0xff] 0.0
      %1261 = vst [vmem:[#allocation2 + $0x40] sm:$0xff] 0.0
      %1262 = vst [vmem:[#allocation2 + $0x48] sm:$0xff] 0.0
      %1263 = vst [vmem:[#allocation2 + $0x50] sm:$0xff] 0.0
      %1264 = vst [vmem:[#allocation2 + $0x58] sm:$0xff] 0.0
      %1265 = vst [vmem:[#allocation2 + $0x60] sm:$0xff] 0.0
      %1266 = vst [vmem:[#allocation2 + $0x68] sm:$0xff] 0.0
      %1267 = vst [vmem:[#allocation2 + $0x70] sm:$0xff] 0.0
      %1268 = vst [vmem:[#allocation2 + $0x78] sm:$0xff] 0.0
      %1269 = vst [vmem:[#allocation2 + $0x80] sm:$0xff] 0.0
      %1270 = vst [vmem:[#allocation2 + $0x88] sm:$0xff] 0.0
      %1271 = vst [vmem:[#allocation2 + $0x90] sm:$0xff] 0.0
      %1272 = vst [vmem:[#allocation2 + $0x98] sm:$0xff] 0.0
      %1273 = vst [vmem:[#allocation2 + $0xa0] sm:$0xff] 0.0
      %1274 = vst [vmem:[#allocation2 + $0xa8] sm:$0xff] 0.0
      %1275 = vst [vmem:[#allocation2 + $0xb0] sm:$0xff] 0.0
      %1276 = vst [vmem:[#allocation2 + $0xb8] sm:$0xff] 0.0
      %1277 = vst [vmem:[#allocation2 + $0xc0] sm:$0xff] 0.0
      %1278 = vst [vmem:[#allocation2 + $0xc8] sm:$0xff] 0.0
      %1279 = vst [vmem:[#allocation2 + $0xd0] sm:$0xff] 0.0
      %1280 = vst [vmem:[#allocation2 + $0xd8] sm:$0xff] 0.0
      %1281 = vst [vmem:[#allocation2 + $0xe0] sm:$0xff] 0.0
      %1282 = vst [vmem:[#allocation2 + $0xe8] sm:$0xff] 0.0
      %1283 = vst [vmem:[#allocation2 + $0xf0] sm:$0xff] 0.0
      %1284 = vst [vmem:[#allocation2 + $0xf8] sm:$0xff] 0.0
      %1285 = vst [vmem:[#allocation2 + $0x100] sm:$0xff] 0.0
      %1286 = vst [vmem:[#allocation2 + $0x108] sm:$0xff] 0.0
      %1287 = vst [vmem:[#allocation2 + $0x110] sm:$0xff] 0.0
      %1288 = vst [vmem:[#allocation2 + $0x118] sm:$0xff] 0.0
      %1289 = vst [vmem:[#allocation2 + $0x120] sm:$0xff] 0.0
      %1290 = vst [vmem:[#allocation2 + $0x128] sm:$0xff] 0.0
      %1291 = vst [vmem:[#allocation2 + $0x130] sm:$0xff] 0.0
      %1292 = vst [vmem:[#allocation2 + $0x138] sm:$0xff] 0.0
      %1293 = vst [vmem:[#allocation2 + $0x140] sm:$0xff] 0.0
      %1294 = vst [vmem:[#allocation2 + $0x148] sm:$0xff] 0.0
      %1295 = vst [vmem:[#allocation2 + $0x150] sm:$0xff] 0.0
      %1296 = vst [vmem:[#allocation2 + $0x158] sm:$0xff] 0.0
      %1297 = vst [vmem:[#allocation2 + $0x160] sm:$0xff] 0.0
      %1298 = vst [vmem:[#allocation2 + $0x168] sm:$0xff] 0.0
      %1299 = vst [vmem:[#allocation2 + $0x170] sm:$0xff] 0.0
      %1300 = vst [vmem:[#allocation2 + $0x178] sm:$0xff] 0.0
      %1301 = vst [vmem:[#allocation2 + $0x180] sm:$0xff] 0.0
      %1302 = vst [vmem:[#allocation2 + $0x188] sm:$0xff] 0.0
      %1303 = vst [vmem:[#allocation2 + $0x190] sm:$0xff] 0.0
      %1304 = vst [vmem:[#allocation2 + $0x198] sm:$0xff] 0.0
      %1305 = vst [vmem:[#allocation2 + $0x1a0] sm:$0xff] 0.0
      %1306 = vst [vmem:[#allocation2 + $0x1a8] sm:$0xff] 0.0
      %1307 = vst [vmem:[#allocation2 + $0x1b0] sm:$0xff] 0.0
      %1308 = vst [vmem:[#allocation2 + $0x1b8] sm:$0xff] 0.0
      %1309 = vst [vmem:[#allocation2 + $0x1c0] sm:$0xff] 0.0
      %1310 = vst [vmem:[#allocation2 + $0x1c8] sm:$0xff] 0.0
      %1311 = vst [vmem:[#allocation2 + $0x1d0] sm:$0xff] 0.0
      %1312 = vst [vmem:[#allocation2 + $0x1d8] sm:$0xff] 0.0
      %s1313 = scalar_lea.vmem [#allocation2], 48
      %1314 = vst [vmem:[%s1313 + $0x10] sm:$0xff] %v1237
      %1315 = vst [vmem:[%s1313 + $0x18] sm:$0xff] %v1238
      %1316 = vst [vmem:[%s1313 + $0x40] sm:$0xff] %v1239
      %1317 = vst [vmem:[%s1313 + $0x48] sm:$0xff] %v1240
      %1318 = vst [vmem:[%s1313 + $0x70] sm:$0xff] %v1241
      %1319 = vst [vmem:[%s1313 + $0x78] sm:$0xff] %v1242
      %1320 = vst [vmem:[%s1313 + $0xa0] sm:$0xff] %v1243
      %1321 = vst [vmem:[%s1313 + $0xa8] sm:$0xff] %v1244
      %1322 = vst [vmem:[%s1313 + $0xd0] sm:$0xff] %v1245
      %1323 = vst [vmem:[%s1313 + $0xd8] sm:$0xff] %v1246
      %1324 = vst [vmem:[%s1313 + $0x100] sm:$0xff] %v1247
      %1325 = vst [vmem:[%s1313 + $0x108] sm:$0xff] %v1248
      %1326 = vst [vmem:[%s1313 + $0x130] sm:$0xff] %v1249
      %1327 = vst [vmem:[%s1313 + $0x138] sm:$0xff] %v1250
      %1328 = vst [vmem:[%s1313 + $0x160] sm:$0xff] %v1251
      %1329 = vst [vmem:[%s1313 + $0x168] sm:$0xff] %v1252
      %v1330 = vld [vmem:[%s7] sm:$0xff]
      %v1331 = vld [vmem:[%s7 + $0x8] sm:$0xff]
      %v1332 = vld [vmem:[%s7 + $0x10] sm:$0x1]
      %v1333 = vld [vmem:[%s7 + $0x18] sm:$0x1]
      %v1334 = vld [vmem:[#allocation2] sm:$0x80]
      %v1335 = vld [vmem:[#allocation2 + $0x8] sm:$0x80]
      %v1336 = vld [vmem:[#allocation2 + $0x10] sm:$0x7f]
      %v1337 = vld [vmem:[#allocation2 + $0x18] sm:$0x7f]
      %v1338 = vld [vmem:[#allocation2 + $0x30] sm:$0x80]
      %v1339 = vld [vmem:[#allocation2 + $0x38] sm:$0x80]
      %v1340 = vld [vmem:[#allocation2 + $0x40] sm:$0x7f]
      %v1341 = vld [vmem:[#allocation2 + $0x48] sm:$0x7f]
      %v1342 = vld [vmem:[#allocation2 + $0x60] sm:$0x80]
      %v1343 = vld [vmem:[#allocation2 + $0x68] sm:$0x80]
      %v1344 = vld [vmem:[#allocation2 + $0x70] sm:$0x7f]
      %v1345 = vld [vmem:[#allocation2 + $0x78] sm:$0x7f]
      %v1346 = vld [vmem:[#allocation2 + $0x90] sm:$0x80]
      %v1347 = vld [vmem:[#allocation2 + $0x98] sm:$0x80]
      %v1348 = vld [vmem:[#allocation2 + $0xa0] sm:$0x7f]
      %v1349 = vld [vmem:[#allocation2 + $0xa8] sm:$0x7f]
      %v1350 = vld [vmem:[#allocation2 + $0xc0] sm:$0x80]
      %v1351 = vld [vmem:[#allocation2 + $0xc8] sm:$0x80]
      %v1352 = vld [vmem:[#allocation2 + $0xd0] sm:$0x7f]
      %v1353 = vld [vmem:[#allocation2 + $0xd8] sm:$0x7f]
      %v1354 = vld [vmem:[#allocation2 + $0xf0] sm:$0x80]
      %v1355 = vld [vmem:[#allocation2 + $0xf8] sm:$0x80]
      %v1356 = vld [vmem:[#allocation2 + $0x100] sm:$0x7f]
      %v1357 = vld [vmem:[#allocation2 + $0x108] sm:$0x7f]
      %v1358 = vld [vmem:[#allocation2 + $0x120] sm:$0x80]
      %v1359 = vld [vmem:[#allocation2 + $0x128] sm:$0x80]
      %v1360 = vld [vmem:[#allocation2 + $0x130] sm:$0x7f]
      %v1361 = vld [vmem:[#allocation2 + $0x138] sm:$0x7f]
      %v1362 = vld [vmem:[#allocation2 + $0x150] sm:$0x80]
      %v1363 = vld [vmem:[#allocation2 + $0x158] sm:$0x80]
      %v1364 = vld [vmem:[#allocation2 + $0x160] sm:$0x7f]
      %v1365 = vld [vmem:[#allocation2 + $0x168] sm:$0x7f]
      %v1366 = vld [vmem:[#allocation2 + $0x180] sm:$0x80]
      %v1367 = vld [vmem:[#allocation2 + $0x188] sm:$0x80]
      %v1368 = vld [vmem:[#allocation2 + $0x190] sm:$0x7f]
      %v1369 = vld [vmem:[#allocation2 + $0x198] sm:$0x7f]
      %v1370 = vld [vmem:[#allocation2 + $0x1b0] sm:$0x80]
      %v1371 = vld [vmem:[#allocation2 + $0x1b8] sm:$0x80]
      %v1372 = vld [vmem:[#allocation2 + $0x1c0] sm:$0x7f]
      %v1373 = vld [vmem:[#allocation2 + $0x1c8] sm:$0x7f]
      %v1374 = vlaneseq
      %v1375 = vshrl.u32 %v1374, 7
      %v1376 = vsub.s32 0, %v1375
      %v1377 = vrot.slane %v1330, %v1376
      %v1378 = vlaneseq
      %v1379 = vshrl.u32 %v1378, 7
      %v1380 = vsub.s32 0, %v1379
      %v1381 = vrot.slane %v1331, %v1380
      %v1382 = vmul.f32 %v1334, %v1377
      %v1383 = vmul.f32 %v1335, %v1381
      %v1384 = vmul.f32 %v1336, %v1377
      %v1385 = vmul.f32 %v1337, %v1381
      %v1386 = vmul.f32 %v1338, %v1377
      %v1387 = vmul.f32 %v1339, %v1381
      %v1388 = vmul.f32 %v1340, %v1377
      %v1389 = vmul.f32 %v1341, %v1381
      %v1390 = vmul.f32 %v1342, %v1377
      %v1391 = vmul.f32 %v1343, %v1381
      %v1392 = vmul.f32 %v1344, %v1377
      %v1393 = vmul.f32 %v1345, %v1381
      %v1394 = vmul.f32 %v1346, %v1377
      %v1395 = vmul.f32 %v1347, %v1381
      %v1396 = vmul.f32 %v1348, %v1377
      %v1397 = vmul.f32 %v1349, %v1381
      %v1398 = vmul.f32 %v1350, %v1377
      %v1399 = vmul.f32 %v1351, %v1381
      %v1400 = vmul.f32 %v1352, %v1377
      %v1401 = vmul.f32 %v1353, %v1381
      %v1402 = vmul.f32 %v1354, %v1377
      %v1403 = vmul.f32 %v1355, %v1381
      %v1404 = vmul.f32 %v1356, %v1377
      %v1405 = vmul.f32 %v1357, %v1381
      %v1406 = vmul.f32 %v1358, %v1377
      %v1407 = vmul.f32 %v1359, %v1381
      %v1408 = vmul.f32 %v1360, %v1377
      %v1409 = vmul.f32 %v1361, %v1381
      %v1410 = vmul.f32 %v1362, %v1377
      %v1411 = vmul.f32 %v1363, %v1381
      %v1412 = vmul.f32 %v1364, %v1377
      %v1413 = vmul.f32 %v1365, %v1381
      %v1414 = vadd.f32 %v1382, 0.0
      %v1415 = vadd.f32 %v1383, 0.0
      %v1416 = vadd.f32 %v1384, 0.0
      %v1417 = vadd.f32 %v1385, 0.0
      %v1418 = vadd.f32 %v1386, 0.0
      %v1419 = vadd.f32 %v1387, 0.0
      %v1420 = vadd.f32 %v1388, 0.0
      %v1421 = vadd.f32 %v1389, 0.0
      %v1422 = vadd.f32 %v1390, 0.0
      %v1423 = vadd.f32 %v1391, 0.0
      %v1424 = vadd.f32 %v1392, 0.0
      %v1425 = vadd.f32 %v1393, 0.0
      %v1426 = vadd.f32 %v1394, 0.0
      %v1427 = vadd.f32 %v1395, 0.0
      %v1428 = vadd.f32 %v1396, 0.0
      %v1429 = vadd.f32 %v1397, 0.0
      %v1430 = vadd.f32 %v1398, 0.0
      %v1431 = vadd.f32 %v1399, 0.0
      %v1432 = vadd.f32 %v1400, 0.0
      %v1433 = vadd.f32 %v1401, 0.0
      %v1434 = vadd.f32 %v1402, 0.0
      %v1435 = vadd.f32 %v1403, 0.0
      %v1436 = vadd.f32 %v1404, 0.0
      %v1437 = vadd.f32 %v1405, 0.0
      %v1438 = vadd.f32 %v1406, 0.0
      %v1439 = vadd.f32 %v1407, 0.0
      %v1440 = vadd.f32 %v1408, 0.0
      %v1441 = vadd.f32 %v1409, 0.0
      %v1442 = vadd.f32 %v1410, 0.0
      %v1443 = vadd.f32 %v1411, 0.0
      %v1444 = vadd.f32 %v1412, 0.0
      %v1445 = vadd.f32 %v1413, 0.0
      %v1446 = vlaneseq
      %v1447 = vshrl.u32 %v1446, 7
      %v1448 = vsub.s32 3, %v1447
      %v1449 = vrot.slane %v1330, %v1448
      %v1450 = vlaneseq
      %v1451 = vshrl.u32 %v1450, 7
      %v1452 = vsub.s32 3, %v1451
      %v1453 = vrot.slane %v1331, %v1452
      %v1454 = vmul.f32 %v1338, %v1449
      %v1455 = vmul.f32 %v1339, %v1453
      %v1456 = vmul.f32 %v1340, %v1449
      %v1457 = vmul.f32 %v1341, %v1453
      %v1458 = vmul.f32 %v1342, %v1449
      %v1459 = vmul.f32 %v1343, %v1453
      %v1460 = vmul.f32 %v1344, %v1449
      %v1461 = vmul.f32 %v1345, %v1453
      %v1462 = vmul.f32 %v1346, %v1449
      %v1463 = vmul.f32 %v1347, %v1453
      %v1464 = vmul.f32 %v1348, %v1449
      %v1465 = vmul.f32 %v1349, %v1453
      %v1466 = vmul.f32 %v1350, %v1449
      %v1467 = vmul.f32 %v1351, %v1453
      %v1468 = vmul.f32 %v1352, %v1449
      %v1469 = vmul.f32 %v1353, %v1453
      %v1470 = vmul.f32 %v1354, %v1449
      %v1471 = vmul.f32 %v1355, %v1453
      %v1472 = vmul.f32 %v1356, %v1449
      %v1473 = vmul.f32 %v1357, %v1453
      %v1474 = vmul.f32 %v1358, %v1449
      %v1475 = vmul.f32 %v1359, %v1453
      %v1476 = vmul.f32 %v1360, %v1449
      %v1477 = vmul.f32 %v1361, %v1453
      %v1478 = vmul.f32 %v1362, %v1449
      %v1479 = vmul.f32 %v1363, %v1453
      %v1480 = vmul.f32 %v1364, %v1449
      %v1481 = vmul.f32 %v1365, %v1453
      %v1482 = vmul.f32 %v1366, %v1449
      %v1483 = vmul.f32 %v1367, %v1453
      %v1484 = vmul.f32 %v1368, %v1449
      %v1485 = vmul.f32 %v1369, %v1453
      %v1486 = vadd.f32 %v1414, %v1454
      %v1487 = vadd.f32 %v1415, %v1455
      %v1488 = vadd.f32 %v1416, %v1456
      %v1489 = vadd.f32 %v1417, %v1457
      %v1490 = vadd.f32 %v1418, %v1458
      %v1491 = vadd.f32 %v1419, %v1459
      %v1492 = vadd.f32 %v1420, %v1460
      %v1493 = vadd.f32 %v1421, %v1461
      %v1494 = vadd.f32 %v1422, %v1462
      %v1495 = vadd.f32 %v1423, %v1463
      %v1496 = vadd.f32 %v1424, %v1464
      %v1497 = vadd.f32 %v1425, %v1465
      %v1498 = vadd.f32 %v1426, %v1466
      %v1499 = vadd.f32 %v1427, %v1467
      %v1500 = vadd.f32 %v1428, %v1468
      %v1501 = vadd.f32 %v1429, %v1469
      %v1502 = vadd.f32 %v1430, %v1470
      %v1503 = vadd.f32 %v1431, %v1471
      %v1504 = vadd.f32 %v1432, %v1472
      %v1505 = vadd.f32 %v1433, %v1473
      %v1506 = vadd.f32 %v1434, %v1474
      %v1507 = vadd.f32 %v1435, %v1475
      %v1508 = vadd.f32 %v1436, %v1476
      %v1509 = vadd.f32 %v1437, %v1477
      %v1510 = vadd.f32 %v1438, %v1478
      %v1511 = vadd.f32 %v1439, %v1479
      %v1512 = vadd.f32 %v1440, %v1480
      %v1513 = vadd.f32 %v1441, %v1481
      %v1514 = vadd.f32 %v1442, %v1482
      %v1515 = vadd.f32 %v1443, %v1483
      %v1516 = vadd.f32 %v1444, %v1484
      %v1517 = vadd.f32 %v1445, %v1485
      %v1518 = vlaneseq
      %v1519 = vshrl.u32 %v1518, 7
      %v1520 = vsub.s32 6, %v1519
      %v1521 = vrot.slane %v1330, %v1520
      %v1522 = vlaneseq
      %v1523 = vshrl.u32 %v1522, 7
      %v1524 = vsub.s32 6, %v1523
      %v1525 = vrot.slane %v1331, %v1524
      %v1526 = vmul.f32 %v1342, %v1521
      %v1527 = vmul.f32 %v1343, %v1525
      %v1528 = vmul.f32 %v1344, %v1521
      %v1529 = vmul.f32 %v1345, %v1525
      %v1530 = vmul.f32 %v1346, %v1521
      %v1531 = vmul.f32 %v1347, %v1525
      %v1532 = vmul.f32 %v1348, %v1521
      %v1533 = vmul.f32 %v1349, %v1525
      %v1534 = vmul.f32 %v1350, %v1521
      %v1535 = vmul.f32 %v1351, %v1525
      %v1536 = vmul.f32 %v1352, %v1521
      %v1537 = vmul.f32 %v1353, %v1525
      %v1538 = vmul.f32 %v1354, %v1521
      %v1539 = vmul.f32 %v1355, %v1525
      %v1540 = vmul.f32 %v1356, %v1521
      %v1541 = vmul.f32 %v1357, %v1525
      %v1542 = vmul.f32 %v1358, %v1521
      %v1543 = vmul.f32 %v1359, %v1525
      %v1544 = vmul.f32 %v1360, %v1521
      %v1545 = vmul.f32 %v1361, %v1525
      %v1546 = vmul.f32 %v1362, %v1521
      %v1547 = vmul.f32 %v1363, %v1525
      %v1548 = vmul.f32 %v1364, %v1521
      %v1549 = vmul.f32 %v1365, %v1525
      %v1550 = vmul.f32 %v1366, %v1521
      %v1551 = vmul.f32 %v1367, %v1525
      %v1552 = vmul.f32 %v1368, %v1521
      %v1553 = vmul.f32 %v1369, %v1525
      %v1554 = vmul.f32 %v1370, %v1521
      %v1555 = vmul.f32 %v1371, %v1525
      %v1556 = vmul.f32 %v1372, %v1521
      %v1557 = vmul.f32 %v1373, %v1525
      %v1558 = vadd.f32 %v1486, %v1526
      %v1559 = vadd.f32 %v1487, %v1527
      %v1560 = vadd.f32 %v1488, %v1528
      %v1561 = vadd.f32 %v1489, %v1529
      %v1562 = vadd.f32 %v1490, %v1530
      %v1563 = vadd.f32 %v1491, %v1531
      %v1564 = vadd.f32 %v1492, %v1532
      %v1565 = vadd.f32 %v1493, %v1533
      %v1566 = vadd.f32 %v1494, %v1534
      %v1567 = vadd.f32 %v1495, %v1535
      %v1568 = vadd.f32 %v1496, %v1536
      %v1569 = vadd.f32 %v1497, %v1537
      %v1570 = vadd.f32 %v1498, %v1538
      %v1571 = vadd.f32 %v1499, %v1539
      %v1572 = vadd.f32 %v1500, %v1540
      %v1573 = vadd.f32 %v1501, %v1541
      %v1574 = vadd.f32 %v1502, %v1542
      %v1575 = vadd.f32 %v1503, %v1543
      %v1576 = vadd.f32 %v1504, %v1544
      %v1577 = vadd.f32 %v1505, %v1545
      %v1578 = vadd.f32 %v1506, %v1546
      %v1579 = vadd.f32 %v1507, %v1547
      %v1580 = vadd.f32 %v1508, %v1548
      %v1581 = vadd.f32 %v1509, %v1549
      %v1582 = vadd.f32 %v1510, %v1550
      %v1583 = vadd.f32 %v1511, %v1551
      %v1584 = vadd.f32 %v1512, %v1552
      %v1585 = vadd.f32 %v1513, %v1553
      %v1586 = vadd.f32 %v1514, %v1554
      %v1587 = vadd.f32 %v1515, %v1555
      %v1588 = vadd.f32 %v1516, %v1556
      %v1589 = vadd.f32 %v1517, %v1557
      %v1590 = vld [vmem:[#allocation2 + $0x10] sm:$0xff]
      %v1591 = vld [vmem:[#allocation2 + $0x18] sm:$0xff]
      %v1592 = vld [vmem:[#allocation2 + $0x40] sm:$0xff]
      %v1593 = vld [vmem:[#allocation2 + $0x48] sm:$0xff]
      %v1594 = vld [vmem:[#allocation2 + $0x70] sm:$0xff]
      %v1595 = vld [vmem:[#allocation2 + $0x78] sm:$0xff]
      %v1596 = vld [vmem:[#allocation2 + $0xa0] sm:$0xff]
      %v1597 = vld [vmem:[#allocation2 + $0xa8] sm:$0xff]
      %v1598 = vld [vmem:[#allocation2 + $0xd0] sm:$0xff]
      %v1599 = vld [vmem:[#allocation2 + $0xd8] sm:$0xff]
      %v1600 = vld [vmem:[#allocation2 + $0x100] sm:$0xff]
      %v1601 = vld [vmem:[#allocation2 + $0x108] sm:$0xff]
      %v1602 = vld [vmem:[#allocation2 + $0x130] sm:$0xff]
      %v1603 = vld [vmem:[#allocation2 + $0x138] sm:$0xff]
      %v1604 = vld [vmem:[#allocation2 + $0x160] sm:$0xff]
      %v1605 = vld [vmem:[#allocation2 + $0x168] sm:$0xff]
      %v1606 = vld [vmem:[#allocation2 + $0x190] sm:$0xff]
      %v1607 = vld [vmem:[#allocation2 + $0x198] sm:$0xff]
      %v1608 = vld [vmem:[#allocation2 + $0x1c0] sm:$0xff]
      %v1609 = vld [vmem:[#allocation2 + $0x1c8] sm:$0xff]
      %v1610 = vlaneseq
      %v1611 = vshrl.u32 %v1610, 7
      %v1612 = vsub.s32 1, %v1611
      %v1613 = vrot.slane %v1330, %v1612
      %v1614 = vlaneseq
      %v1615 = vshrl.u32 %v1614, 7
      %v1616 = vsub.s32 1, %v1615
      %v1617 = vrot.slane %v1331, %v1616
      %v1618 = vmul.f32 %v1590, %v1613
      %v1619 = vmul.f32 %v1591, %v1617
      %v1620 = vmul.f32 %v1592, %v1613
      %v1621 = vmul.f32 %v1593, %v1617
      %v1622 = vmul.f32 %v1594, %v1613
      %v1623 = vmul.f32 %v1595, %v1617
      %v1624 = vmul.f32 %v1596, %v1613
      %v1625 = vmul.f32 %v1597, %v1617
      %v1626 = vmul.f32 %v1598, %v1613
      %v1627 = vmul.f32 %v1599, %v1617
      %v1628 = vmul.f32 %v1600, %v1613
      %v1629 = vmul.f32 %v1601, %v1617
      %v1630 = vmul.f32 %v1602, %v1613
      %v1631 = vmul.f32 %v1603, %v1617
      %v1632 = vmul.f32 %v1604, %v1613
      %v1633 = vmul.f32 %v1605, %v1617
      %v1650 = vrot.slane %v1618, 1
      %v1651 = vrot.slane %v1619, 1
      %v1652 = vrot.slane %v1620, 1
      %v1653 = vrot.slane %v1621, 1
      %v1654 = vrot.slane %v1622, 1
      %v1655 = vrot.slane %v1623, 1
      %v1656 = vrot.slane %v1624, 1
      %v1657 = vrot.slane %v1625, 1
      %v1658 = vrot.slane %v1626, 1
      %v1659 = vrot.slane %v1627, 1
      %v1660 = vrot.slane %v1628, 1
      %v1661 = vrot.slane %v1629, 1
      %v1662 = vrot.slane %v1630, 1
      %v1663 = vrot.slane %v1631, 1
      %v1664 = vrot.slane %v1632, 1
      %v1665 = vrot.slane %v1633, 1
      %v1682 = vadd.f32 %v1558, %v1650
      %v1683 = vadd.f32 %v1559, %v1651
      %v1684 = vadd.f32 %v1560, %v1650
      %v1685 = vadd.f32 %v1561, %v1651
      %v1686 = vadd.f32 %v1562, %v1652
      %v1687 = vadd.f32 %v1563, %v1653
      %v1688 = vadd.f32 %v1564, %v1652
      %v1689 = vadd.f32 %v1565, %v1653
      %v1690 = vadd.f32 %v1566, %v1654
      %v1691 = vadd.f32 %v1567, %v1655
      %v1692 = vadd.f32 %v1568, %v1654
      %v1693 = vadd.f32 %v1569, %v1655
      %v1694 = vadd.f32 %v1570, %v1656
      %v1695 = vadd.f32 %v1571, %v1657
      %v1696 = vadd.f32 %v1572, %v1656
      %v1697 = vadd.f32 %v1573, %v1657
      %v1698 = vadd.f32 %v1574, %v1658
      %v1699 = vadd.f32 %v1575, %v1659
      %v1700 = vadd.f32 %v1576, %v1658
      %v1701 = vadd.f32 %v1577, %v1659
      %v1702 = vadd.f32 %v1578, %v1660
      %v1703 = vadd.f32 %v1579, %v1661
      %v1704 = vadd.f32 %v1580, %v1660
      %v1705 = vadd.f32 %v1581, %v1661
      %v1706 = vadd.f32 %v1582, %v1662
      %v1707 = vadd.f32 %v1583, %v1663
      %v1708 = vadd.f32 %v1584, %v1662
      %v1709 = vadd.f32 %v1585, %v1663
      %v1710 = vadd.f32 %v1586, %v1664
      %v1711 = vadd.f32 %v1587, %v1665
      %v1712 = vadd.f32 %v1588, %v1664
      %v1713 = vadd.f32 %v1589, %v1665
      %v1714 = vlaneseq
      %v1715 = vshrl.u32 %v1714, 7
      %v1716 = vsub.s32 4, %v1715
      %v1717 = vrot.slane %v1330, %v1716
      %v1718 = vlaneseq
      %v1719 = vshrl.u32 %v1718, 7
      %v1720 = vsub.s32 4, %v1719
      %v1721 = vrot.slane %v1331, %v1720
      %v1722 = vmul.f32 %v1592, %v1717
      %v1723 = vmul.f32 %v1593, %v1721
      %v1724 = vmul.f32 %v1594, %v1717
      %v1725 = vmul.f32 %v1595, %v1721
      %v1726 = vmul.f32 %v1596, %v1717
      %v1727 = vmul.f32 %v1597, %v1721
      %v1728 = vmul.f32 %v1598, %v1717
      %v1729 = vmul.f32 %v1599, %v1721
      %v1730 = vmul.f32 %v1600, %v1717
      %v1731 = vmul.f32 %v1601, %v1721
      %v1732 = vmul.f32 %v1602, %v1717
      %v1733 = vmul.f32 %v1603, %v1721
      %v1734 = vmul.f32 %v1604, %v1717
      %v1735 = vmul.f32 %v1605, %v1721
      %v1736 = vmul.f32 %v1606, %v1717
      %v1737 = vmul.f32 %v1607, %v1721
      %v1754 = vrot.slane %v1722, 1
      %v1755 = vrot.slane %v1723, 1
      %v1756 = vrot.slane %v1724, 1
      %v1757 = vrot.slane %v1725, 1
      %v1758 = vrot.slane %v1726, 1
      %v1759 = vrot.slane %v1727, 1
      %v1760 = vrot.slane %v1728, 1
      %v1761 = vrot.slane %v1729, 1
      %v1762 = vrot.slane %v1730, 1
      %v1763 = vrot.slane %v1731, 1
      %v1764 = vrot.slane %v1732, 1
      %v1765 = vrot.slane %v1733, 1
      %v1766 = vrot.slane %v1734, 1
      %v1767 = vrot.slane %v1735, 1
      %v1768 = vrot.slane %v1736, 1
      %v1769 = vrot.slane %v1737, 1
      %v1786 = vadd.f32 %v1682, %v1754
      %v1787 = vadd.f32 %v1683, %v1755
      %v1788 = vadd.f32 %v1684, %v1754
      %v1789 = vadd.f32 %v1685, %v1755
      %v1790 = vadd.f32 %v1686, %v1756
      %v1791 = vadd.f32 %v1687, %v1757
      %v1792 = vadd.f32 %v1688, %v1756
      %v1793 = vadd.f32 %v1689, %v1757
      %v1794 = vadd.f32 %v1690, %v1758
      %v1795 = vadd.f32 %v1691, %v1759
      %v1796 = vadd.f32 %v1692, %v1758
      %v1797 = vadd.f32 %v1693, %v1759
      %v1798 = vadd.f32 %v1694, %v1760
      %v1799 = vadd.f32 %v1695, %v1761
      %v1800 = vadd.f32 %v1696, %v1760
      %v1801 = vadd.f32 %v1697, %v1761
      %v1802 = vadd.f32 %v1698, %v1762
      %v1803 = vadd.f32 %v1699, %v1763
      %v1804 = vadd.f32 %v1700, %v1762
      %v1805 = vadd.f32 %v1701, %v1763
      %v1806 = vadd.f32 %v1702, %v1764
      %v1807 = vadd.f32 %v1703, %v1765
      %v1808 = vadd.f32 %v1704, %v1764
      %v1809 = vadd.f32 %v1705, %v1765
      %v1810 = vadd.f32 %v1706, %v1766
      %v1811 = vadd.f32 %v1707, %v1767
      %v1812 = vadd.f32 %v1708, %v1766
      %v1813 = vadd.f32 %v1709, %v1767
      %v1814 = vadd.f32 %v1710, %v1768
      %v1815 = vadd.f32 %v1711, %v1769
      %v1816 = vadd.f32 %v1712, %v1768
      %v1817 = vadd.f32 %v1713, %v1769
      %v1818 = vlaneseq
      %v1819 = vshrl.u32 %v1818, 7
      %v1820 = vsub.s32 7, %v1819
      %v1821 = vrot.slane %v1330, %v1820
      %v1822 = vlaneseq
      %v1823 = vshrl.u32 %v1822, 7
      %v1824 = vsub.s32 7, %v1823
      %v1825 = vrot.slane %v1331, %v1824
      %v1826 = vmul.f32 %v1594, %v1821
      %v1827 = vmul.f32 %v1595, %v1825
      %v1828 = vmul.f32 %v1596, %v1821
      %v1829 = vmul.f32 %v1597, %v1825
      %v1830 = vmul.f32 %v1598, %v1821
      %v1831 = vmul.f32 %v1599, %v1825
      %v1832 = vmul.f32 %v1600, %v1821
      %v1833 = vmul.f32 %v1601, %v1825
      %v1834 = vmul.f32 %v1602, %v1821
      %v1835 = vmul.f32 %v1603, %v1825
      %v1836 = vmul.f32 %v1604, %v1821
      %v1837 = vmul.f32 %v1605, %v1825
      %v1838 = vmul.f32 %v1606, %v1821
      %v1839 = vmul.f32 %v1607, %v1825
      %v1840 = vmul.f32 %v1608, %v1821
      %v1841 = vmul.f32 %v1609, %v1825
      %v1858 = vrot.slane %v1826, 1
      %v1859 = vrot.slane %v1827, 1
      %v1860 = vrot.slane %v1828, 1
      %v1861 = vrot.slane %v1829, 1
      %v1862 = vrot.slane %v1830, 1
      %v1863 = vrot.slane %v1831, 1
      %v1864 = vrot.slane %v1832, 1
      %v1865 = vrot.slane %v1833, 1
      %v1866 = vrot.slane %v1834, 1
      %v1867 = vrot.slane %v1835, 1
      %v1868 = vrot.slane %v1836, 1
      %v1869 = vrot.slane %v1837, 1
      %v1870 = vrot.slane %v1838, 1
      %v1871 = vrot.slane %v1839, 1
      %v1872 = vrot.slane %v1840, 1
      %v1873 = vrot.slane %v1841, 1
      %v1890 = vadd.f32 %v1786, %v1858
      %v1891 = vadd.f32 %v1787, %v1859
      %v1892 = vadd.f32 %v1788, %v1858
      %v1893 = vadd.f32 %v1789, %v1859
      %v1894 = vadd.f32 %v1790, %v1860
      %v1895 = vadd.f32 %v1791, %v1861
      %v1896 = vadd.f32 %v1792, %v1860
      %v1897 = vadd.f32 %v1793, %v1861
      %v1898 = vadd.f32 %v1794, %v1862
      %v1899 = vadd.f32 %v1795, %v1863
      %v1900 = vadd.f32 %v1796, %v1862
      %v1901 = vadd.f32 %v1797, %v1863
      %v1902 = vadd.f32 %v1798, %v1864
      %v1903 = vadd.f32 %v1799, %v1865
      %v1904 = vadd.f32 %v1800, %v1864
      %v1905 = vadd.f32 %v1801, %v1865
      %v1906 = vadd.f32 %v1802, %v1866
      %v1907 = vadd.f32 %v1803, %v1867
      %v1908 = vadd.f32 %v1804, %v1866
      %v1909 = vadd.f32 %v1805, %v1867
      %v1910 = vadd.f32 %v1806, %v1868
      %v1911 = vadd.f32 %v1807, %v1869
      %v1912 = vadd.f32 %v1808, %v1868
      %v1913 = vadd.f32 %v1809, %v1869
      %v1914 = vadd.f32 %v1810, %v1870
      %v1915 = vadd.f32 %v1811, %v1871
      %v1916 = vadd.f32 %v1812, %v1870
      %v1917 = vadd.f32 %v1813, %v1871
      %v1918 = vadd.f32 %v1814, %v1872
      %v1919 = vadd.f32 %v1815, %v1873
      %v1920 = vadd.f32 %v1816, %v1872
      %v1921 = vadd.f32 %v1817, %v1873
      %v1922 = vld [vmem:[#allocation2 + $0x10] sm:$0xfe]
      %v1923 = vld [vmem:[#allocation2 + $0x18] sm:$0xfe]
      %v1924 = vld [vmem:[#allocation2 + $0x20] sm:$0x1]
      %v1925 = vld [vmem:[#allocation2 + $0x28] sm:$0x1]
      %v1926 = vld [vmem:[#allocation2 + $0x40] sm:$0xfe]
      %v1927 = vld [vmem:[#allocation2 + $0x48] sm:$0xfe]
      %v1928 = vld [vmem:[#allocation2 + $0x50] sm:$0x1]
      %v1929 = vld [vmem:[#allocation2 + $0x58] sm:$0x1]
      %v1930 = vld [vmem:[#allocation2 + $0x70] sm:$0xfe]
      %v1931 = vld [vmem:[#allocation2 + $0x78] sm:$0xfe]
      %v1932 = vld [vmem:[#allocation2 + $0x80] sm:$0x1]
      %v1933 = vld [vmem:[#allocation2 + $0x88] sm:$0x1]
      %v1934 = vld [vmem:[#allocation2 + $0xa0] sm:$0xfe]
      %v1935 = vld [vmem:[#allocation2 + $0xa8] sm:$0xfe]
      %v1936 = vld [vmem:[#allocation2 + $0xb0] sm:$0x1]
      %v1937 = vld [vmem:[#allocation2 + $0xb8] sm:$0x1]
      %v1938 = vld [vmem:[#allocation2 + $0xd0] sm:$0xfe]
      %v1939 = vld [vmem:[#allocation2 + $0xd8] sm:$0xfe]
      %v1940 = vld [vmem:[#allocation2 + $0xe0] sm:$0x1]
      %v1941 = vld [vmem:[#allocation2 + $0xe8] sm:$0x1]
      %v1942 = vld [vmem:[#allocation2 + $0x100] sm:$0xfe]
      %v1943 = vld [vmem:[#allocation2 + $0x108] sm:$0xfe]
      %v1944 = vld [vmem:[#allocation2 + $0x110] sm:$0x1]
      %v1945 = vld [vmem:[#allocation2 + $0x118] sm:$0x1]
      %v1946 = vld [vmem:[#allocation2 + $0x130] sm:$0xfe]
      %v1947 = vld [vmem:[#allocation2 + $0x138] sm:$0xfe]
      %v1948 = vld [vmem:[#allocation2 + $0x140] sm:$0x1]
      %v1949 = vld [vmem:[#allocation2 + $0x148] sm:$0x1]
      %v1950 = vld [vmem:[#allocation2 + $0x160] sm:$0xfe]
      %v1951 = vld [vmem:[#allocation2 + $0x168] sm:$0xfe]
      %v1952 = vld [vmem:[#allocation2 + $0x170] sm:$0x1]
      %v1953 = vld [vmem:[#allocation2 + $0x178] sm:$0x1]
      %v1954 = vld [vmem:[#allocation2 + $0x190] sm:$0xfe]
      %v1955 = vld [vmem:[#allocation2 + $0x198] sm:$0xfe]
      %v1956 = vld [vmem:[#allocation2 + $0x1a0] sm:$0x1]
      %v1957 = vld [vmem:[#allocation2 + $0x1a8] sm:$0x1]
      %v1958 = vld [vmem:[#allocation2 + $0x1c0] sm:$0xfe]
      %v1959 = vld [vmem:[#allocation2 + $0x1c8] sm:$0xfe]
      %v1960 = vld [vmem:[#allocation2 + $0x1d0] sm:$0x1]
      %v1961 = vld [vmem:[#allocation2 + $0x1d8] sm:$0x1]
      %v1962 = vlaneseq
      %v1963 = vshrl.u32 %v1962, 7
      %v1964 = vsub.s32 2, %v1963
      %v1965 = vrot.slane %v1330, %v1964
      %v1966 = vlaneseq
      %v1967 = vshrl.u32 %v1966, 7
      %v1968 = vsub.s32 2, %v1967
      %v1969 = vrot.slane %v1331, %v1968
      %v1970 = vmul.f32 %v1922, %v1965
      %v1971 = vmul.f32 %v1923, %v1969
      %v1972 = vmul.f32 %v1924, %v1965
      %v1973 = vmul.f32 %v1925, %v1969
      %v1974 = vmul.f32 %v1926, %v1965
      %v1975 = vmul.f32 %v1927, %v1969
      %v1976 = vmul.f32 %v1928, %v1965
      %v1977 = vmul.f32 %v1929, %v1969
      %v1978 = vmul.f32 %v1930, %v1965
      %v1979 = vmul.f32 %v1931, %v1969
      %v1980 = vmul.f32 %v1932, %v1965
      %v1981 = vmul.f32 %v1933, %v1969
      %v1982 = vmul.f32 %v1934, %v1965
      %v1983 = vmul.f32 %v1935, %v1969
      %v1984 = vmul.f32 %v1936, %v1965
      %v1985 = vmul.f32 %v1937, %v1969
      %v1986 = vmul.f32 %v1938, %v1965
      %v1987 = vmul.f32 %v1939, %v1969
      %v1988 = vmul.f32 %v1940, %v1965
      %v1989 = vmul.f32 %v1941, %v1969
      %v1990 = vmul.f32 %v1942, %v1965
      %v1991 = vmul.f32 %v1943, %v1969
      %v1992 = vmul.f32 %v1944, %v1965
      %v1993 = vmul.f32 %v1945, %v1969
      %v1994 = vmul.f32 %v1946, %v1965
      %v1995 = vmul.f32 %v1947, %v1969
      %v1996 = vmul.f32 %v1948, %v1965
      %v1997 = vmul.f32 %v1949, %v1969
      %v1998 = vmul.f32 %v1950, %v1965
      %v1999 = vmul.f32 %v1951, %v1969
      %v2000 = vmul.f32 %v1952, %v1965
      %v2001 = vmul.f32 %v1953, %v1969
      %vm2034 = vcmask 1045504
      %v2035 = vrot.slane %v1970, 2
      %v2036 = vrot.slane %v1971, 2
      %v2037 = vrot.slane %v1972, 2
      %v2038 = vsel %vm2034, %v2035, %v2037
      %v2039 = vrot.slane %v1973, 2
      %v2040 = vsel %vm2034, %v2036, %v2039
      %v2041 = vrot.slane %v1974, 2
      %v2042 = vrot.slane %v1975, 2
      %v2043 = vrot.slane %v1976, 2
      %v2044 = vsel %vm2034, %v2041, %v2043
      %v2045 = vrot.slane %v1977, 2
      %v2046 = vsel %vm2034, %v2042, %v2045
      %v2047 = vrot.slane %v1978, 2
      %v2048 = vrot.slane %v1979, 2
      %v2049 = vrot.slane %v1980, 2
      %v2050 = vsel %vm2034, %v2047, %v2049
      %v2051 = vrot.slane %v1981, 2
      %v2052 = vsel %vm2034, %v2048, %v2051
      %v2053 = vrot.slane %v1982, 2
      %v2054 = vrot.slane %v1983, 2
      %v2055 = vrot.slane %v1984, 2
      %v2056 = vsel %vm2034, %v2053, %v2055
      %v2057 = vrot.slane %v1985, 2
      %v2058 = vsel %vm2034, %v2054, %v2057
      %v2059 = vrot.slane %v1986, 2
      %v2060 = vrot.slane %v1987, 2
      %v2061 = vrot.slane %v1988, 2
      %v2062 = vsel %vm2034, %v2059, %v2061
      %v2063 = vrot.slane %v1989, 2
      %v2064 = vsel %vm2034, %v2060, %v2063
      %v2065 = vrot.slane %v1990, 2
      %v2066 = vrot.slane %v1991, 2
      %v2067 = vrot.slane %v1992, 2
      %v2068 = vsel %vm2034, %v2065, %v2067
      %v2069 = vrot.slane %v1993, 2
      %v2070 = vsel %vm2034, %v2066, %v2069
      %v2071 = vrot.slane %v1994, 2
      %v2072 = vrot.slane %v1995, 2
      %v2073 = vrot.slane %v1996, 2
      %v2074 = vsel %vm2034, %v2071, %v2073
      %v2075 = vrot.slane %v1997, 2
      %v2076 = vsel %vm2034, %v2072, %v2075
      %v2077 = vrot.slane %v1998, 2
      %v2078 = vrot.slane %v1999, 2
      %v2079 = vrot.slane %v2000, 2
      %v2080 = vsel %vm2034, %v2077, %v2079
      %v2081 = vrot.slane %v2001, 2
      %v2082 = vsel %vm2034, %v2078, %v2081
      %v2115 = vadd.f32 %v1890, %v2035
      %v2116 = vadd.f32 %v1891, %v2036
      %v2117 = vadd.f32 %v1892, %v2038
      %v2118 = vadd.f32 %v1893, %v2040
      %v2119 = vadd.f32 %v1894, %v2041
      %v2120 = vadd.f32 %v1895, %v2042
      %v2121 = vadd.f32 %v1896, %v2044
      %v2122 = vadd.f32 %v1897, %v2046
      %v2123 = vadd.f32 %v1898, %v2047
      %v2124 = vadd.f32 %v1899, %v2048
      %v2125 = vadd.f32 %v1900, %v2050
      %v2126 = vadd.f32 %v1901, %v2052
      %v2127 = vadd.f32 %v1902, %v2053
      %v2128 = vadd.f32 %v1903, %v2054
      %v2129 = vadd.f32 %v1904, %v2056
      %v2130 = vadd.f32 %v1905, %v2058
      %v2131 = vadd.f32 %v1906, %v2059
      %v2132 = vadd.f32 %v1907, %v2060
      %v2133 = vadd.f32 %v1908, %v2062
      %v2134 = vadd.f32 %v1909, %v2064
      %v2135 = vadd.f32 %v1910, %v2065
      %v2136 = vadd.f32 %v1911, %v2066
      %v2137 = vadd.f32 %v1912, %v2068
      %v2138 = vadd.f32 %v1913, %v2070
      %v2139 = vadd.f32 %v1914, %v2071
      %v2140 = vadd.f32 %v1915, %v2072
      %v2141 = vadd.f32 %v1916, %v2074
      %v2142 = vadd.f32 %v1917, %v2076
      %v2143 = vadd.f32 %v1918, %v2077
      %v2144 = vadd.f32 %v1919, %v2078
      %v2145 = vadd.f32 %v1920, %v2080
      %v2146 = vadd.f32 %v1921, %v2082
      %v2147 = vlaneseq
      %v2148 = vshrl.u32 %v2147, 7
      %v2149 = vsub.s32 5, %v2148
      %v2150 = vrot.slane %v1330, %v2149
      %v2151 = vlaneseq
      %v2152 = vshrl.u32 %v2151, 7
      %v2153 = vsub.s32 5, %v2152
      %v2154 = vrot.slane %v1331, %v2153
      %v2155 = vmul.f32 %v1926, %v2150
      %v2156 = vmul.f32 %v1927, %v2154
      %v2157 = vmul.f32 %v1928, %v2150
      %v2158 = vmul.f32 %v1929, %v2154
      %v2159 = vmul.f32 %v1930, %v2150
      %v2160 = vmul.f32 %v1931, %v2154
      %v2161 = vmul.f32 %v1932, %v2150
      %v2162 = vmul.f32 %v1933, %v2154
      %v2163 = vmul.f32 %v1934, %v2150
      %v2164 = vmul.f32 %v1935, %v2154
      %v2165 = vmul.f32 %v1936, %v2150
      %v2166 = vmul.f32 %v1937, %v2154
      %v2167 = vmul.f32 %v1938, %v2150
      %v2168 = vmul.f32 %v1939, %v2154
      %v2169 = vmul.f32 %v1940, %v2150
      %v2170 = vmul.f32 %v1941, %v2154
      %v2171 = vmul.f32 %v1942, %v2150
      %v2172 = vmul.f32 %v1943, %v2154
      %v2173 = vmul.f32 %v1944, %v2150
      %v2174 = vmul.f32 %v1945, %v2154
      %v2175 = vmul.f32 %v1946, %v2150
      %v2176 = vmul.f32 %v1947, %v2154
      %v2177 = vmul.f32 %v1948, %v2150
      %v2178 = vmul.f32 %v1949, %v2154
      %v2179 = vmul.f32 %v1950, %v2150
      %v2180 = vmul.f32 %v1951, %v2154
      %v2181 = vmul.f32 %v1952, %v2150
      %v2182 = vmul.f32 %v1953, %v2154
      %v2183 = vmul.f32 %v1954, %v2150
      %v2184 = vmul.f32 %v1955, %v2154
      %v2185 = vmul.f32 %v1956, %v2150
      %v2186 = vmul.f32 %v1957, %v2154
      %v2219 = vrot.slane %v2155, 2
      %v2220 = vrot.slane %v2156, 2
      %v2221 = vrot.slane %v2157, 2
      %v2222 = vsel %vm2034, %v2219, %v2221
      %v2223 = vrot.slane %v2158, 2
      %v2224 = vsel %vm2034, %v2220, %v2223
      %v2225 = vrot.slane %v2159, 2
      %v2226 = vrot.slane %v2160, 2
      %v2227 = vrot.slane %v2161, 2
      %v2228 = vsel %vm2034, %v2225, %v2227
      %v2229 = vrot.slane %v2162, 2
      %v2230 = vsel %vm2034, %v2226, %v2229
      %v2231 = vrot.slane %v2163, 2
      %v2232 = vrot.slane %v2164, 2
      %v2233 = vrot.slane %v2165, 2
      %v2234 = vsel %vm2034, %v2231, %v2233
      %v2235 = vrot.slane %v2166, 2
      %v2236 = vsel %vm2034, %v2232, %v2235
      %v2237 = vrot.slane %v2167, 2
      %v2238 = vrot.slane %v2168, 2
      %v2239 = vrot.slane %v2169, 2
      %v2240 = vsel %vm2034, %v2237, %v2239
      %v2241 = vrot.slane %v2170, 2
      %v2242 = vsel %vm2034, %v2238, %v2241
      %v2243 = vrot.slane %v2171, 2
      %v2244 = vrot.slane %v2172, 2
      %v2245 = vrot.slane %v2173, 2
      %v2246 = vsel %vm2034, %v2243, %v2245
      %v2247 = vrot.slane %v2174, 2
      %v2248 = vsel %vm2034, %v2244, %v2247
      %v2249 = vrot.slane %v2175, 2
      %v2250 = vrot.slane %v2176, 2
      %v2251 = vrot.slane %v2177, 2
      %v2252 = vsel %vm2034, %v2249, %v2251
      %v2253 = vrot.slane %v2178, 2
      %v2254 = vsel %vm2034, %v2250, %v2253
      %v2255 = vrot.slane %v2179, 2
      %v2256 = vrot.slane %v2180, 2
      %v2257 = vrot.slane %v2181, 2
      %v2258 = vsel %vm2034, %v2255, %v2257
      %v2259 = vrot.slane %v2182, 2
      %v2260 = vsel %vm2034, %v2256, %v2259
      %v2261 = vrot.slane %v2183, 2
      %v2262 = vrot.slane %v2184, 2
      %v2263 = vrot.slane %v2185, 2
      %v2264 = vsel %vm2034, %v2261, %v2263
      %v2265 = vrot.slane %v2186, 2
      %v2266 = vsel %vm2034, %v2262, %v2265
      %v2299 = vadd.f32 %v2115, %v2219
      %v2300 = vadd.f32 %v2116, %v2220
      %v2301 = vadd.f32 %v2117, %v2222
      %v2302 = vadd.f32 %v2118, %v2224
      %v2303 = vadd.f32 %v2119, %v2225
      %v2304 = vadd.f32 %v2120, %v2226
      %v2305 = vadd.f32 %v2121, %v2228
      %v2306 = vadd.f32 %v2122, %v2230
      %v2307 = vadd.f32 %v2123, %v2231
      %v2308 = vadd.f32 %v2124, %v2232
      %v2309 = vadd.f32 %v2125, %v2234
      %v2310 = vadd.f32 %v2126, %v2236
      %v2311 = vadd.f32 %v2127, %v2237
      %v2312 = vadd.f32 %v2128, %v2238
      %v2313 = vadd.f32 %v2129, %v2240
      %v2314 = vadd.f32 %v2130, %v2242
      %v2315 = vadd.f32 %v2131, %v2243
      %v2316 = vadd.f32 %v2132, %v2244
      %v2317 = vadd.f32 %v2133, %v2246
      %v2318 = vadd.f32 %v2134, %v2248
      %v2319 = vadd.f32 %v2135, %v2249
      %v2320 = vadd.f32 %v2136, %v2250
      %v2321 = vadd.f32 %v2137, %v2252
      %v2322 = vadd.f32 %v2138, %v2254
      %v2323 = vadd.f32 %v2139, %v2255
      %v2324 = vadd.f32 %v2140, %v2256
      %v2325 = vadd.f32 %v2141, %v2258
      %v2326 = vadd.f32 %v2142, %v2260
      %v2327 = vadd.f32 %v2143, %v2261
      %v2328 = vadd.f32 %v2144, %v2262
      %v2329 = vadd.f32 %v2145, %v2264
      %v2330 = vadd.f32 %v2146, %v2266
      %v2331 = vlaneseq
      %v2332 = vshrl.u32 %v2331, 7
      %v2333 = vsub.s32 0, %v2332
      %v2334 = vrot.slane %v1332, %v2333
      %v2335 = vlaneseq
      %v2336 = vshrl.u32 %v2335, 7
      %v2337 = vsub.s32 0, %v2336
      %v2338 = vrot.slane %v1333, %v2337
      %v2339 = vmul.f32 %v1930, %v2334
      %v2340 = vmul.f32 %v1931, %v2338
      %v2341 = vmul.f32 %v1932, %v2334
      %v2342 = vmul.f32 %v1933, %v2338
      %v2343 = vmul.f32 %v1934, %v2334
      %v2344 = vmul.f32 %v1935, %v2338
      %v2345 = vmul.f32 %v1936, %v2334
      %v2346 = vmul.f32 %v1937, %v2338
      %v2347 = vmul.f32 %v1938, %v2334
      %v2348 = vmul.f32 %v1939, %v2338
      %v2349 = vmul.f32 %v1940, %v2334
      %v2350 = vmul.f32 %v1941, %v2338
      %v2351 = vmul.f32 %v1942, %v2334
      %v2352 = vmul.f32 %v1943, %v2338
      %v2353 = vmul.f32 %v1944, %v2334
      %v2354 = vmul.f32 %v1945, %v2338
      %v2355 = vmul.f32 %v1946, %v2334
      %v2356 = vmul.f32 %v1947, %v2338
      %v2357 = vmul.f32 %v1948, %v2334
      %v2358 = vmul.f32 %v1949, %v2338
      %v2359 = vmul.f32 %v1950, %v2334
      %v2360 = vmul.f32 %v1951, %v2338
      %v2361 = vmul.f32 %v1952, %v2334
      %v2362 = vmul.f32 %v1953, %v2338
      %v2363 = vmul.f32 %v1954, %v2334
      %v2364 = vmul.f32 %v1955, %v2338
      %v2365 = vmul.f32 %v1956, %v2334
      %v2366 = vmul.f32 %v1957, %v2338
      %v2367 = vmul.f32 %v1958, %v2334
      %v2368 = vmul.f32 %v1959, %v2338
      %v2369 = vmul.f32 %v1960, %v2334
      %v2370 = vmul.f32 %v1961, %v2338
      %v2403 = vrot.slane %v2339, 2
      %v2404 = vrot.slane %v2340, 2
      %v2405 = vrot.slane %v2341, 2
      %v2406 = vsel %vm2034, %v2403, %v2405
      %v2407 = vrot.slane %v2342, 2
      %v2408 = vsel %vm2034, %v2404, %v2407
      %v2409 = vrot.slane %v2343, 2
      %v2410 = vrot.slane %v2344, 2
      %v2411 = vrot.slane %v2345, 2
      %v2412 = vsel %vm2034, %v2409, %v2411
      %v2413 = vrot.slane %v2346, 2
      %v2414 = vsel %vm2034, %v2410, %v2413
      %v2415 = vrot.slane %v2347, 2
      %v2416 = vrot.slane %v2348, 2
      %v2417 = vrot.slane %v2349, 2
      %v2418 = vsel %vm2034, %v2415, %v2417
      %v2419 = vrot.slane %v2350, 2
      %v2420 = vsel %vm2034, %v2416, %v2419
      %v2421 = vrot.slane %v2351, 2
      %v2422 = vrot.slane %v2352, 2
      %v2423 = vrot.slane %v2353, 2
      %v2424 = vsel %vm2034, %v2421, %v2423
      %v2425 = vrot.slane %v2354, 2
      %v2426 = vsel %vm2034, %v2422, %v2425
      %v2427 = vrot.slane %v2355, 2
      %v2428 = vrot.slane %v2356, 2
      %v2429 = vrot.slane %v2357, 2
      %v2430 = vsel %vm2034, %v2427, %v2429
      %v2431 = vrot.slane %v2358, 2
      %v2432 = vsel %vm2034, %v2428, %v2431
      %v2433 = vrot.slane %v2359, 2
      %v2434 = vrot.slane %v2360, 2
      %v2435 = vrot.slane %v2361, 2
      %v2436 = vsel %vm2034, %v2433, %v2435
      %v2437 = vrot.slane %v2362, 2
      %v2438 = vsel %vm2034, %v2434, %v2437
      %v2439 = vrot.slane %v2363, 2
      %v2440 = vrot.slane %v2364, 2
      %v2441 = vrot.slane %v2365, 2
      %v2442 = vsel %vm2034, %v2439, %v2441
      %v2443 = vrot.slane %v2366, 2
      %v2444 = vsel %vm2034, %v2440, %v2443
      %v2445 = vrot.slane %v2367, 2
      %v2446 = vrot.slane %v2368, 2
      %v2447 = vrot.slane %v2369, 2
      %v2448 = vsel %vm2034, %v2445, %v2447
      %v2449 = vrot.slane %v2370, 2
      %v2450 = vsel %vm2034, %v2446, %v2449
      %v2483 = vadd.f32 %v2299, %v2403
      %v2484 = vadd.f32 %v2300, %v2404
      %v2485 = vadd.f32 %v2301, %v2406
      %v2486 = vadd.f32 %v2302, %v2408
      %v2487 = vadd.f32 %v2303, %v2409
      %v2488 = vadd.f32 %v2304, %v2410
      %v2489 = vadd.f32 %v2305, %v2412
      %v2490 = vadd.f32 %v2306, %v2414
      %v2491 = vadd.f32 %v2307, %v2415
      %v2492 = vadd.f32 %v2308, %v2416
      %v2493 = vadd.f32 %v2309, %v2418
      %v2494 = vadd.f32 %v2310, %v2420
      %v2495 = vadd.f32 %v2311, %v2421
      %v2496 = vadd.f32 %v2312, %v2422
      %v2497 = vadd.f32 %v2313, %v2424
      %v2498 = vadd.f32 %v2314, %v2426
      %v2499 = vadd.f32 %v2315, %v2427
      %v2500 = vadd.f32 %v2316, %v2428
      %v2501 = vadd.f32 %v2317, %v2430
      %v2502 = vadd.f32 %v2318, %v2432
      %v2503 = vadd.f32 %v2319, %v2433
      %v2504 = vadd.f32 %v2320, %v2434
      %v2505 = vadd.f32 %v2321, %v2436
      %v2506 = vadd.f32 %v2322, %v2438
      %v2507 = vadd.f32 %v2323, %v2439
      %v2508 = vadd.f32 %v2324, %v2440
      %v2509 = vadd.f32 %v2325, %v2442
      %v2510 = vadd.f32 %v2326, %v2444
      %v2511 = vadd.f32 %v2327, %v2445
      %v2512 = vadd.f32 %v2328, %v2446
      %v2513 = vadd.f32 %v2329, %v2448
      %v2514 = vadd.f32 %v2330, %v2450
      %v2515 = vld [vmem:[%s8] sm:$0x3]
      %v2517 = vlaneseq
      %v2518 = vshrl.u32 %v2517, 7
      %v2519 = vsub.s32 0, %v2518
      %v2520 = vrot.slane %v2515, %v2519
      %v2521 = vlaneseq
      %v2522 = vshrl.u32 %v2521, 7
      %v2523 = vsub.s32 1, %v2522
      %v2524 = vrot.slane %v2515, %v2523
      %v2527 = vmul.f32 %v2483, %v2520
      %v2528 = vmul.f32 %v2484, %v2524
      %v2529 = vmul.f32 %v2485, %v2520
      %v2530 = vmul.f32 %v2486, %v2524
      %v2531 = vmul.f32 %v2487, %v2520
      %v2532 = vmul.f32 %v2488, %v2524
      %v2533 = vmul.f32 %v2489, %v2520
      %v2534 = vmul.f32 %v2490, %v2524
      %v2535 = vmul.f32 %v2491, %v2520
      %v2536 = vmul.f32 %v2492, %v2524
      %v2537 = vmul.f32 %v2493, %v2520
      %v2538 = vmul.f32 %v2494, %v2524
      %v2539 = vmul.f32 %v2495, %v2520
      %v2540 = vmul.f32 %v2496, %v2524
      %v2541 = vmul.f32 %v2497, %v2520
      %v2542 = vmul.f32 %v2498, %v2524
      %v2543 = vmul.f32 %v2499, %v2520
      %v2544 = vmul.f32 %v2500, %v2524
      %v2545 = vmul.f32 %v2501, %v2520
      %v2546 = vmul.f32 %v2502, %v2524
      %v2547 = vmul.f32 %v2503, %v2520
      %v2548 = vmul.f32 %v2504, %v2524
      %v2549 = vmul.f32 %v2505, %v2520
      %v2550 = vmul.f32 %v2506, %v2524
      %v2551 = vmul.f32 %v2507, %v2520
      %v2552 = vmul.f32 %v2508, %v2524
      %v2553 = vmul.f32 %v2509, %v2520
      %v2554 = vmul.f32 %v2510, %v2524
      %v2555 = vmul.f32 %v2511, %v2520
      %v2556 = vmul.f32 %v2512, %v2524
      %v2557 = vmul.f32 %v2513, %v2520
      %v2558 = vmul.f32 %v2514, %v2524
      %v2559 = vld [vmem:[%s9] sm:$0x3]
      %v2561 = vlaneseq
      %v2562 = vshrl.u32 %v2561, 7
      %v2563 = vsub.s32 0, %v2562
      %v2564 = vrot.slane %v2559, %v2563
      %v2565 = vlaneseq
      %v2566 = vshrl.u32 %v2565, 7
      %v2567 = vsub.s32 1, %v2566
      %v2568 = vrot.slane %v2559, %v2567
      %v2571 = vadd.f32 %v2527, %v2564
      %v2572 = vadd.f32 %v2528, %v2568
      %v2573 = vadd.f32 %v2529, %v2564
      %v2574 = vadd.f32 %v2530, %v2568
      %v2575 = vadd.f32 %v2531, %v2564
      %v2576 = vadd.f32 %v2532, %v2568
      %v2577 = vadd.f32 %v2533, %v2564
      %v2578 = vadd.f32 %v2534, %v2568
      %v2579 = vadd.f32 %v2535, %v2564
      %v2580 = vadd.f32 %v2536, %v2568
      %v2581 = vadd.f32 %v2537, %v2564
      %v2582 = vadd.f32 %v2538, %v2568
      %v2583 = vadd.f32 %v2539, %v2564
      %v2584 = vadd.f32 %v2540, %v2568
      %v2585 = vadd.f32 %v2541, %v2564
      %v2586 = vadd.f32 %v2542, %v2568
      %v2587 = vadd.f32 %v2543, %v2564
      %v2588 = vadd.f32 %v2544, %v2568
      %v2589 = vadd.f32 %v2545, %v2564
      %v2590 = vadd.f32 %v2546, %v2568
      %v2591 = vadd.f32 %v2547, %v2564
      %v2592 = vadd.f32 %v2548, %v2568
      %v2593 = vadd.f32 %v2549, %v2564
      %v2594 = vadd.f32 %v2550, %v2568
      %v2595 = vadd.f32 %v2551, %v2564
      %v2596 = vadd.f32 %v2552, %v2568
      %v2597 = vadd.f32 %v2553, %v2564
      %v2598 = vadd.f32 %v2554, %v2568
      %v2599 = vadd.f32 %v2555, %v2564
      %v2600 = vadd.f32 %v2556, %v2568
      %v2601 = vadd.f32 %v2557, %v2564
      %v2602 = vadd.f32 %v2558, %v2568
      %v2603 = vxor.u32 %v2571, 2147483648
      %v2604 = vxor.u32 %v2572, 2147483648
      %v2605 = vxor.u32 %v2573, 2147483648
      %v2606 = vxor.u32 %v2574, 2147483648
      %v2607 = vxor.u32 %v2575, 2147483648
      %v2608 = vxor.u32 %v2576, 2147483648
      %v2609 = vxor.u32 %v2577, 2147483648
      %v2610 = vxor.u32 %v2578, 2147483648
      %v2611 = vxor.u32 %v2579, 2147483648
      %v2612 = vxor.u32 %v2580, 2147483648
      %v2613 = vxor.u32 %v2581, 2147483648
      %v2614 = vxor.u32 %v2582, 2147483648
      %v2615 = vxor.u32 %v2583, 2147483648
      %v2616 = vxor.u32 %v2584, 2147483648
      %v2617 = vxor.u32 %v2585, 2147483648
      %v2618 = vxor.u32 %v2586, 2147483648
      %v2619 = vxor.u32 %v2587, 2147483648
      %v2620 = vxor.u32 %v2588, 2147483648
      %v2621 = vxor.u32 %v2589, 2147483648
      %v2622 = vxor.u32 %v2590, 2147483648
      %v2623 = vxor.u32 %v2591, 2147483648
      %v2624 = vxor.u32 %v2592, 2147483648
      %v2625 = vxor.u32 %v2593, 2147483648
      %v2626 = vxor.u32 %v2594, 2147483648
      %v2627 = vxor.u32 %v2595, 2147483648
      %v2628 = vxor.u32 %v2596, 2147483648
      %v2629 = vxor.u32 %v2597, 2147483648
      %v2630 = vxor.u32 %v2598, 2147483648
      %v2631 = vxor.u32 %v2599, 2147483648
      %v2632 = vxor.u32 %v2600, 2147483648
      %v2633 = vxor.u32 %v2601, 2147483648
      %v2634 = vxor.u32 %v2602, 2147483648
      %v2635 = vmul.f32 %v2603, 1.442695
      %v2636 = vpow.pop %v2635
      %v2637 = vmul.f32 %v2604, 1.442695
      %v2638 = vpow.pop %v2637
      %v2639 = vmul.f32 %v2605, 1.442695
      %v2640 = vpow.pop %v2639
      %v2641 = vmul.f32 %v2606, 1.442695
      %v2642 = vpow.pop %v2641
      %v2643 = vmul.f32 %v2607, 1.442695
      %v2644 = vpow.pop %v2643
      %v2645 = vmul.f32 %v2608, 1.442695
      %v2646 = vpow.pop %v2645
      %v2647 = vmul.f32 %v2609, 1.442695
      %v2648 = vpow.pop %v2647
      %v2649 = vmul.f32 %v2610, 1.442695
      %v2650 = vpow.pop %v2649
      %v2651 = vmul.f32 %v2611, 1.442695
      %v2652 = vpow.pop %v2651
      %v2653 = vmul.f32 %v2612, 1.442695
      %v2654 = vpow.pop %v2653
      %v2655 = vmul.f32 %v2613, 1.442695
      %v2656 = vpow.pop %v2655
      %v2657 = vmul.f32 %v2614, 1.442695
      %v2658 = vpow.pop %v2657
      %v2659 = vmul.f32 %v2615, 1.442695
      %v2660 = vpow.pop %v2659
      %v2661 = vmul.f32 %v2616, 1.442695
      %v2662 = vpow.pop %v2661
      %v2663 = vmul.f32 %v2617, 1.442695
      %v2664 = vpow.pop %v2663
      %v2665 = vmul.f32 %v2618, 1.442695
      %v2666 = vpow.pop %v2665
      %v2667 = vmul.f32 %v2619, 1.442695
      %v2668 = vpow.pop %v2667
      %v2669 = vmul.f32 %v2620, 1.442695
      %v2670 = vpow.pop %v2669
      %v2671 = vmul.f32 %v2621, 1.442695
      %v2672 = vpow.pop %v2671
      %v2673 = vmul.f32 %v2622, 1.442695
      %v2674 = vpow.pop %v2673
      %v2675 = vmul.f32 %v2623, 1.442695
      %v2676 = vpow.pop %v2675
      %v2677 = vmul.f32 %v2624, 1.442695
      %v2678 = vpow.pop %v2677
      %v2679 = vmul.f32 %v2625, 1.442695
      %v2680 = vpow.pop %v2679
      %v2681 = vmul.f32 %v2626, 1.442695
      %v2682 = vpow.pop %v2681
      %v2683 = vmul.f32 %v2627, 1.442695
      %v2684 = vpow.pop %v2683
      %v2685 = vmul.f32 %v2628, 1.442695
      %v2686 = vpow.pop %v2685
      %v2687 = vmul.f32 %v2629, 1.442695
      %v2688 = vpow.pop %v2687
      %v2689 = vmul.f32 %v2630, 1.442695
      %v2690 = vpow.pop %v2689
      %v2691 = vmul.f32 %v2631, 1.442695
      %v2692 = vpow.pop %v2691
      %v2693 = vmul.f32 %v2632, 1.442695
      %v2694 = vpow.pop %v2693
      %v2695 = vmul.f32 %v2633, 1.442695
      %v2696 = vpow.pop %v2695
      %v2697 = vmul.f32 %v2634, 1.442695
      %v2698 = vpow.pop %v2697
      %v2699 = vadd.f32 %v2636, 1.0
      %v2700 = vadd.f32 %v2638, 1.0
      %v2701 = vadd.f32 %v2640, 1.0
      %v2702 = vadd.f32 %v2642, 1.0
      %v2703 = vadd.f32 %v2644, 1.0
      %v2704 = vadd.f32 %v2646, 1.0
      %v2705 = vadd.f32 %v2648, 1.0
      %v2706 = vadd.f32 %v2650, 1.0
      %v2707 = vadd.f32 %v2652, 1.0
      %v2708 = vadd.f32 %v2654, 1.0
      %v2709 = vadd.f32 %v2656, 1.0
      %v2710 = vadd.f32 %v2658, 1.0
      %v2711 = vadd.f32 %v2660, 1.0
      %v2712 = vadd.f32 %v2662, 1.0
      %v2713 = vadd.f32 %v2664, 1.0
      %v2714 = vadd.f32 %v2666, 1.0
      %v2715 = vadd.f32 %v2668, 1.0
      %v2716 = vadd.f32 %v2670, 1.0
      %v2717 = vadd.f32 %v2672, 1.0
      %v2718 = vadd.f32 %v2674, 1.0
      %v2719 = vadd.f32 %v2676, 1.0
      %v2720 = vadd.f32 %v2678, 1.0
      %v2721 = vadd.f32 %v2680, 1.0
      %v2722 = vadd.f32 %v2682, 1.0
      %v2723 = vadd.f32 %v2684, 1.0
      %v2724 = vadd.f32 %v2686, 1.0
      %v2725 = vadd.f32 %v2688, 1.0
      %v2726 = vadd.f32 %v2690, 1.0
      %v2727 = vadd.f32 %v2692, 1.0
      %v2728 = vadd.f32 %v2694, 1.0
      %v2729 = vadd.f32 %v2696, 1.0
      %v2730 = vadd.f32 %v2698, 1.0
      %v2731 = vrcp.pop %v2699
      %v2732 = vmul.f32 1.0, %v2731
      %v2733 = vrcp.pop %v2700
      %v2734 = vmul.f32 1.0, %v2733
      %v2735 = vrcp.pop %v2701
      %v2736 = vmul.f32 1.0, %v2735
      %v2737 = vrcp.pop %v2702
      %v2738 = vmul.f32 1.0, %v2737
      %v2739 = vrcp.pop %v2703
      %v2740 = vmul.f32 1.0, %v2739
      %v2741 = vrcp.pop %v2704
      %v2742 = vmul.f32 1.0, %v2741
      %v2743 = vrcp.pop %v2705
      %v2744 = vmul.f32 1.0, %v2743
      %v2745 = vrcp.pop %v2706
      %v2746 = vmul.f32 1.0, %v2745
      %v2747 = vrcp.pop %v2707
      %v2748 = vmul.f32 1.0, %v2747
      %v2749 = vrcp.pop %v2708
      %v2750 = vmul.f32 1.0, %v2749
      %v2751 = vrcp.pop %v2709
      %v2752 = vmul.f32 1.0, %v2751
      %v2753 = vrcp.pop %v2710
      %v2754 = vmul.f32 1.0, %v2753
      %v2755 = vrcp.pop %v2711
      %v2756 = vmul.f32 1.0, %v2755
      %v2757 = vrcp.pop %v2712
      %v2758 = vmul.f32 1.0, %v2757
      %v2759 = vrcp.pop %v2713
      %v2760 = vmul.f32 1.0, %v2759
      %v2761 = vrcp.pop %v2714
      %v2762 = vmul.f32 1.0, %v2761
      %v2763 = vrcp.pop %v2715
      %v2764 = vmul.f32 1.0, %v2763
      %v2765 = vrcp.pop %v2716
      %v2766 = vmul.f32 1.0, %v2765
      %v2767 = vrcp.pop %v2717
      %v2768 = vmul.f32 1.0, %v2767
      %v2769 = vrcp.pop %v2718
      %v2770 = vmul.f32 1.0, %v2769
      %v2771 = vrcp.pop %v2719
      %v2772 = vmul.f32 1.0, %v2771
      %v2773 = vrcp.pop %v2720
      %v2774 = vmul.f32 1.0, %v2773
      %v2775 = vrcp.pop %v2721
      %v2776 = vmul.f32 1.0, %v2775
      %v2777 = vrcp.pop %v2722
      %v2778 = vmul.f32 1.0, %v2777
      %v2779 = vrcp.pop %v2723
      %v2780 = vmul.f32 1.0, %v2779
      %v2781 = vrcp.pop %v2724
      %v2782 = vmul.f32 1.0, %v2781
      %v2783 = vrcp.pop %v2725
      %v2784 = vmul.f32 1.0, %v2783
      %v2785 = vrcp.pop %v2726
      %v2786 = vmul.f32 1.0, %v2785
      %v2787 = vrcp.pop %v2727
      %v2788 = vmul.f32 1.0, %v2787
      %v2789 = vrcp.pop %v2728
      %v2790 = vmul.f32 1.0, %v2789
      %v2791 = vrcp.pop %v2729
      %v2792 = vmul.f32 1.0, %v2791
      %v2793 = vrcp.pop %v2730
      %v2794 = vmul.f32 1.0, %v2793
      %v2795 = vmul.f32 %v2571, %v2732
      %v2796 = vmul.f32 %v2572, %v2734
      %v2797 = vmul.f32 %v2573, %v2736
      %v2798 = vmul.f32 %v2574, %v2738
      %v2799 = vmul.f32 %v2575, %v2740
      %v2800 = vmul.f32 %v2576, %v2742
      %v2801 = vmul.f32 %v2577, %v2744
      %v2802 = vmul.f32 %v2578, %v2746
      %v2803 = vmul.f32 %v2579, %v2748
      %v2804 = vmul.f32 %v2580, %v2750
      %v2805 = vmul.f32 %v2581, %v2752
      %v2806 = vmul.f32 %v2582, %v2754
      %v2807 = vmul.f32 %v2583, %v2756
      %v2808 = vmul.f32 %v2584, %v2758
      %v2809 = vmul.f32 %v2585, %v2760
      %v2810 = vmul.f32 %v2586, %v2762
      %v2811 = vmul.f32 %v2587, %v2764
      %v2812 = vmul.f32 %v2588, %v2766
      %v2813 = vmul.f32 %v2589, %v2768
      %v2814 = vmul.f32 %v2590, %v2770
      %v2815 = vmul.f32 %v2591, %v2772
      %v2816 = vmul.f32 %v2592, %v2774
      %v2817 = vmul.f32 %v2593, %v2776
      %v2818 = vmul.f32 %v2594, %v2778
      %v2819 = vmul.f32 %v2595, %v2780
      %v2820 = vmul.f32 %v2596, %v2782
      %v2821 = vmul.f32 %v2597, %v2784
      %v2822 = vmul.f32 %v2598, %v2786
      %v2823 = vmul.f32 %v2599, %v2788
      %v2824 = vmul.f32 %v2600, %v2790
      %v2825 = vmul.f32 %v2601, %v2792
      %v2826 = vmul.f32 %v2602, %v2794
      %vm2859 = vcmask 1040384
      %v2860 = vrot.slane %v2795, 7
      %v2861 = vrot.slane %v2797, 7
      %v2862 = vsel %vm2859, %v2860, %v2861
      %v2863 = vrot.slane %v2796, 7
      %v2864 = vrot.slane %v2798, 7
      %v2865 = vsel %vm2859, %v2863, %v2864
      %v2866 = vrot.slane %v2799, 7
      %v2867 = vrot.slane %v2801, 7
      %v2868 = vsel %vm2859, %v2866, %v2867
      %v2869 = vrot.slane %v2800, 7
      %v2870 = vrot.slane %v2802, 7
      %v2871 = vsel %vm2859, %v2869, %v2870
      %v2872 = vrot.slane %v2803, 7
      %v2873 = vrot.slane %v2805, 7
      %v2874 = vsel %vm2859, %v2872, %v2873
      %v2875 = vrot.slane %v2804, 7
      %v2876 = vrot.slane %v2806, 7
      %v2877 = vsel %vm2859, %v2875, %v2876
      %v2878 = vrot.slane %v2807, 7
      %v2879 = vrot.slane %v2809, 7
      %v2880 = vsel %vm2859, %v2878, %v2879
      %v2881 = vrot.slane %v2808, 7
      %v2882 = vrot.slane %v2810, 7
      %v2883 = vsel %vm2859, %v2881, %v2882
      %v2884 = vrot.slane %v2811, 7
      %v2885 = vrot.slane %v2813, 7
      %v2886 = vsel %vm2859, %v2884, %v2885
      %v2887 = vrot.slane %v2812, 7
      %v2888 = vrot.slane %v2814, 7
      %v2889 = vsel %vm2859, %v2887, %v2888
      %v2890 = vrot.slane %v2815, 7
      %v2891 = vrot.slane %v2817, 7
      %v2892 = vsel %vm2859, %v2890, %v2891
      %v2893 = vrot.slane %v2816, 7
      %v2894 = vrot.slane %v2818, 7
      %v2895 = vsel %vm2859, %v2893, %v2894
      %v2896 = vrot.slane %v2819, 7
      %v2897 = vrot.slane %v2821, 7
      %v2898 = vsel %vm2859, %v2896, %v2897
      %v2899 = vrot.slane %v2820, 7
      %v2900 = vrot.slane %v2822, 7
      %v2901 = vsel %vm2859, %v2899, %v2900
      %v2902 = vrot.slane %v2823, 7
      %v2903 = vrot.slane %v2825, 7
      %v2904 = vsel %vm2859, %v2902, %v2903
      %v2905 = vrot.slane %v2824, 7
      %v2906 = vrot.slane %v2826, 7
      %v2907 = vsel %vm2859, %v2905, %v2906
      %v2924 = vadd.f32 %v2862, %v2868
      %v2925 = vadd.f32 %v2924, %v2874
      %v2926 = vadd.f32 %v2925, %v2880
      %v2927 = vadd.f32 %v2926, %v2886
      %v2928 = vadd.f32 %v2927, %v2892
      %v2929 = vadd.f32 %v2928, %v2898
      %v2930 = vadd.f32 %v2929, %v2904
      %v2931 = vrot.slane %v2930, 4
      %v2932 = vadd.f32 %v2930, %v2931
      %v2933 = vrot.slane %v2932, 2
      %v2934 = vadd.f32 %v2932, %v2933
      %v2935 = vrot.slane %v2934, 1
      %v2936 = vadd.f32 %v2934, %v2935
      %v2937 = vadd.f32 %v2865, %v2871
      %v2938 = vadd.f32 %v2937, %v2877
      %v2939 = vadd.f32 %v2938, %v2883
      %v2940 = vadd.f32 %v2939, %v2889
      %v2941 = vadd.f32 %v2940, %v2895
      %v2942 = vadd.f32 %v2941, %v2901
      %v2943 = vadd.f32 %v2942, %v2907
      %v2944 = vrot.slane %v2943, 4
      %v2945 = vadd.f32 %v2943, %v2944
      %v2946 = vrot.slane %v2945, 2
      %v2947 = vadd.f32 %v2945, %v2946
      %v2948 = vrot.slane %v2947, 1
      %v2949 = vadd.f32 %v2947, %v2948
      %v2950 = vmul.f32 %v2936, 0.015625
      %v2951 = vmul.f32 %v2949, 0.015625
      %v2952 = vpack.c.bf16 %v2950, %v2950
      %v2953 = vpack.c.bf16 %v2951, %v2951
      %v2954 = vld [vmem:[%s10] sm:$0xf]
      %v2955 = vld [vmem:[%s10 + $0x4] sm:$0xf]
      %v2956 = vld [vmem:[%s10 + $0x8] sm:$0xf]
      %v2957 = vld [vmem:[%s10 + $0xc] sm:$0xf]
      %v2958 = vld [vmem:[%s10 + $0x10] sm:$0xf]
      %v2959 = vld [vmem:[%s10 + $0x14] sm:$0xf]
      %v2960 = vld [vmem:[%s10 + $0x18] sm:$0xf]
      %v2961 = vld [vmem:[%s10 + $0x1c] sm:$0xf]
      %v2962 = vld [vmem:[%s10 + $0x20] sm:$0xf]
      %v2963 = vld [vmem:[%s10 + $0x24] sm:$0xf]
      %v2964 = vld [vmem:[%s10 + $0x28] sm:$0xf]
      %v2965 = vld [vmem:[%s10 + $0x2c] sm:$0xf]
      %v2966 = vld [vmem:[%s10 + $0x30] sm:$0xf]
      %v2967 = vld [vmem:[%s10 + $0x34] sm:$0xf]
      %v2968 = vld [vmem:[%s10 + $0x38] sm:$0xf]
      %v2969 = vld [vmem:[%s10 + $0x3c] sm:$0xf]
      %v2970 = vld [vmem:[%s10 + $0x40] sm:$0xf]
      %v2971 = vld [vmem:[%s10 + $0x44] sm:$0xf]
      %v2972 = vld [vmem:[%s10 + $0x48] sm:$0xf]
      %v2973 = vld [vmem:[%s10 + $0x4c] sm:$0xf]
      %v2974 = vld [vmem:[%s10 + $0x50] sm:$0xf]
      %v2975 = vld [vmem:[%s10 + $0x54] sm:$0xf]
      %v2976 = vld [vmem:[%s10 + $0x58] sm:$0xf]
      %v2977 = vld [vmem:[%s10 + $0x5c] sm:$0xf]
      %v2978 = vld [vmem:[%s10 + $0x60] sm:$0xf]
      %v2979 = vld [vmem:[%s10 + $0x64] sm:$0xf]
      %v2980 = vld [vmem:[%s10 + $0x68] sm:$0xf]
      %v2981 = vld [vmem:[%s10 + $0x6c] sm:$0xf]
      %v2982 = vld [vmem:[%s10 + $0x70] sm:$0xf]
      %v2983 = vld [vmem:[%s10 + $0x74] sm:$0xf]
      %v2984 = vld [vmem:[%s10 + $0x78] sm:$0xf]
      %v2985 = vld [vmem:[%s10 + $0x7c] sm:$0xf]
      %v2986 = vld [vmem:[%s11] sm:$0x1]
      %v3019 = vunpack.c.l.b16 %v2954
      %v3020 = vunpack.c.l.b16 %v2955
      %v3021 = vunpack.c.l.b16 %v2956
      %v3022 = vunpack.c.l.b16 %v2957
      %v3023 = vunpack.c.l.b16 %v2958
      %v3024 = vunpack.c.l.b16 %v2959
      %v3025 = vunpack.c.l.b16 %v2960
      %v3026 = vunpack.c.l.b16 %v2961
      %v3027 = vunpack.c.l.b16 %v2962
      %v3028 = vunpack.c.l.b16 %v2963
      %v3029 = vunpack.c.l.b16 %v2964
      %v3030 = vunpack.c.l.b16 %v2965
      %v3031 = vunpack.c.l.b16 %v2966
      %v3032 = vunpack.c.l.b16 %v2967
      %v3033 = vunpack.c.l.b16 %v2968
      %v3034 = vunpack.c.l.b16 %v2969
      %v3035 = vunpack.c.l.b16 %v2970
      %v3036 = vunpack.c.l.b16 %v2971
      %v3037 = vunpack.c.l.b16 %v2972
      %v3038 = vunpack.c.l.b16 %v2973
      %v3039 = vunpack.c.l.b16 %v2974
      %v3040 = vunpack.c.l.b16 %v2975
      %v3041 = vunpack.c.l.b16 %v2976
      %v3042 = vunpack.c.l.b16 %v2977
      %v3043 = vunpack.c.l.b16 %v2978
      %v3044 = vunpack.c.l.b16 %v2979
      %v3045 = vunpack.c.l.b16 %v2980
      %v3046 = vunpack.c.l.b16 %v2981
      %v3047 = vunpack.c.l.b16 %v2982
      %v3048 = vunpack.c.l.b16 %v2983
      %v3049 = vunpack.c.l.b16 %v2984
      %v3050 = vunpack.c.l.b16 %v2985
      %v3051 = vpack.c.b16 %v3020, %v3019
      %v3052 = vpack.c.b16 %v3022, %v3021
      %v3053 = vpack.c.b16 %v3024, %v3023
      %v3054 = vpack.c.b16 %v3026, %v3025
      %v3055 = vpack.c.b16 %v3028, %v3027
      %v3056 = vpack.c.b16 %v3030, %v3029
      %v3057 = vpack.c.b16 %v3032, %v3031
      %v3058 = vpack.c.b16 %v3034, %v3033
      %v3059 = vpack.c.b16 %v3036, %v3035
      %v3060 = vpack.c.b16 %v3038, %v3037
      %v3061 = vpack.c.b16 %v3040, %v3039
      %v3062 = vpack.c.b16 %v3042, %v3041
      %v3063 = vpack.c.b16 %v3044, %v3043
      %v3064 = vpack.c.b16 %v3046, %v3045
      %v3065 = vpack.c.b16 %v3048, %v3047
      %v3066 = vpack.c.b16 %v3050, %v3049
      %3083 = vmatprep.subr.bf16.mxu0 0
      %3084 = vmatpush1.bf16.msra.mxu0 %v3051
      %3085 = vmatprep.subr.bf16.mxu0 0
      %3086 = vmatpush1.bf16.msra.mxu0 %v3052
      %3087 = vmatprep.subr.bf16.mxu0 0
      %3088 = vmatpush1.bf16.msra.mxu0 %v3053
      %3089 = vmatprep.subr.bf16.mxu0 0
      %3090 = vmatpush1.bf16.msra.mxu0 %v3054
      %3091 = vmatprep.subr.bf16.mxu0 0
      %3092 = vmatpush1.bf16.msra.mxu0 %v3055
      %3093 = vmatprep.subr.bf16.mxu0 0
      %3094 = vmatpush1.bf16.msra.mxu0 %v3056
      %3095 = vmatprep.subr.bf16.mxu0 0
      %3096 = vmatpush1.bf16.msra.mxu0 %v3057
      %3097 = vmatprep.subr.bf16.mxu0 0
      %3098 = vmatpush1.bf16.msra.mxu0 %v3058
      %3099 = vmatprep.subr.bf16.mxu0 0
      %3100 = vmatpush1.bf16.msra.mxu0 %v3059
      %3101 = vmatprep.subr.bf16.mxu0 0
      %3102 = vmatpush1.bf16.msra.mxu0 %v3060
      %3103 = vmatprep.subr.bf16.mxu0 0
      %3104 = vmatpush1.bf16.msra.mxu0 %v3061
      %3105 = vmatprep.subr.bf16.mxu0 0
      %3106 = vmatpush1.bf16.msra.mxu0 %v3062
      %3107 = vmatprep.subr.bf16.mxu0 0
      %3108 = vmatpush1.bf16.msra.mxu0 %v3063
      %3109 = vmatprep.subr.bf16.mxu0 0
      %3110 = vmatpush1.bf16.msra.mxu0 %v3064
      %3111 = vmatprep.subr.bf16.mxu0 0
      %3112 = vmatpush1.bf16.msra.mxu0 %v3065
      %3113 = vmatprep.subr.bf16.mxu0 0
      %3114 = vmatpush1.bf16.msra.mxu0 %v3066
      %3115 = vmatprep.mubr.bf16.mxu0 %v2953
      %3116 = vmatmul.mubr.bf16.gmra.mrb[0].mxu0 %v2952
      %v3117 = vpop.f32.mrb[0].mxu0
      %v3118 = vadd.f32 %v2986, %v3117
      %v3119 = vpop.f32.mrb[0].mxu0
      %v3120 = vpop.f32.mrb[0].mxu0
      %v3121 = vpop.f32.mrb[0].mxu0
      %3122 = vdwg.mxu0
      %v3123 = vxor.u32 %v3118, 2147483648
      %v3124 = vmul.f32 %v3123, 1.442695
      %v3125 = vpow.pop %v3124
      %v3126 = vadd.f32 %v3125, 1.0
      %v3127 = vrcp.pop %v3126
      %v3128 = vmul.f32 1.0, %v3127
      %v3129 = vmul.f32 %v3118, %v3128
      %v3130 = vpack.c.bf16 %v3129, %v3129
      %v3131 = vld [vmem:[%s12] sm:$0xff]
      %v3132 = vld [vmem:[%s12 + $0x8] sm:$0xff]
      %v3133 = vld [vmem:[%s12 + $0x10] sm:$0xff]
      %v3134 = vld [vmem:[%s12 + $0x18] sm:$0xff]
      %v3135 = vld [vmem:[%s12 + $0x20] sm:$0xff]
      %v3136 = vld [vmem:[%s12 + $0x28] sm:$0xff]
      %v3137 = vld [vmem:[%s12 + $0x30] sm:$0xff]
      %v3138 = vld [vmem:[%s12 + $0x38] sm:$0xff]
      %v3139 = vld [vmem:[%s12 + $0x40] sm:$0xff]
      %v3140 = vld [vmem:[%s12 + $0x48] sm:$0xff]
      %v3141 = vld [vmem:[%s12 + $0x50] sm:$0xff]
      %v3142 = vld [vmem:[%s12 + $0x58] sm:$0xff]
      %v3143 = vld [vmem:[%s12 + $0x60] sm:$0xff]
      %v3144 = vld [vmem:[%s12 + $0x68] sm:$0xff]
      %v3145 = vld [vmem:[%s12 + $0x70] sm:$0xff]
      %v3146 = vld [vmem:[%s12 + $0x78] sm:$0xff]
      %v3147 = vld [vmem:[%s13] sm:$0x3]
      %v3164 = vunpack.c.l.b16 %v3131
      %v3165 = vunpack.c.h.b16 %v3131
      %v3166 = vunpack.c.l.b16 %v3132
      %v3167 = vunpack.c.h.b16 %v3132
      %v3168 = vunpack.c.l.b16 %v3133
      %v3169 = vunpack.c.h.b16 %v3133
      %v3170 = vunpack.c.l.b16 %v3134
      %v3171 = vunpack.c.h.b16 %v3134
      %v3172 = vunpack.c.l.b16 %v3135
      %v3173 = vunpack.c.h.b16 %v3135
      %v3174 = vunpack.c.l.b16 %v3136
      %v3175 = vunpack.c.h.b16 %v3136
      %v3176 = vunpack.c.l.b16 %v3137
      %v3177 = vunpack.c.h.b16 %v3137
      %v3178 = vunpack.c.l.b16 %v3138
      %v3179 = vunpack.c.h.b16 %v3138
      %v3180 = vunpack.c.l.b16 %v3139
      %v3181 = vunpack.c.h.b16 %v3139
      %v3182 = vunpack.c.l.b16 %v3140
      %v3183 = vunpack.c.h.b16 %v3140
      %v3184 = vunpack.c.l.b16 %v3141
      %v3185 = vunpack.c.h.b16 %v3141
      %v3186 = vunpack.c.l.b16 %v3142
      %v3187 = vunpack.c.h.b16 %v3142
      %v3188 = vunpack.c.l.b16 %v3143
      %v3189 = vunpack.c.h.b16 %v3143
      %v3190 = vunpack.c.l.b16 %v3144
      %v3191 = vunpack.c.h.b16 %v3144
      %v3192 = vunpack.c.l.b16 %v3145
      %v3193 = vunpack.c.h.b16 %v3145
      %v3194 = vunpack.c.l.b16 %v3146
      %v3195 = vunpack.c.h.b16 %v3146
      %v3196 = vpack.c.b16 %v3166, %v3164
      %v3197 = vpack.c.b16 %v3167, %v3165
      %v3198 = vpack.c.b16 %v3170, %v3168
      %v3199 = vpack.c.b16 %v3171, %v3169
      %v3200 = vpack.c.b16 %v3174, %v3172
      %v3201 = vpack.c.b16 %v3175, %v3173
      %v3202 = vpack.c.b16 %v3178, %v3176
      %v3203 = vpack.c.b16 %v3179, %v3177
      %v3204 = vpack.c.b16 %v3182, %v3180
      %v3205 = vpack.c.b16 %v3183, %v3181
      %v3206 = vpack.c.b16 %v3186, %v3184
      %v3207 = vpack.c.b16 %v3187, %v3185
      %v3208 = vpack.c.b16 %v3190, %v3188
      %v3209 = vpack.c.b16 %v3191, %v3189
      %v3210 = vpack.c.b16 %v3194, %v3192
      %v3211 = vpack.c.b16 %v3195, %v3193
      %v3229 = vlaneseq
      %v3230 = vshrl.u32 %v3229, 7
      %v3231 = vsub.s32 0, %v3230
      %v3232 = vrot.slane %v3147, %v3231
      %v3233 = vlaneseq
      %v3234 = vshrl.u32 %v3233, 7
      %v3235 = vsub.s32 1, %v3234
      %v3236 = vrot.slane %v3147, %v3235
      %3239 = vmatprep.subr.bf16.mxu0 %v3197
      %3240 = vmatpush1.bf16.msra.mxu0 %v3196
      %3241 = vmatprep.subr.bf16.mxu0 %v3199
      %3242 = vmatpush1.bf16.msra.mxu0 %v3198
      %3243 = vmatprep.subr.bf16.mxu0 %v3201
      %3244 = vmatpush1.bf16.msra.mxu0 %v3200
      %3245 = vmatprep.subr.bf16.mxu0 %v3203
      %3246 = vmatpush1.bf16.msra.mxu0 %v3202
      %3247 = vmatprep.subr.bf16.mxu0 %v3205
      %3248 = vmatpush1.bf16.msra.mxu0 %v3204
      %3249 = vmatprep.subr.bf16.mxu0 %v3207
      %3250 = vmatpush1.bf16.msra.mxu0 %v3206
      %3251 = vmatprep.subr.bf16.mxu0 %v3209
      %3252 = vmatpush1.bf16.msra.mxu0 %v3208
      %3253 = vmatprep.subr.bf16.mxu0 %v3211
      %3254 = vmatpush1.bf16.msra.mxu0 %v3210
      %3255 = vmatprep.subr.bf16.mxu0 0
      %3256 = vmatpush1.bf16.msra.mxu0 0
      %3257 = vmatprep.subr.bf16.mxu0 0
      %3258 = vmatpush1.bf16.msra.mxu0 0
      %3259 = vmatprep.subr.bf16.mxu0 0
      %3260 = vmatpush1.bf16.msra.mxu0 0
      %3261 = vmatprep.subr.bf16.mxu0 0
      %3262 = vmatpush1.bf16.msra.mxu0 0
      %3263 = vmatprep.subr.bf16.mxu0 0
      %3264 = vmatpush1.bf16.msra.mxu0 0
      %3265 = vmatprep.subr.bf16.mxu0 0
      %3266 = vmatpush1.bf16.msra.mxu0 0
      %3267 = vmatprep.subr.bf16.mxu0 0
      %3268 = vmatpush1.bf16.msra.mxu0 0
      %3269 = vmatprep.subr.bf16.mxu0 0
      %3270 = vmatpush1.bf16.msra.mxu0 0
      %3271 = vmatprep.mubr.bf16.mxu0 0
      %3272 = vmatmul.mubr.bf16.gmra.mrb[0].mxu0 %v3130
      %v3273 = vpop.f32.mrb[0].mxu0
      %v3274 = vadd.f32 %v3232, %v3273
      %v3275 = vpop.f32.mrb[0].mxu0
      %v3276 = vadd.f32 %v3236, %v3275
      %v3277 = vpop.f32.mrb[0].mxu0
      %v3278 = vpop.f32.mrb[0].mxu0
      %3279 = vdwg.mxu0
      %v3280 = vxor.u32 %v3274, 2147483648
      %v3281 = vxor.u32 %v3276, 2147483648
      %v3282 = vmul.f32 %v3280, 1.442695
      %v3283 = vpow.pop %v3282
      %v3284 = vmul.f32 %v3281, 1.442695
      %v3285 = vpow.pop %v3284
      %v3286 = vadd.f32 %v3283, 1.0
      %v3287 = vadd.f32 %v3285, 1.0
      %v3288 = vrcp.pop %v3286
      %v3289 = vmul.f32 1.0, %v3288
      %v3290 = vrcp.pop %v3287
      %v3291 = vmul.f32 1.0, %v3290
      %v3292 = vlaneseq
      %v3293 = vshrl.u32 %v3292, 7
      %v3294 = vsub.s32 0, %v3293
      %v3295 = vrot.slane %v3289, %v3294
      %v3296 = vlaneseq
      %v3297 = vshrl.u32 %v3296, 7
      %v3298 = vsub.s32 0, %v3297
      %v3299 = vrot.slane %v3291, %v3298
      %v3300 = vmul.f32 %v2795, %v3295
      %v3301 = vmul.f32 %v2796, %v3299
      %v3302 = vmul.f32 %v2797, %v3295
      %v3303 = vmul.f32 %v2798, %v3299
      %v3304 = vmul.f32 %v2799, %v3295
      %v3305 = vmul.f32 %v2800, %v3299
      %v3306 = vmul.f32 %v2801, %v3295
      %v3307 = vmul.f32 %v2802, %v3299
      %v3308 = vmul.f32 %v2803, %v3295
      %v3309 = vmul.f32 %v2804, %v3299
      %v3310 = vmul.f32 %v2805, %v3295
      %v3311 = vmul.f32 %v2806, %v3299
      %v3312 = vmul.f32 %v2807, %v3295
      %v3313 = vmul.f32 %v2808, %v3299
      %v3314 = vmul.f32 %v2809, %v3295
      %v3315 = vmul.f32 %v2810, %v3299
      %v3316 = vmul.f32 %v2811, %v3295
      %v3317 = vmul.f32 %v2812, %v3299
      %v3318 = vmul.f32 %v2813, %v3295
      %v3319 = vmul.f32 %v2814, %v3299
      %v3320 = vmul.f32 %v2815, %v3295
      %v3321 = vmul.f32 %v2816, %v3299
      %v3322 = vmul.f32 %v2817, %v3295
      %v3323 = vmul.f32 %v2818, %v3299
      %v3324 = vmul.f32 %v2819, %v3295
      %v3325 = vmul.f32 %v2820, %v3299
      %v3326 = vmul.f32 %v2821, %v3295
      %v3327 = vmul.f32 %v2822, %v3299
      %v3328 = vmul.f32 %v2823, %v3295
      %v3329 = vmul.f32 %v2824, %v3299
      %v3330 = vmul.f32 %v2825, %v3295
      %v3331 = vmul.f32 %v2826, %v3299
      %v3364 = vrot.slane %v3300, 7
      %v3365 = vrot.slane %v3302, 7
      %v3366 = vsel %vm2859, %v3364, %v3365
      %v3367 = vrot.slane %v3301, 7
      %v3368 = vrot.slane %v3303, 7
      %v3369 = vsel %vm2859, %v3367, %v3368
      %v3370 = vrot.slane %v3304, 7
      %v3371 = vrot.slane %v3306, 7
      %v3372 = vsel %vm2859, %v3370, %v3371
      %v3373 = vrot.slane %v3305, 7
      %v3374 = vrot.slane %v3307, 7
      %v3375 = vsel %vm2859, %v3373, %v3374
      %v3376 = vrot.slane %v3308, 7
      %v3377 = vrot.slane %v3310, 7
      %v3378 = vsel %vm2859, %v3376, %v3377
      %v3379 = vrot.slane %v3309, 7
      %v3380 = vrot.slane %v3311, 7
      %v3381 = vsel %vm2859, %v3379, %v3380
      %v3382 = vrot.slane %v3312, 7
      %v3383 = vrot.slane %v3314, 7
      %v3384 = vsel %vm2859, %v3382, %v3383
      %v3385 = vrot.slane %v3313, 7
      %v3386 = vrot.slane %v3315, 7
      %v3387 = vsel %vm2859, %v3385, %v3386
      %v3388 = vrot.slane %v3316, 7
      %v3389 = vrot.slane %v3318, 7
      %v3390 = vsel %vm2859, %v3388, %v3389
      %v3391 = vrot.slane %v3317, 7
      %v3392 = vrot.slane %v3319, 7
      %v3393 = vsel %vm2859, %v3391, %v3392
      %v3394 = vrot.slane %v3320, 7
      %v3395 = vrot.slane %v3322, 7
      %v3396 = vsel %vm2859, %v3394, %v3395
      %v3397 = vrot.slane %v3321, 7
      %v3398 = vrot.slane %v3323, 7
      %v3399 = vsel %vm2859, %v3397, %v3398
      %v3400 = vrot.slane %v3324, 7
      %v3401 = vrot.slane %v3326, 7
      %v3402 = vsel %vm2859, %v3400, %v3401
      %v3403 = vrot.slane %v3325, 7
      %v3404 = vrot.slane %v3327, 7
      %v3405 = vsel %vm2859, %v3403, %v3404
      %v3406 = vrot.slane %v3328, 7
      %v3407 = vrot.slane %v3330, 7
      %v3408 = vsel %vm2859, %v3406, %v3407
      %v3409 = vrot.slane %v3329, 7
      %v3410 = vrot.slane %v3331, 7
      %v3411 = vsel %vm2859, %v3409, %v3410
      %v3428 = vpack.c.bf16 %v3372, %v3366
      %v3429 = vpack.c.bf16 %v3375, %v3369
      %v3430 = vpack.c.bf16 %v3384, %v3378
      %v3431 = vpack.c.bf16 %v3387, %v3381
      %v3432 = vpack.c.bf16 %v3396, %v3390
      %v3433 = vpack.c.bf16 %v3399, %v3393
      %v3434 = vpack.c.bf16 %v3408, %v3402
      %v3435 = vpack.c.bf16 %v3411, %v3405
      %v3436 = vld [vmem:[%s14] sm:$0xf]
      %v3437 = vld [vmem:[%s14 + $0x4] sm:$0xf]
      %v3438 = vld [vmem:[%s14 + $0x8] sm:$0xf]
      %v3439 = vld [vmem:[%s14 + $0xc] sm:$0xf]
      %v3440 = vld [vmem:[%s14 + $0x10] sm:$0xf]
      %v3441 = vld [vmem:[%s14 + $0x14] sm:$0xf]
      %v3442 = vld [vmem:[%s14 + $0x18] sm:$0xf]
      %v3443 = vld [vmem:[%s14 + $0x1c] sm:$0xf]
      %v3444 = vld [vmem:[%s14 + $0x20] sm:$0xf]
      %v3445 = vld [vmem:[%s14 + $0x24] sm:$0xf]
      %v3446 = vld [vmem:[%s14 + $0x28] sm:$0xf]
      %v3447 = vld [vmem:[%s14 + $0x2c] sm:$0xf]
      %v3448 = vld [vmem:[%s14 + $0x30] sm:$0xf]
      %v3449 = vld [vmem:[%s14 + $0x34] sm:$0xf]
      %v3450 = vld [vmem:[%s14 + $0x38] sm:$0xf]
      %v3451 = vld [vmem:[%s14 + $0x3c] sm:$0xf]
      %v3452 = vld [vmem:[%s14 + $0x40] sm:$0xf]
      %v3453 = vld [vmem:[%s14 + $0x44] sm:$0xf]
      %v3454 = vld [vmem:[%s14 + $0x48] sm:$0xf]
      %v3455 = vld [vmem:[%s14 + $0x4c] sm:$0xf]
      %v3456 = vld [vmem:[%s14 + $0x50] sm:$0xf]
      %v3457 = vld [vmem:[%s14 + $0x54] sm:$0xf]
      %v3458 = vld [vmem:[%s14 + $0x58] sm:$0xf]
      %v3459 = vld [vmem:[%s14 + $0x5c] sm:$0xf]
      %v3460 = vld [vmem:[%s14 + $0x60] sm:$0xf]
      %v3461 = vld [vmem:[%s14 + $0x64] sm:$0xf]
      %v3462 = vld [vmem:[%s14 + $0x68] sm:$0xf]
      %v3463 = vld [vmem:[%s14 + $0x6c] sm:$0xf]
      %v3464 = vld [vmem:[%s14 + $0x70] sm:$0xf]
      %v3465 = vld [vmem:[%s14 + $0x74] sm:$0xf]
      %v3466 = vld [vmem:[%s14 + $0x78] sm:$0xf]
      %v3467 = vld [vmem:[%s14 + $0x7c] sm:$0xf]
      %v3500 = vunpack.c.l.b16 %v3436
      %v3501 = vunpack.c.l.b16 %v3437
      %v3502 = vunpack.c.l.b16 %v3438
      %v3503 = vunpack.c.l.b16 %v3439
      %v3504 = vunpack.c.l.b16 %v3440
      %v3505 = vunpack.c.l.b16 %v3441
      %v3506 = vunpack.c.l.b16 %v3442
      %v3507 = vunpack.c.l.b16 %v3443
      %v3508 = vunpack.c.l.b16 %v3444
      %v3509 = vunpack.c.l.b16 %v3445
      %v3510 = vunpack.c.l.b16 %v3446
      %v3511 = vunpack.c.l.b16 %v3447
      %v3512 = vunpack.c.l.b16 %v3448
      %v3513 = vunpack.c.l.b16 %v3449
      %v3514 = vunpack.c.l.b16 %v3450
      %v3515 = vunpack.c.l.b16 %v3451
      %v3516 = vunpack.c.l.b16 %v3452
      %v3517 = vunpack.c.l.b16 %v3453
      %v3518 = vunpack.c.l.b16 %v3454
      %v3519 = vunpack.c.l.b16 %v3455
      %v3520 = vunpack.c.l.b16 %v3456
      %v3521 = vunpack.c.l.b16 %v3457
      %v3522 = vunpack.c.l.b16 %v3458
      %v3523 = vunpack.c.l.b16 %v3459
      %v3524 = vunpack.c.l.b16 %v3460
      %v3525 = vunpack.c.l.b16 %v3461
      %v3526 = vunpack.c.l.b16 %v3462
      %v3527 = vunpack.c.l.b16 %v3463
      %v3528 = vunpack.c.l.b16 %v3464
      %v3529 = vunpack.c.l.b16 %v3465
      %v3530 = vunpack.c.l.b16 %v3466
      %v3531 = vunpack.c.l.b16 %v3467
      %v3532 = vpack.c.b16 %v3501, %v3500
      %v3533 = vpack.c.b16 %v3503, %v3502
      %v3534 = vpack.c.b16 %v3505, %v3504
      %v3535 = vpack.c.b16 %v3507, %v3506
      %v3536 = vpack.c.b16 %v3509, %v3508
      %v3537 = vpack.c.b16 %v3511, %v3510
      %v3538 = vpack.c.b16 %v3513, %v3512
      %v3539 = vpack.c.b16 %v3515, %v3514
      %v3540 = vpack.c.b16 %v3517, %v3516
      %v3541 = vpack.c.b16 %v3519, %v3518
      %v3542 = vpack.c.b16 %v3521, %v3520
      %v3543 = vpack.c.b16 %v3523, %v3522
      %v3544 = vpack.c.b16 %v3525, %v3524
      %v3545 = vpack.c.b16 %v3527, %v3526
      %v3546 = vpack.c.b16 %v3529, %v3528
      %v3547 = vpack.c.b16 %v3531, %v3530
      %3564 = vmatprep.subr.bf16.mxu0 0
      %3565 = vmatpush1.bf16.msra.mxu0 %v3532
      %3566 = vmatprep.subr.bf16.mxu0 0
      %3567 = vmatpush1.bf16.msra.mxu0 %v3533
      %3568 = vmatprep.subr.bf16.mxu0 0
      %3569 = vmatpush1.bf16.msra.mxu0 %v3534
      %3570 = vmatprep.subr.bf16.mxu0 0
      %3571 = vmatpush1.bf16.msra.mxu0 %v3535
      %3572 = vmatprep.subr.bf16.mxu0 0
      %3573 = vmatpush1.bf16.msra.mxu0 %v3536
      %3574 = vmatprep.subr.bf16.mxu0 0
      %3575 = vmatpush1.bf16.msra.mxu0 %v3537
      %3576 = vmatprep.subr.bf16.mxu0 0
      %3577 = vmatpush1.bf16.msra.mxu0 %v3538
      %3578 = vmatprep.subr.bf16.mxu0 0
      %3579 = vmatpush1.bf16.msra.mxu0 %v3539
      %3580 = vmatprep.subr.bf16.mxu0 0
      %3581 = vmatpush1.bf16.msra.mxu0 %v3540
      %3582 = vmatprep.subr.bf16.mxu0 0
      %3583 = vmatpush1.bf16.msra.mxu0 %v3541
      %3584 = vmatprep.subr.bf16.mxu0 0
      %3585 = vmatpush1.bf16.msra.mxu0 %v3542
      %3586 = vmatprep.subr.bf16.mxu0 0
      %3587 = vmatpush1.bf16.msra.mxu0 %v3543
      %3588 = vmatprep.subr.bf16.mxu0 0
      %3589 = vmatpush1.bf16.msra.mxu0 %v3544
      %3590 = vmatprep.subr.bf16.mxu0 0
      %3591 = vmatpush1.bf16.msra.mxu0 %v3545
      %3592 = vmatprep.subr.bf16.mxu0 0
      %3593 = vmatpush1.bf16.msra.mxu0 %v3546
      %3594 = vmatprep.subr.bf16.mxu0 0
      %3595 = vmatpush1.bf16.msra.mxu0 %v3547
      %3596 = vmatprep.mubr.bf16.mxu0 %v3429
      %3597 = vmatmul.mubr.bf16.gmra.mrb[0].mxu0 %v3428
      %v3598 = vpop.f32.mrb[0].mxu0
      %v3599 = vadd.f32 0.0, %v3598
      %v3600 = vpop.f32.mrb[0].mxu0
      %v3601 = vpop.f32.mrb[0].mxu0
      %v3602 = vadd.f32 0.0, %v3601
      %v3603 = vpop.f32.mrb[0].mxu0
      %3604 = vmatprep.mubr.bf16.mxu0 %v3431
      %3605 = vmatmul.mubr.bf16.gmra.mrb[0].mxu0 %v3430
      %v3606 = vpop.f32.mrb[0].mxu0
      %v3607 = vadd.f32 0.0, %v3606
      %v3608 = vpop.f32.mrb[0].mxu0
      %v3609 = vpop.f32.mrb[0].mxu0
      %v3610 = vadd.f32 0.0, %v3609
      %v3611 = vpop.f32.mrb[0].mxu0
      %3612 = vmatprep.mubr.bf16.mxu0 %v3433
      %3613 = vmatmul.mubr.bf16.gmra.mrb[0].mxu0 %v3432
      %v3614 = vpop.f32.mrb[0].mxu0
      %v3615 = vadd.f32 0.0, %v3614
      %v3616 = vpop.f32.mrb[0].mxu0
      %v3617 = vpop.f32.mrb[0].mxu0
      %v3618 = vadd.f32 0.0, %v3617
      %v3619 = vpop.f32.mrb[0].mxu0
      %3620 = vmatprep.mubr.bf16.mxu0 %v3435
      %3621 = vmatmul.mubr.bf16.gmra.mrb[0].mxu0 %v3434
      %v3622 = vpop.f32.mrb[0].mxu0
      %v3623 = vadd.f32 0.0, %v3622
      %v3624 = vpop.f32.mrb[0].mxu0
      %v3625 = vpop.f32.mrb[0].mxu0
      %v3626 = vadd.f32 0.0, %v3625
      %v3627 = vpop.f32.mrb[0].mxu0
      %3628 = vdwg.mxu0
      %v3629 = vld [vmem:[%s15] sm:$0x1]
      %v3631 = vlaneseq
      %v3632 = vshrl.u32 %v3631, 7
      %v3633 = vsub.s32 0, %v3632
      %v3634 = vrot.slane %v3629, %v3633
      %v3636 = vmul.f32 %v3599, %v3634
      %v3637 = vmul.f32 %v3602, %v3634
      %v3638 = vmul.f32 %v3607, %v3634
      %v3639 = vmul.f32 %v3610, %v3634
      %v3640 = vmul.f32 %v3615, %v3634
      %v3641 = vmul.f32 %v3618, %v3634
      %v3642 = vmul.f32 %v3623, %v3634
      %v3643 = vmul.f32 %v3626, %v3634
      %v3644 = vld [vmem:[%s16] sm:$0x1]
      %v3646 = vlaneseq
      %v3647 = vshrl.u32 %v3646, 7
      %v3648 = vsub.s32 0, %v3647
      %v3649 = vrot.slane %v3644, %v3648
      %v3651 = vadd.f32 %v3636, %v3649
      %v3652 = vadd.f32 %v3637, %v3649
      %v3653 = vadd.f32 %v3638, %v3649
      %v3654 = vadd.f32 %v3639, %v3649
      %v3655 = vadd.f32 %v3640, %v3649
      %v3656 = vadd.f32 %v3641, %v3649
      %v3657 = vadd.f32 %v3642, %v3649
      %v3658 = vadd.f32 %v3643, %v3649
      %v3659 = vadd.f32 %v3651, %v904
      %v3660 = vadd.f32 %v3652, %v905
      %v3661 = vadd.f32 %v3653, %v906
      %v3662 = vadd.f32 %v3654, %v907
      %v3663 = vadd.f32 %v3655, %v908
      %v3664 = vadd.f32 %v3656, %v909
      %v3665 = vadd.f32 %v3657, %v910
      %v3666 = vadd.f32 %v3658, %v911
      %v3667 = vpack.c.bf16 %v3660, %v3659
      %v3668 = vpack.c.bf16 %v3662, %v3661
      %v3669 = vpack.c.bf16 %v3664, %v3663
      %v3670 = vpack.c.bf16 %v3666, %v3665
      %v3671 = vld [vmem:[%s17] sm:$0xff]
      %v3672 = vld [vmem:[%s17 + $0x38] sm:$0xff]
      %v3673 = vld [vmem:[%s17 + $0x70] sm:$0xff]
      %v3674 = vld [vmem:[%s17 + $0xa8] sm:$0xff]
      %v3675 = vld [vmem:[%s17 + $0xe0] sm:$0xff]
      %v3676 = vld [vmem:[%s17 + $0x118] sm:$0xff]
      %v3677 = vld [vmem:[%s17 + $0x150] sm:$0xff]
      %v3678 = vld [vmem:[%s17 + $0x188] sm:$0xff]
      %v3679 = vld [vmem:[%s17 + $0x1c0] sm:$0xff]
      %v3680 = vld [vmem:[%s17 + $0x1f8] sm:$0xff]
      %v3681 = vld [vmem:[%s17 + $0x230] sm:$0xff]
      %v3682 = vld [vmem:[%s17 + $0x268] sm:$0xff]
      %v3683 = vld [vmem:[%s17 + $0x2a0] sm:$0xff]
      %v3684 = vld [vmem:[%s17 + $0x2d8] sm:$0xff]
      %v3685 = vld [vmem:[%s17 + $0x310] sm:$0xff]
      %v3686 = vld [vmem:[%s17 + $0x348] sm:$0xff]
      %v3703 = vunpack.c.l.b16 %v3671
      %v3704 = vunpack.c.h.b16 %v3671
      %v3705 = vunpack.c.l.b16 %v3672
      %v3706 = vunpack.c.h.b16 %v3672
      %v3707 = vunpack.c.l.b16 %v3673
      %v3708 = vunpack.c.h.b16 %v3673
      %v3709 = vunpack.c.l.b16 %v3674
      %v3710 = vunpack.c.h.b16 %v3674
      %v3711 = vunpack.c.l.b16 %v3675
      %v3712 = vunpack.c.h.b16 %v3675
      %v3713 = vunpack.c.l.b16 %v3676
      %v3714 = vunpack.c.h.b16 %v3676
      %v3715 = vunpack.c.l.b16 %v3677
      %v3716 = vunpack.c.h.b16 %v3677
      %v3717 = vunpack.c.l.b16 %v3678
      %v3718 = vunpack.c.h.b16 %v3678
      %v3719 = vunpack.c.l.b16 %v3679
      %v3720 = vunpack.c.h.b16 %v3679
      %v3721 = vunpack.c.l.b16 %v3680
      %v3722 = vunpack.c.h.b16 %v3680
      %v3723 = vunpack.c.l.b16 %v3681
      %v3724 = vunpack.c.h.b16 %v3681
      %v3725 = vunpack.c.l.b16 %v3682
      %v3726 = vunpack.c.h.b16 %v3682
      %v3727 = vunpack.c.l.b16 %v3683
      %v3728 = vunpack.c.h.b16 %v3683
      %v3729 = vunpack.c.l.b16 %v3684
      %v3730 = vunpack.c.h.b16 %v3684
      %v3731 = vunpack.c.l.b16 %v3685
      %v3732 = vunpack.c.h.b16 %v3685
      %v3733 = vunpack.c.l.b16 %v3686
      %v3734 = vunpack.c.h.b16 %v3686
      %v3735 = vpack.c.b16 %v3705, %v3703
      %v3736 = vpack.c.b16 %v3706, %v3704
      %v3737 = vpack.c.b16 %v3709, %v3707
      %v3738 = vpack.c.b16 %v3710, %v3708
      %v3739 = vpack.c.b16 %v3713, %v3711
      %v3740 = vpack.c.b16 %v3714, %v3712
      %v3741 = vpack.c.b16 %v3717, %v3715
      %v3742 = vpack.c.b16 %v3718, %v3716
      %v3743 = vpack.c.b16 %v3721, %v3719
      %v3744 = vpack.c.b16 %v3722, %v3720
      %v3745 = vpack.c.b16 %v3725, %v3723
      %v3746 = vpack.c.b16 %v3726, %v3724
      %v3747 = vpack.c.b16 %v3729, %v3727
      %v3748 = vpack.c.b16 %v3730, %v3728
      %v3749 = vpack.c.b16 %v3733, %v3731
      %v3750 = vpack.c.b16 %v3734, %v3732
      %3767 = vmatprep.subr.bf16.mxu0 %v3736
      %3768 = vmatpush1.bf16.msra.mxu0 %v3735
      %3769 = vmatprep.subr.bf16.mxu0 %v3738
      %3770 = vmatpush1.bf16.msra.mxu0 %v3737
      %3771 = vmatprep.subr.bf16.mxu0 %v3740
      %3772 = vmatpush1.bf16.msra.mxu0 %v3739
      %3773 = vmatprep.subr.bf16.mxu0 %v3742
      %3774 = vmatpush1.bf16.msra.mxu0 %v3741
      %3775 = vmatprep.subr.bf16.mxu0 %v3744
      %3776 = vmatpush1.bf16.msra.mxu0 %v3743
      %3777 = vmatprep.subr.bf16.mxu0 %v3746
      %3778 = vmatpush1.bf16.msra.mxu0 %v3745
      %3779 = vmatprep.subr.bf16.mxu0 %v3748
      %3780 = vmatpush1.bf16.msra.mxu0 %v3747
      %3781 = vmatprep.subr.bf16.mxu0 %v3750
      %3782 = vmatpush1.bf16.msra.mxu0 %v3749
      %3783 = vmatprep.subr.bf16.mxu0 0
      %3784 = vmatpush1.bf16.msra.mxu0 0
      %3785 = vmatprep.subr.bf16.mxu0 0
      %3786 = vmatpush1.bf16.msra.mxu0 0
      %3787 = vmatprep.subr.bf16.mxu0 0
      %3788 = vmatpush1.bf16.msra.mxu0 0
      %3789 = vmatprep.subr.bf16.mxu0 0
      %3790 = vmatpush1.bf16.msra.mxu0 0
      %3791 = vmatprep.subr.bf16.mxu0 0
      %3792 = vmatpush1.bf16.msra.mxu0 0
      %3793 = vmatprep.subr.bf16.mxu0 0
      %3794 = vmatpush1.bf16.msra.mxu0 0
      %3795 = vmatprep.subr.bf16.mxu0 0
      %3796 = vmatpush1.bf16.msra.mxu0 0
      %3797 = vmatprep.subr.bf16.mxu0 0
      %3798 = vmatpush1.bf16.msra.mxu0 0
      %3799 = vmatprep.mubr.bf16.mxu0 0
      %3800 = vmatmul.mubr.bf16.gmra.mrb[0].mxu0 %v3667
      %v3801 = vpop.f32.mrb[0].mxu0
      %v3802 = vadd.f32 0.0, %v3801
      %v3803 = vpop.f32.mrb[0].mxu0
      %v3804 = vadd.f32 0.0, %v3803
      %v3805 = vpop.f32.mrb[0].mxu0
      %v3806 = vadd.f32 0.0, %v3805
      %v3807 = vpop.f32.mrb[0].mxu0
      %v3808 = vadd.f32 0.0, %v3807
      %3809 = vmatprep.mubr.bf16.mxu0 0
      %3810 = vmatmul.mubr.bf16.gmra.mrb[0].mxu0 %v3668
      %v3811 = vpop.f32.mrb[0].mxu0
      %v3812 = vadd.f32 0.0, %v3811
      %v3813 = vpop.f32.mrb[0].mxu0
      %v3814 = vadd.f32 0.0, %v3813
      %v3815 = vpop.f32.mrb[0].mxu0
      %v3816 = vadd.f32 0.0, %v3815
      %v3817 = vpop.f32.mrb[0].mxu0
      %v3818 = vadd.f32 0.0, %v3817
      %3819 = vmatprep.mubr.bf16.mxu0 0
      %3820 = vmatmul.mubr.bf16.gmra.mrb[0].mxu0 %v3669
      %v3821 = vpop.f32.mrb[0].mxu0
      %v3822 = vadd.f32 0.0, %v3821
      %v3823 = vpop.f32.mrb[0].mxu0
      %v3824 = vadd.f32 0.0, %v3823
      %v3825 = vpop.f32.mrb[0].mxu0
      %v3826 = vadd.f32 0.0, %v3825
      %v3827 = vpop.f32.mrb[0].mxu0
      %v3828 = vadd.f32 0.0, %v3827
      %3829 = vmatprep.mubr.bf16.mxu0 0
      %3830 = vmatmul.mubr.bf16.gmra.mrb[0].mxu0 %v3670
      %v3831 = vpop.f32.mrb[0].mxu0
      %v3832 = vadd.f32 0.0, %v3831
      %v3833 = vpop.f32.mrb[0].mxu0
      %v3834 = vadd.f32 0.0, %v3833
      %v3835 = vpop.f32.mrb[0].mxu0
      %v3836 = vadd.f32 0.0, %v3835
      %v3837 = vpop.f32.mrb[0].mxu0
      %v3838 = vadd.f32 0.0, %v3837
      %3839 = vdwg.mxu0
      %v3840 = vld [vmem:[%s18] sm:$0x3]
      %v3842 = vlaneseq
      %v3843 = vshrl.u32 %v3842, 7
      %v3844 = vsub.s32 0, %v3843
      %v3845 = vrot.slane %v3840, %v3844
      %v3846 = vlaneseq
      %v3847 = vshrl.u32 %v3846, 7
      %v3848 = vsub.s32 1, %v3847
      %v3849 = vrot.slane %v3840, %v3848
      %v3852 = vmul.f32 %v3802, %v3845
      %v3853 = vmul.f32 %v3804, %v3849
      %v3854 = vmul.f32 %v3806, %v3845
      %v3855 = vmul.f32 %v3808, %v3849
      %v3856 = vmul.f32 %v3812, %v3845
      %v3857 = vmul.f32 %v3814, %v3849
      %v3858 = vmul.f32 %v3816, %v3845
      %v3859 = vmul.f32 %v3818, %v3849
      %v3860 = vmul.f32 %v3822, %v3845
      %v3861 = vmul.f32 %v3824, %v3849
      %v3862 = vmul.f32 %v3826, %v3845
      %v3863 = vmul.f32 %v3828, %v3849
      %v3864 = vmul.f32 %v3832, %v3845
      %v3865 = vmul.f32 %v3834, %v3849
      %v3866 = vmul.f32 %v3836, %v3845
      %v3867 = vmul.f32 %v3838, %v3849
      %v3868 = vld [vmem:[%s19] sm:$0x3]
      %v3870 = vlaneseq
      %v3871 = vshrl.u32 %v3870, 7
      %v3872 = vsub.s32 0, %v3871
      %v3873 = vrot.slane %v3868, %v3872
      %v3874 = vlaneseq
      %v3875 = vshrl.u32 %v3874, 7
      %v3876 = vsub.s32 1, %v3875
      %v3877 = vrot.slane %v3868, %v3876
      %v3880 = vadd.f32 %v3852, %v3873
      %v3881 = vadd.f32 %v3853, %v3877
      %v3882 = vadd.f32 %v3854, %v3873
      %v3883 = vadd.f32 %v3855, %v3877
      %v3884 = vadd.f32 %v3856, %v3873
      %v3885 = vadd.f32 %v3857, %v3877
      %v3886 = vadd.f32 %v3858, %v3873
      %v3887 = vadd.f32 %v3859, %v3877
      %v3888 = vadd.f32 %v3860, %v3873
      %v3889 = vadd.f32 %v3861, %v3877
      %v3890 = vadd.f32 %v3862, %v3873
      %v3891 = vadd.f32 %v3863, %v3877
      %v3892 = vadd.f32 %v3864, %v3873
      %v3893 = vadd.f32 %v3865, %v3877
      %v3894 = vadd.f32 %v3866, %v3873
      %v3895 = vadd.f32 %v3867, %v3877
      %v3896 = vxor.u32 %v3880, 2147483648
      %v3897 = vxor.u32 %v3881, 2147483648
      %v3898 = vxor.u32 %v3882, 2147483648
      %v3899 = vxor.u32 %v3883, 2147483648
      %v3900 = vxor.u32 %v3884, 2147483648
      %v3901 = vxor.u32 %v3885, 2147483648
      %v3902 = vxor.u32 %v3886, 2147483648
      %v3903 = vxor.u32 %v3887, 2147483648
      %v3904 = vxor.u32 %v3888, 2147483648
      %v3905 = vxor.u32 %v3889, 2147483648
      %v3906 = vxor.u32 %v3890, 2147483648
      %v3907 = vxor.u32 %v3891, 2147483648
      %v3908 = vxor.u32 %v3892, 2147483648
      %v3909 = vxor.u32 %v3893, 2147483648
      %v3910 = vxor.u32 %v3894, 2147483648
      %v3911 = vxor.u32 %v3895, 2147483648
      %v3912 = vmul.f32 %v3896, 1.442695
      %v3913 = vpow.pop %v3912
      %v3914 = vmul.f32 %v3897, 1.442695
      %v3915 = vpow.pop %v3914
      %v3916 = vmul.f32 %v3898, 1.442695
      %v3917 = vpow.pop %v3916
      %v3918 = vmul.f32 %v3899, 1.442695
      %v3919 = vpow.pop %v3918
      %v3920 = vmul.f32 %v3900, 1.442695
      %v3921 = vpow.pop %v3920
      %v3922 = vmul.f32 %v3901, 1.442695
      %v3923 = vpow.pop %v3922
      %v3924 = vmul.f32 %v3902, 1.442695
      %v3925 = vpow.pop %v3924
      %v3926 = vmul.f32 %v3903, 1.442695
      %v3927 = vpow.pop %v3926
      %v3928 = vmul.f32 %v3904, 1.442695
      %v3929 = vpow.pop %v3928
      %v3930 = vmul.f32 %v3905, 1.442695
      %v3931 = vpow.pop %v3930
      %v3932 = vmul.f32 %v3906, 1.442695
      %v3933 = vpow.pop %v3932
      %v3934 = vmul.f32 %v3907, 1.442695
      %v3935 = vpow.pop %v3934
      %v3936 = vmul.f32 %v3908, 1.442695
      %v3937 = vpow.pop %v3936
      %v3938 = vmul.f32 %v3909, 1.442695
      %v3939 = vpow.pop %v3938
      %v3940 = vmul.f32 %v3910, 1.442695
      %v3941 = vpow.pop %v3940
      %v3942 = vmul.f32 %v3911, 1.442695
      %v3943 = vpow.pop %v3942
      %v3944 = vadd.f32 %v3913, 1.0
      %v3945 = vadd.f32 %v3915, 1.0
      %v3946 = vadd.f32 %v3917, 1.0
      %v3947 = vadd.f32 %v3919, 1.0
      %v3948 = vadd.f32 %v3921, 1.0
      %v3949 = vadd.f32 %v3923, 1.0
      %v3950 = vadd.f32 %v3925, 1.0
      %v3951 = vadd.f32 %v3927, 1.0
      %v3952 = vadd.f32 %v3929, 1.0
      %v3953 = vadd.f32 %v3931, 1.0
      %v3954 = vadd.f32 %v3933, 1.0
      %v3955 = vadd.f32 %v3935, 1.0
      %v3956 = vadd.f32 %v3937, 1.0
      %v3957 = vadd.f32 %v3939, 1.0
      %v3958 = vadd.f32 %v3941, 1.0
      %v3959 = vadd.f32 %v3943, 1.0
      %v3960 = vrcp.pop %v3944
      %v3961 = vmul.f32 1.0, %v3960
      %v3962 = vrcp.pop %v3945
      %v3963 = vmul.f32 1.0, %v3962
      %v3964 = vrcp.pop %v3946
      %v3965 = vmul.f32 1.0, %v3964
      %v3966 = vrcp.pop %v3947
      %v3967 = vmul.f32 1.0, %v3966
      %v3968 = vrcp.pop %v3948
      %v3969 = vmul.f32 1.0, %v3968
      %v3970 = vrcp.pop %v3949
      %v3971 = vmul.f32 1.0, %v3970
      %v3972 = vrcp.pop %v3950
      %v3973 = vmul.f32 1.0, %v3972
      %v3974 = vrcp.pop %v3951
      %v3975 = vmul.f32 1.0, %v3974
      %v3976 = vrcp.pop %v3952
      %v3977 = vmul.f32 1.0, %v3976
      %v3978 = vrcp.pop %v3953
      %v3979 = vmul.f32 1.0, %v3978
      %v3980 = vrcp.pop %v3954
      %v3981 = vmul.f32 1.0, %v3980
      %v3982 = vrcp.pop %v3955
      %v3983 = vmul.f32 1.0, %v3982
      %v3984 = vrcp.pop %v3956
      %v3985 = vmul.f32 1.0, %v3984
      %v3986 = vrcp.pop %v3957
      %v3987 = vmul.f32 1.0, %v3986
      %v3988 = vrcp.pop %v3958
      %v3989 = vmul.f32 1.0, %v3988
      %v3990 = vrcp.pop %v3959
      %v3991 = vmul.f32 1.0, %v3990
      %v3992 = vmul.f32 %v3880, %v3961
      %v3993 = vmul.f32 %v3881, %v3963
      %v3994 = vmul.f32 %v3882, %v3965
      %v3995 = vmul.f32 %v3883, %v3967
      %v3996 = vmul.f32 %v3884, %v3969
      %v3997 = vmul.f32 %v3885, %v3971
      %v3998 = vmul.f32 %v3886, %v3973
      %v3999 = vmul.f32 %v3887, %v3975
      %v4000 = vmul.f32 %v3888, %v3977
      %v4001 = vmul.f32 %v3889, %v3979
      %v4002 = vmul.f32 %v3890, %v3981
      %v4003 = vmul.f32 %v3891, %v3983
      %v4004 = vmul.f32 %v3892, %v3985
      %v4005 = vmul.f32 %v3893, %v3987
      %v4006 = vmul.f32 %v3894, %v3989
      %v4007 = vmul.f32 %v3895, %v3991
      %v4008 = vld [vmem:[%s20] sm:$0x3]
      %v4010 = vlaneseq
      %v4011 = vshrl.u32 %v4010, 7
      %v4012 = vsub.s32 0, %v4011
      %v4013 = vrot.slane %v4008, %v4012
      %v4014 = vlaneseq
      %v4015 = vshrl.u32 %v4014, 7
      %v4016 = vsub.s32 1, %v4015
      %v4017 = vrot.slane %v4008, %v4016
      %v4020 = vmul.f32 %v3992, %v4013
      %v4021 = vmul.f32 %v3993, %v4017
      %v4022 = vmul.f32 %v3994, %v4013
      %v4023 = vmul.f32 %v3995, %v4017
      %v4024 = vmul.f32 %v3996, %v4013
      %v4025 = vmul.f32 %v3997, %v4017
      %v4026 = vmul.f32 %v3998, %v4013
      %v4027 = vmul.f32 %v3999, %v4017
      %v4028 = vmul.f32 %v4000, %v4013
      %v4029 = vmul.f32 %v4001, %v4017
      %v4030 = vmul.f32 %v4002, %v4013
      %v4031 = vmul.f32 %v4003, %v4017
      %v4032 = vmul.f32 %v4004, %v4013
      %v4033 = vmul.f32 %v4005, %v4017
      %v4034 = vmul.f32 %v4006, %v4013
      %v4035 = vmul.f32 %v4007, %v4017
      %v4036 = vadd.f32 %v4020, %v4021
      %v4037 = vadd.f32 %v4036, %v4022
      %v4038 = vadd.f32 %v4037, %v4023
      %v4039 = vadd.f32 %v4038, %v4024
      %v4040 = vadd.f32 %v4039, %v4025
      %v4041 = vadd.f32 %v4040, %v4026
      %v4042 = vadd.f32 %v4041, %v4027
      %v4043 = vadd.f32 %v4042, %v4028
      %v4044 = vadd.f32 %v4043, %v4029
      %v4045 = vadd.f32 %v4044, %v4030
      %v4046 = vadd.f32 %v4045, %v4031
      %v4047 = vadd.f32 %v4046, %v4032
      %v4048 = vadd.f32 %v4047, %v4033
      %v4049 = vadd.f32 %v4048, %v4034
      %v4050 = vadd.f32 %v4049, %v4035
      %4051 = vadd.xlane.f32.xlu0 %v4050
      %v4052 = vpop.xlane.xlu0 %4051
      %v4053 = vrot.slane %v4052, 4
      %v4054 = vadd.f32 %v4052, %v4053
      %v4055 = vrot.slane %v4054, 2
      %v4056 = vadd.f32 %v4054, %v4055
      %v4057 = vrot.slane %v4056, 1
      %v4058 = vadd.f32 %v4056, %v4057
      %s4059 = vtos %v4058
      %v4060 = vstv %s4059
      %v4061 = vadd.f32 %v4060, 0.0
      %v4062 = vld [vmem:[%s17 + $0x8] sm:$0xff]
      %v4063 = vld [vmem:[%s17 + $0x40] sm:$0xff]
      %v4064 = vld [vmem:[%s17 + $0x78] sm:$0xff]
      %v4065 = vld [vmem:[%s17 + $0xb0] sm:$0xff]
      %v4066 = vld [vmem:[%s17 + $0xe8] sm:$0xff]
      %v4067 = vld [vmem:[%s17 + $0x120] sm:$0xff]
      %v4068 = vld [vmem:[%s17 + $0x158] sm:$0xff]
      %v4069 = vld [vmem:[%s17 + $0x190] sm:$0xff]
      %v4070 = vld [vmem:[%s17 + $0x1c8] sm:$0xff]
      %v4071 = vld [vmem:[%s17 + $0x200] sm:$0xff]
      %v4072 = vld [vmem:[%s17 + $0x238] sm:$0xff]
      %v4073 = vld [vmem:[%s17 + $0x270] sm:$0xff]
      %v4074 = vld [vmem:[%s17 + $0x2a8] sm:$0xff]
      %v4075 = vld [vmem:[%s17 + $0x2e0] sm:$0xff]
      %v4076 = vld [vmem:[%s17 + $0x318] sm:$0xff]
      %v4077 = vld [vmem:[%s17 + $0x350] sm:$0xff]
      %v4094 = vunpack.c.l.b16 %v4062
      %v4095 = vunpack.c.h.b16 %v4062
      %v4096 = vunpack.c.l.b16 %v4063
      %v4097 = vunpack.c.h.b16 %v4063
      %v4098 = vunpack.c.l.b16 %v4064
      %v4099 = vunpack.c.h.b16 %v4064
      %v4100 = vunpack.c.l.b16 %v4065
      %v4101 = vunpack.c.h.b16 %v4065
      %v4102 = vunpack.c.l.b16 %v4066
      %v4103 = vunpack.c.h.b16 %v4066
      %v4104 = vunpack.c.l.b16 %v4067
      %v4105 = vunpack.c.h.b16 %v4067
      %v4106 = vunpack.c.l.b16 %v4068
      %v4107 = vunpack.c.h.b16 %v4068
      %v4108 = vunpack.c.l.b16 %v4069
      %v4109 = vunpack.c.h.b16 %v4069
      %v4110 = vunpack.c.l.b16 %v4070
      %v4111 = vunpack.c.h.b16 %v4070
      %v4112 = vunpack.c.l.b16 %v4071
      %v4113 = vunpack.c.h.b16 %v4071
      %v4114 = vunpack.c.l.b16 %v4072
      %v4115 = vunpack.c.h.b16 %v4072
      %v4116 = vunpack.c.l.b16 %v4073
      %v4117 = vunpack.c.h.b16 %v4073
      %v4118 = vunpack.c.l.b16 %v4074
      %v4119 = vunpack.c.h.b16 %v4074
      %v4120 = vunpack.c.l.b16 %v4075
      %v4121 = vunpack.c.h.b16 %v4075
      %v4122 = vunpack.c.l.b16 %v4076
      %v4123 = vunpack.c.h.b16 %v4076
      %v4124 = vunpack.c.l.b16 %v4077
      %v4125 = vunpack.c.h.b16 %v4077
      %v4126 = vpack.c.b16 %v4096, %v4094
      %v4127 = vpack.c.b16 %v4097, %v4095
      %v4128 = vpack.c.b16 %v4100, %v4098
      %v4129 = vpack.c.b16 %v4101, %v4099
      %v4130 = vpack.c.b16 %v4104, %v4102
      %v4131 = vpack.c.b16 %v4105, %v4103
      %v4132 = vpack.c.b16 %v4108, %v4106
      %v4133 = vpack.c.b16 %v4109, %v4107
      %v4134 = vpack.c.b16 %v4112, %v4110
      %v4135 = vpack.c.b16 %v4113, %v4111
      %v4136 = vpack.c.b16 %v4116, %v4114
      %v4137 = vpack.c.b16 %v4117, %v4115
      %v4138 = vpack.c.b16 %v4120, %v4118
      %v4139 = vpack.c.b16 %v4121, %v4119
      %v4140 = vpack.c.b16 %v4124, %v4122
      %v4141 = vpack.c.b16 %v4125, %v4123
      %4158 = vmatprep.subr.bf16.mxu0 %v4127
      %4159 = vmatpush1.bf16.msra.mxu0 %v4126
      %4160 = vmatprep.subr.bf16.mxu0 %v4129
      %4161 = vmatpush1.bf16.msra.mxu0 %v4128
      %4162 = vmatprep.subr.bf16.mxu0 %v4131
      %4163 = vmatpush1.bf16.msra.mxu0 %v4130
      %4164 = vmatprep.subr.bf16.mxu0 %v4133
      %4165 = vmatpush1.bf16.msra.mxu0 %v4132
      %4166 = vmatprep.subr.bf16.mxu0 %v4135
      %4167 = vmatpush1.bf16.msra.mxu0 %v4134
      %4168 = vmatprep.subr.bf16.mxu0 %v4137
      %4169 = vmatpush1.bf16.msra.mxu0 %v4136
      %4170 = vmatprep.subr.bf16.mxu0 %v4139
      %4171 = vmatpush1.bf16.msra.mxu0 %v4138
      %4172 = vmatprep.subr.bf16.mxu0 %v4141
      %4173 = vmatpush1.bf16.msra.mxu0 %v4140
      %4174 = vmatprep.subr.bf16.mxu0 0
      %4175 = vmatpush1.bf16.msra.mxu0 0
      %4176 = vmatprep.subr.bf16.mxu0 0
      %4177 = vmatpush1.bf16.msra.mxu0 0
      %4178 = vmatprep.subr.bf16.mxu0 0
      %4179 = vmatpush1.bf16.msra.mxu0 0
      %4180 = vmatprep.subr.bf16.mxu0 0
      %4181 = vmatpush1.bf16.msra.mxu0 0
      %4182 = vmatprep.subr.bf16.mxu0 0
      %4183 = vmatpush1.bf16.msra.mxu0 0
      %4184 = vmatprep.subr.bf16.mxu0 0
      %4185 = vmatpush1.bf16.msra.mxu0 0
      %4186 = vmatprep.subr.bf16.mxu0 0
      %4187 = vmatpush1.bf16.msra.mxu0 0
      %4188 = vmatprep.subr.bf16.mxu0 0
      %4189 = vmatpush1.bf16.msra.mxu0 0
      %4190 = vmatprep.mubr.bf16.mxu0 0
      %4191 = vmatmul.mubr.bf16.gmra.mrb[0].mxu0 %v3667
      %v4192 = vpop.f32.mrb[0].mxu0
      %v4193 = vadd.f32 0.0, %v4192
      %v4194 = vpop.f32.mrb[0].mxu0
      %v4195 = vadd.f32 0.0, %v4194
      %v4196 = vpop.f32.mrb[0].mxu0
      %v4197 = vadd.f32 0.0, %v4196
      %v4198 = vpop.f32.mrb[0].mxu0
      %v4199 = vadd.f32 0.0, %v4198
      %4200 = vmatprep.mubr.bf16.mxu0 0
      %4201 = vmatmul.mubr.bf16.gmra.mrb[0].mxu0 %v3668
      %v4202 = vpop.f32.mrb[0].mxu0
      %v4203 = vadd.f32 0.0, %v4202
      %v4204 = vpop.f32.mrb[0].mxu0
      %v4205 = vadd.f32 0.0, %v4204
      %v4206 = vpop.f32.mrb[0].mxu0
      %v4207 = vadd.f32 0.0, %v4206
      %v4208 = vpop.f32.mrb[0].mxu0
      %v4209 = vadd.f32 0.0, %v4208
      %4210 = vmatprep.mubr.bf16.mxu0 0
      %4211 = vmatmul.mubr.bf16.gmra.mrb[0].mxu0 %v3669
      %v4212 = vpop.f32.mrb[0].mxu0
      %v4213 = vadd.f32 0.0, %v4212
      %v4214 = vpop.f32.mrb[0].mxu0
      %v4215 = vadd.f32 0.0, %v4214
      %v4216 = vpop.f32.mrb[0].mxu0
      %v4217 = vadd.f32 0.0, %v4216
      %v4218 = vpop.f32.mrb[0].mxu0
      %v4219 = vadd.f32 0.0, %v4218
      %4220 = vmatprep.mubr.bf16.mxu0 0
      %4221 = vmatmul.mubr.bf16.gmra.mrb[0].mxu0 %v3670
      %v4222 = vpop.f32.mrb[0].mxu0
      %v4223 = vadd.f32 0.0, %v4222
      %v4224 = vpop.f32.mrb[0].mxu0
      %v4225 = vadd.f32 0.0, %v4224
      %v4226 = vpop.f32.mrb[0].mxu0
      %v4227 = vadd.f32 0.0, %v4226
      %v4228 = vpop.f32.mrb[0].mxu0
      %v4229 = vadd.f32 0.0, %v4228
      %4230 = vdwg.mxu0
      %v4231 = vld [vmem:[%s18 + $0x2] sm:$0x3]
      %v4233 = vlaneseq
      %v4234 = vshrl.u32 %v4233, 7
      %v4235 = vsub.s32 0, %v4234
      %v4236 = vrot.slane %v4231, %v4235
      %v4237 = vlaneseq
      %v4238 = vshrl.u32 %v4237, 7
      %v4239 = vsub.s32 1, %v4238
      %v4240 = vrot.slane %v4231, %v4239
      %v4243 = vmul.f32 %v4193, %v4236
      %v4244 = vmul.f32 %v4195, %v4240
      %v4245 = vmul.f32 %v4197, %v4236
      %v4246 = vmul.f32 %v4199, %v4240
      %v4247 = vmul.f32 %v4203, %v4236
      %v4248 = vmul.f32 %v4205, %v4240
      %v4249 = vmul.f32 %v4207, %v4236
      %v4250 = vmul.f32 %v4209, %v4240
      %v4251 = vmul.f32 %v4213, %v4236
      %v4252 = vmul.f32 %v4215, %v4240
      %v4253 = vmul.f32 %v4217, %v4236
      %v4254 = vmul.f32 %v4219, %v4240
      %v4255 = vmul.f32 %v4223, %v4236
      %v4256 = vmul.f32 %v4225, %v4240
      %v4257 = vmul.f32 %v4227, %v4236
      %v4258 = vmul.f32 %v4229, %v4240
      %v4259 = vld [vmem:[%s19 + $0x2] sm:$0x3]
      %v4261 = vlaneseq
      %v4262 = vshrl.u32 %v4261, 7
      %v4263 = vsub.s32 0, %v4262
      %v4264 = vrot.slane %v4259, %v4263
      %v4265 = vlaneseq
      %v4266 = vshrl.u32 %v4265, 7
      %v4267 = vsub.s32 1, %v4266
      %v4268 = vrot.slane %v4259, %v4267
      %v4271 = vadd.f32 %v4243, %v4264
      %v4272 = vadd.f32 %v4244, %v4268
      %v4273 = vadd.f32 %v4245, %v4264
      %v4274 = vadd.f32 %v4246, %v4268
      %v4275 = vadd.f32 %v4247, %v4264
      %v4276 = vadd.f32 %v4248, %v4268
      %v4277 = vadd.f32 %v4249, %v4264
      %v4278 = vadd.f32 %v4250, %v4268
      %v4279 = vadd.f32 %v4251, %v4264
      %v4280 = vadd.f32 %v4252, %v4268
      %v4281 = vadd.f32 %v4253, %v4264
      %v4282 = vadd.f32 %v4254, %v4268
      %v4283 = vadd.f32 %v4255, %v4264
      %v4284 = vadd.f32 %v4256, %v4268
      %v4285 = vadd.f32 %v4257, %v4264
      %v4286 = vadd.f32 %v4258, %v4268
      %v4287 = vxor.u32 %v4271, 2147483648
      %v4288 = vxor.u32 %v4272, 2147483648
      %v4289 = vxor.u32 %v4273, 2147483648
      %v4290 = vxor.u32 %v4274, 2147483648
      %v4291 = vxor.u32 %v4275, 2147483648
      %v4292 = vxor.u32 %v4276, 2147483648
      %v4293 = vxor.u32 %v4277, 2147483648
      %v4294 = vxor.u32 %v4278, 2147483648
      %v4295 = vxor.u32 %v4279, 2147483648
      %v4296 = vxor.u32 %v4280, 2147483648
      %v4297 = vxor.u32 %v4281, 2147483648
      %v4298 = vxor.u32 %v4282, 2147483648
      %v4299 = vxor.u32 %v4283, 2147483648
      %v4300 = vxor.u32 %v4284, 2147483648
      %v4301 = vxor.u32 %v4285, 2147483648
      %v4302 = vxor.u32 %v4286, 2147483648
      %v4303 = vmul.f32 %v4287, 1.442695
      %v4304 = vpow.pop %v4303
      %v4305 = vmul.f32 %v4288, 1.442695
      %v4306 = vpow.pop %v4305
      %v4307 = vmul.f32 %v4289, 1.442695
      %v4308 = vpow.pop %v4307
      %v4309 = vmul.f32 %v4290, 1.442695
      %v4310 = vpow.pop %v4309
      %v4311 = vmul.f32 %v4291, 1.442695
      %v4312 = vpow.pop %v4311
      %v4313 = vmul.f32 %v4292, 1.442695
      %v4314 = vpow.pop %v4313
      %v4315 = vmul.f32 %v4293, 1.442695
      %v4316 = vpow.pop %v4315
      %v4317 = vmul.f32 %v4294, 1.442695
      %v4318 = vpow.pop %v4317
      %v4319 = vmul.f32 %v4295, 1.442695
      %v4320 = vpow.pop %v4319
      %v4321 = vmul.f32 %v4296, 1.442695
      %v4322 = vpow.pop %v4321
      %v4323 = vmul.f32 %v4297, 1.442695
      %v4324 = vpow.pop %v4323
      %v4325 = vmul.f32 %v4298, 1.442695
      %v4326 = vpow.pop %v4325
      %v4327 = vmul.f32 %v4299, 1.442695
      %v4328 = vpow.pop %v4327
      %v4329 = vmul.f32 %v4300, 1.442695
      %v4330 = vpow.pop %v4329
      %v4331 = vmul.f32 %v4301, 1.442695
      %v4332 = vpow.pop %v4331
      %v4333 = vmul.f32 %v4302, 1.442695
      %v4334 = vpow.pop %v4333
      %v4335 = vadd.f32 %v4304, 1.0
      %v4336 = vadd.f32 %v4306, 1.0
      %v4337 = vadd.f32 %v4308, 1.0
      %v4338 = vadd.f32 %v4310, 1.0
      %v4339 = vadd.f32 %v4312, 1.0
      %v4340 = vadd.f32 %v4314, 1.0
      %v4341 = vadd.f32 %v4316, 1.0
      %v4342 = vadd.f32 %v4318, 1.0
      %v4343 = vadd.f32 %v4320, 1.0
      %v4344 = vadd.f32 %v4322, 1.0
      %v4345 = vadd.f32 %v4324, 1.0
      %v4346 = vadd.f32 %v4326, 1.0
      %v4347 = vadd.f32 %v4328, 1.0
      %v4348 = vadd.f32 %v4330, 1.0
      %v4349 = vadd.f32 %v4332, 1.0
      %v4350 = vadd.f32 %v4334, 1.0
      %v4351 = vrcp.pop %v4335
      %v4352 = vmul.f32 1.0, %v4351
      %v4353 = vrcp.pop %v4336
      %v4354 = vmul.f32 1.0, %v4353
      %v4355 = vrcp.pop %v4337
      %v4356 = vmul.f32 1.0, %v4355
      %v4357 = vrcp.pop %v4338
      %v4358 = vmul.f32 1.0, %v4357
      %v4359 = vrcp.pop %v4339
      %v4360 = vmul.f32 1.0, %v4359
      %v4361 = vrcp.pop %v4340
      %v4362 = vmul.f32 1.0, %v4361
      %v4363 = vrcp.pop %v4341
      %v4364 = vmul.f32 1.0, %v4363
      %v4365 = vrcp.pop %v4342
      %v4366 = vmul.f32 1.0, %v4365
      %v4367 = vrcp.pop %v4343
      %v4368 = vmul.f32 1.0, %v4367
      %v4369 = vrcp.pop %v4344
      %v4370 = vmul.f32 1.0, %v4369
      %v4371 = vrcp.pop %v4345
      %v4372 = vmul.f32 1.0, %v4371
      %v4373 = vrcp.pop %v4346
      %v4374 = vmul.f32 1.0, %v4373
      %v4375 = vrcp.pop %v4347
      %v4376 = vmul.f32 1.0, %v4375
      %v4377 = vrcp.pop %v4348
      %v4378 = vmul.f32 1.0, %v4377
      %v4379 = vrcp.pop %v4349
      %v4380 = vmul.f32 1.0, %v4379
      %v4381 = vrcp.pop %v4350
      %v4382 = vmul.f32 1.0, %v4381
      %v4383 = vmul.f32 %v4271, %v4352
      %v4384 = vmul.f32 %v4272, %v4354
      %v4385 = vmul.f32 %v4273, %v4356
      %v4386 = vmul.f32 %v4274, %v4358
      %v4387 = vmul.f32 %v4275, %v4360
      %v4388 = vmul.f32 %v4276, %v4362
      %v4389 = vmul.f32 %v4277, %v4364
      %v4390 = vmul.f32 %v4278, %v4366
      %v4391 = vmul.f32 %v4279, %v4368
      %v4392 = vmul.f32 %v4280, %v4370
      %v4393 = vmul.f32 %v4281, %v4372
      %v4394 = vmul.f32 %v4282, %v4374
      %v4395 = vmul.f32 %v4283, %v4376
      %v4396 = vmul.f32 %v4284, %v4378
      %v4397 = vmul.f32 %v4285, %v4380
      %v4398 = vmul.f32 %v4286, %v4382
      %v4399 = vld [vmem:[%s20 + $0x2] sm:$0x3]
      %v4401 = vlaneseq
      %v4402 = vshrl.u32 %v4401, 7
      %v4403 = vsub.s32 0, %v4402
      %v4404 = vrot.slane %v4399, %v4403
      %v4405 = vlaneseq
      %v4406 = vshrl.u32 %v4405, 7
      %v4407 = vsub.s32 1, %v4406
      %v4408 = vrot.slane %v4399, %v4407
      %v4411 = vmul.f32 %v4383, %v4404
      %v4412 = vmul.f32 %v4384, %v4408
      %v4413 = vmul.f32 %v4385, %v4404
      %v4414 = vmul.f32 %v4386, %v4408
      %v4415 = vmul.f32 %v4387, %v4404
      %v4416 = vmul.f32 %v4388, %v4408
      %v4417 = vmul.f32 %v4389, %v4404
      %v4418 = vmul.f32 %v4390, %v4408
      %v4419 = vmul.f32 %v4391, %v4404
      %v4420 = vmul.f32 %v4392, %v4408
      %v4421 = vmul.f32 %v4393, %v4404
      %v4422 = vmul.f32 %v4394, %v4408
      %v4423 = vmul.f32 %v4395, %v4404
      %v4424 = vmul.f32 %v4396, %v4408
      %v4425 = vmul.f32 %v4397, %v4404
      %v4426 = vmul.f32 %v4398, %v4408
      %v4427 = vadd.f32 %v4411, %v4412
      %v4428 = vadd.f32 %v4427, %v4413
      %v4429 = vadd.f32 %v4428, %v4414
      %v4430 = vadd.f32 %v4429, %v4415
      %v4431 = vadd.f32 %v4430, %v4416
      %v4432 = vadd.f32 %v4431, %v4417
      %v4433 = vadd.f32 %v4432, %v4418
      %v4434 = vadd.f32 %v4433, %v4419
      %v4435 = vadd.f32 %v4434, %v4420
      %v4436 = vadd.f32 %v4435, %v4421
      %v4437 = vadd.f32 %v4436, %v4422
      %v4438 = vadd.f32 %v4437, %v4423
      %v4439 = vadd.f32 %v4438, %v4424
      %v4440 = vadd.f32 %v4439, %v4425
      %v4441 = vadd.f32 %v4440, %v4426
      %4442 = vadd.xlane.f32.xlu0 %v4441
      %v4443 = vpop.xlane.xlu0 %4442
      %v4444 = vrot.slane %v4443, 4
      %v4445 = vadd.f32 %v4443, %v4444
      %v4446 = vrot.slane %v4445, 2
      %v4447 = vadd.f32 %v4445, %v4446
      %v4448 = vrot.slane %v4447, 1
      %v4449 = vadd.f32 %v4447, %v4448
      %s4450 = vtos %v4449
      %v4451 = vstv %s4450
      %v4452 = vadd.f32 %v4061, %v4451
      %v4453 = vld [vmem:[%s17 + $0x10] sm:$0xff]
      %v4454 = vld [vmem:[%s17 + $0x48] sm:$0xff]
      %v4455 = vld [vmem:[%s17 + $0x80] sm:$0xff]
      %v4456 = vld [vmem:[%s17 + $0xb8] sm:$0xff]
      %v4457 = vld [vmem:[%s17 + $0xf0] sm:$0xff]
      %v4458 = vld [vmem:[%s17 + $0x128] sm:$0xff]
      %v4459 = vld [vmem:[%s17 + $0x160] sm:$0xff]
      %v4460 = vld [vmem:[%s17 + $0x198] sm:$0xff]
      %v4461 = vld [vmem:[%s17 + $0x1d0] sm:$0xff]
      %v4462 = vld [vmem:[%s17 + $0x208] sm:$0xff]
      %v4463 = vld [vmem:[%s17 + $0x240] sm:$0xff]
      %v4464 = vld [vmem:[%s17 + $0x278] sm:$0xff]
      %v4465 = vld [vmem:[%s17 + $0x2b0] sm:$0xff]
      %v4466 = vld [vmem:[%s17 + $0x2e8] sm:$0xff]
      %v4467 = vld [vmem:[%s17 + $0x320] sm:$0xff]
      %v4468 = vld [vmem:[%s17 + $0x358] sm:$0xff]
      %v4485 = vunpack.c.l.b16 %v4453
      %v4486 = vunpack.c.h.b16 %v4453
      %v4487 = vunpack.c.l.b16 %v4454
      %v4488 = vunpack.c.h.b16 %v4454
      %v4489 = vunpack.c.l.b16 %v4455
      %v4490 = vunpack.c.h.b16 %v4455
      %v4491 = vunpack.c.l.b16 %v4456
      %v4492 = vunpack.c.h.b16 %v4456
      %v4493 = vunpack.c.l.b16 %v4457
      %v4494 = vunpack.c.h.b16 %v4457
      %v4495 = vunpack.c.l.b16 %v4458
      %v4496 = vunpack.c.h.b16 %v4458
      %v4497 = vunpack.c.l.b16 %v4459
      %v4498 = vunpack.c.h.b16 %v4459
      %v4499 = vunpack.c.l.b16 %v4460
      %v4500 = vunpack.c.h.b16 %v4460
      %v4501 = vunpack.c.l.b16 %v4461
      %v4502 = vunpack.c.h.b16 %v4461
      %v4503 = vunpack.c.l.b16 %v4462
      %v4504 = vunpack.c.h.b16 %v4462
      %v4505 = vunpack.c.l.b16 %v4463
      %v4506 = vunpack.c.h.b16 %v4463
      %v4507 = vunpack.c.l.b16 %v4464
      %v4508 = vunpack.c.h.b16 %v4464
      %v4509 = vunpack.c.l.b16 %v4465
      %v4510 = vunpack.c.h.b16 %v4465
      %v4511 = vunpack.c.l.b16 %v4466
      %v4512 = vunpack.c.h.b16 %v4466
      %v4513 = vunpack.c.l.b16 %v4467
      %v4514 = vunpack.c.h.b16 %v4467
      %v4515 = vunpack.c.l.b16 %v4468
      %v4516 = vunpack.c.h.b16 %v4468
      %v4517 = vpack.c.b16 %v4487, %v4485
      %v4518 = vpack.c.b16 %v4488, %v4486
      %v4519 = vpack.c.b16 %v4491, %v4489
      %v4520 = vpack.c.b16 %v4492, %v4490
      %v4521 = vpack.c.b16 %v4495, %v4493
      %v4522 = vpack.c.b16 %v4496, %v4494
      %v4523 = vpack.c.b16 %v4499, %v4497
      %v4524 = vpack.c.b16 %v4500, %v4498
      %v4525 = vpack.c.b16 %v4503, %v4501
      %v4526 = vpack.c.b16 %v4504, %v4502
      %v4527 = vpack.c.b16 %v4507, %v4505
      %v4528 = vpack.c.b16 %v4508, %v4506
      %v4529 = vpack.c.b16 %v4511, %v4509
      %v4530 = vpack.c.b16 %v4512, %v4510
      %v4531 = vpack.c.b16 %v4515, %v4513
      %v4532 = vpack.c.b16 %v4516, %v4514
      %4549 = vmatprep.subr.bf16.mxu0 %v4518
      %4550 = vmatpush1.bf16.msra.mxu0 %v4517
      %4551 = vmatprep.subr.bf16.mxu0 %v4520
      %4552 = vmatpush1.bf16.msra.mxu0 %v4519
      %4553 = vmatprep.subr.bf16.mxu0 %v4522
      %4554 = vmatpush1.bf16.msra.mxu0 %v4521
      %4555 = vmatprep.subr.bf16.mxu0 %v4524
      %4556 = vmatpush1.bf16.msra.mxu0 %v4523
      %4557 = vmatprep.subr.bf16.mxu0 %v4526
      %4558 = vmatpush1.bf16.msra.mxu0 %v4525
      %4559 = vmatprep.subr.bf16.mxu0 %v4528
      %4560 = vmatpush1.bf16.msra.mxu0 %v4527
      %4561 = vmatprep.subr.bf16.mxu0 %v4530
      %4562 = vmatpush1.bf16.msra.mxu0 %v4529
      %4563 = vmatprep.subr.bf16.mxu0 %v4532
      %4564 = vmatpush1.bf16.msra.mxu0 %v4531
      %4565 = vmatprep.subr.bf16.mxu0 0
      %4566 = vmatpush1.bf16.msra.mxu0 0
      %4567 = vmatprep.subr.bf16.mxu0 0
      %4568 = vmatpush1.bf16.msra.mxu0 0
      %4569 = vmatprep.subr.bf16.mxu0 0
      %4570 = vmatpush1.bf16.msra.mxu0 0
      %4571 = vmatprep.subr.bf16.mxu0 0
      %4572 = vmatpush1.bf16.msra.mxu0 0
      %4573 = vmatprep.subr.bf16.mxu0 0
      %4574 = vmatpush1.bf16.msra.mxu0 0
      %4575 = vmatprep.subr.bf16.mxu0 0
      %4576 = vmatpush1.bf16.msra.mxu0 0
      %4577 = vmatprep.subr.bf16.mxu0 0
      %4578 = vmatpush1.bf16.msra.mxu0 0
      %4579 = vmatprep.subr.bf16.mxu0 0
      %4580 = vmatpush1.bf16.msra.mxu0 0
      %4581 = vmatprep.mubr.bf16.mxu0 0
      %4582 = vmatmul.mubr.bf16.gmra.mrb[0].mxu0 %v3667
      %v4583 = vpop.f32.mrb[0].mxu0
      %v4584 = vadd.f32 0.0, %v4583
      %v4585 = vpop.f32.mrb[0].mxu0
      %v4586 = vadd.f32 0.0, %v4585
      %v4587 = vpop.f32.mrb[0].mxu0
      %v4588 = vadd.f32 0.0, %v4587
      %v4589 = vpop.f32.mrb[0].mxu0
      %v4590 = vadd.f32 0.0, %v4589
      %4591 = vmatprep.mubr.bf16.mxu0 0
      %4592 = vmatmul.mubr.bf16.gmra.mrb[0].mxu0 %v3668
      %v4593 = vpop.f32.mrb[0].mxu0
      %v4594 = vadd.f32 0.0, %v4593
      %v4595 = vpop.f32.mrb[0].mxu0
      %v4596 = vadd.f32 0.0, %v4595
      %v4597 = vpop.f32.mrb[0].mxu0
      %v4598 = vadd.f32 0.0, %v4597
      %v4599 = vpop.f32.mrb[0].mxu0
      %v4600 = vadd.f32 0.0, %v4599
      %4601 = vmatprep.mubr.bf16.mxu0 0
      %4602 = vmatmul.mubr.bf16.gmra.mrb[0].mxu0 %v3669
      %v4603 = vpop.f32.mrb[0].mxu0
      %v4604 = vadd.f32 0.0, %v4603
      %v4605 = vpop.f32.mrb[0].mxu0
      %v4606 = vadd.f32 0.0, %v4605
      %v4607 = vpop.f32.mrb[0].mxu0
      %v4608 = vadd.f32 0.0, %v4607
      %v4609 = vpop.f32.mrb[0].mxu0
      %v4610 = vadd.f32 0.0, %v4609
      %4611 = vmatprep.mubr.bf16.mxu0 0
      %4612 = vmatmul.mubr.bf16.gmra.mrb[0].mxu0 %v3670
      %v4613 = vpop.f32.mrb[0].mxu0
      %v4614 = vadd.f32 0.0, %v4613
      %v4615 = vpop.f32.mrb[0].mxu0
      %v4616 = vadd.f32 0.0, %v4615
      %v4617 = vpop.f32.mrb[0].mxu0
      %v4618 = vadd.f32 0.0, %v4617
      %v4619 = vpop.f32.mrb[0].mxu0
      %v4620 = vadd.f32 0.0, %v4619
      %4621 = vdwg.mxu0
      %v4622 = vld [vmem:[%s18 + $0x4] sm:$0x3]
      %v4624 = vlaneseq
      %v4625 = vshrl.u32 %v4624, 7
      %v4626 = vsub.s32 0, %v4625
      %v4627 = vrot.slane %v4622, %v4626
      %v4628 = vlaneseq
      %v4629 = vshrl.u32 %v4628, 7
      %v4630 = vsub.s32 1, %v4629
      %v4631 = vrot.slane %v4622, %v4630
      %v4634 = vmul.f32 %v4584, %v4627
      %v4635 = vmul.f32 %v4586, %v4631
      %v4636 = vmul.f32 %v4588, %v4627
      %v4637 = vmul.f32 %v4590, %v4631
      %v4638 = vmul.f32 %v4594, %v4627
      %v4639 = vmul.f32 %v4596, %v4631
      %v4640 = vmul.f32 %v4598, %v4627
      %v4641 = vmul.f32 %v4600, %v4631
      %v4642 = vmul.f32 %v4604, %v4627
      %v4643 = vmul.f32 %v4606, %v4631
      %v4644 = vmul.f32 %v4608, %v4627
      %v4645 = vmul.f32 %v4610, %v4631
      %v4646 = vmul.f32 %v4614, %v4627
      %v4647 = vmul.f32 %v4616, %v4631
      %v4648 = vmul.f32 %v4618, %v4627
      %v4649 = vmul.f32 %v4620, %v4631
      %v4650 = vld [vmem:[%s19 + $0x4] sm:$0x3]
      %v4652 = vlaneseq
      %v4653 = vshrl.u32 %v4652, 7
      %v4654 = vsub.s32 0, %v4653
      %v4655 = vrot.slane %v4650, %v4654
      %v4656 = vlaneseq
      %v4657 = vshrl.u32 %v4656, 7
      %v4658 = vsub.s32 1, %v4657
      %v4659 = vrot.slane %v4650, %v4658
      %v4662 = vadd.f32 %v4634, %v4655
      %v4663 = vadd.f32 %v4635, %v4659
      %v4664 = vadd.f32 %v4636, %v4655
      %v4665 = vadd.f32 %v4637, %v4659
      %v4666 = vadd.f32 %v4638, %v4655
      %v4667 = vadd.f32 %v4639, %v4659
      %v4668 = vadd.f32 %v4640, %v4655
      %v4669 = vadd.f32 %v4641, %v4659
      %v4670 = vadd.f32 %v4642, %v4655
      %v4671 = vadd.f32 %v4643, %v4659
      %v4672 = vadd.f32 %v4644, %v4655
      %v4673 = vadd.f32 %v4645, %v4659
      %v4674 = vadd.f32 %v4646, %v4655
      %v4675 = vadd.f32 %v4647, %v4659
      %v4676 = vadd.f32 %v4648, %v4655
      %v4677 = vadd.f32 %v4649, %v4659
      %v4678 = vxor.u32 %v4662, 2147483648
      %v4679 = vxor.u32 %v4663, 2147483648
      %v4680 = vxor.u32 %v4664, 2147483648
      %v4681 = vxor.u32 %v4665, 2147483648
      %v4682 = vxor.u32 %v4666, 2147483648
      %v4683 = vxor.u32 %v4667, 2147483648
      %v4684 = vxor.u32 %v4668, 2147483648
      %v4685 = vxor.u32 %v4669, 2147483648
      %v4686 = vxor.u32 %v4670, 2147483648
      %v4687 = vxor.u32 %v4671, 2147483648
      %v4688 = vxor.u32 %v4672, 2147483648
      %v4689 = vxor.u32 %v4673, 2147483648
      %v4690 = vxor.u32 %v4674, 2147483648
      %v4691 = vxor.u32 %v4675, 2147483648
      %v4692 = vxor.u32 %v4676, 2147483648
      %v4693 = vxor.u32 %v4677, 2147483648
      %v4694 = vmul.f32 %v4678, 1.442695
      %v4695 = vpow.pop %v4694
      %v4696 = vmul.f32 %v4679, 1.442695
      %v4697 = vpow.pop %v4696
      %v4698 = vmul.f32 %v4680, 1.442695
      %v4699 = vpow.pop %v4698
      %v4700 = vmul.f32 %v4681, 1.442695
      %v4701 = vpow.pop %v4700
      %v4702 = vmul.f32 %v4682, 1.442695
      %v4703 = vpow.pop %v4702
      %v4704 = vmul.f32 %v4683, 1.442695
      %v4705 = vpow.pop %v4704
      %v4706 = vmul.f32 %v4684, 1.442695
      %v4707 = vpow.pop %v4706
      %v4708 = vmul.f32 %v4685, 1.442695
      %v4709 = vpow.pop %v4708
      %v4710 = vmul.f32 %v4686, 1.442695
      %v4711 = vpow.pop %v4710
      %v4712 = vmul.f32 %v4687, 1.442695
      %v4713 = vpow.pop %v4712
      %v4714 = vmul.f32 %v4688, 1.442695
      %v4715 = vpow.pop %v4714
      %v4716 = vmul.f32 %v4689, 1.442695
      %v4717 = vpow.pop %v4716
      %v4718 = vmul.f32 %v4690, 1.442695
      %v4719 = vpow.pop %v4718
      %v4720 = vmul.f32 %v4691, 1.442695
      %v4721 = vpow.pop %v4720
      %v4722 = vmul.f32 %v4692, 1.442695
      %v4723 = vpow.pop %v4722
      %v4724 = vmul.f32 %v4693, 1.442695
      %v4725 = vpow.pop %v4724
      %v4726 = vadd.f32 %v4695, 1.0
      %v4727 = vadd.f32 %v4697, 1.0
      %v4728 = vadd.f32 %v4699, 1.0
      %v4729 = vadd.f32 %v4701, 1.0
      %v4730 = vadd.f32 %v4703, 1.0
      %v4731 = vadd.f32 %v4705, 1.0
      %v4732 = vadd.f32 %v4707, 1.0
      %v4733 = vadd.f32 %v4709, 1.0
      %v4734 = vadd.f32 %v4711, 1.0
      %v4735 = vadd.f32 %v4713, 1.0
      %v4736 = vadd.f32 %v4715, 1.0
      %v4737 = vadd.f32 %v4717, 1.0
      %v4738 = vadd.f32 %v4719, 1.0
      %v4739 = vadd.f32 %v4721, 1.0
      %v4740 = vadd.f32 %v4723, 1.0
      %v4741 = vadd.f32 %v4725, 1.0
      %v4742 = vrcp.pop %v4726
      %v4743 = vmul.f32 1.0, %v4742
      %v4744 = vrcp.pop %v4727
      %v4745 = vmul.f32 1.0, %v4744
      %v4746 = vrcp.pop %v4728
      %v4747 = vmul.f32 1.0, %v4746
      %v4748 = vrcp.pop %v4729
      %v4749 = vmul.f32 1.0, %v4748
      %v4750 = vrcp.pop %v4730
      %v4751 = vmul.f32 1.0, %v4750
      %v4752 = vrcp.pop %v4731
      %v4753 = vmul.f32 1.0, %v4752
      %v4754 = vrcp.pop %v4732
      %v4755 = vmul.f32 1.0, %v4754
      %v4756 = vrcp.pop %v4733
      %v4757 = vmul.f32 1.0, %v4756
      %v4758 = vrcp.pop %v4734
      %v4759 = vmul.f32 1.0, %v4758
      %v4760 = vrcp.pop %v4735
      %v4761 = vmul.f32 1.0, %v4760
      %v4762 = vrcp.pop %v4736
      %v4763 = vmul.f32 1.0, %v4762
      %v4764 = vrcp.pop %v4737
      %v4765 = vmul.f32 1.0, %v4764
      %v4766 = vrcp.pop %v4738
      %v4767 = vmul.f32 1.0, %v4766
      %v4768 = vrcp.pop %v4739
      %v4769 = vmul.f32 1.0, %v4768
      %v4770 = vrcp.pop %v4740
      %v4771 = vmul.f32 1.0, %v4770
      %v4772 = vrcp.pop %v4741
      %v4773 = vmul.f32 1.0, %v4772
      %v4774 = vmul.f32 %v4662, %v4743
      %v4775 = vmul.f32 %v4663, %v4745
      %v4776 = vmul.f32 %v4664, %v4747
      %v4777 = vmul.f32 %v4665, %v4749
      %v4778 = vmul.f32 %v4666, %v4751
      %v4779 = vmul.f32 %v4667, %v4753
      %v4780 = vmul.f32 %v4668, %v4755
      %v4781 = vmul.f32 %v4669, %v4757
      %v4782 = vmul.f32 %v4670, %v4759
      %v4783 = vmul.f32 %v4671, %v4761
      %v4784 = vmul.f32 %v4672, %v4763
      %v4785 = vmul.f32 %v4673, %v4765
      %v4786 = vmul.f32 %v4674, %v4767
      %v4787 = vmul.f32 %v4675, %v4769
      %v4788 = vmul.f32 %v4676, %v4771
      %v4789 = vmul.f32 %v4677, %v4773
      %v4790 = vld [vmem:[%s20 + $0x4] sm:$0x3]
      %v4792 = vlaneseq
      %v4793 = vshrl.u32 %v4792, 7
      %v4794 = vsub.s32 0, %v4793
      %v4795 = vrot.slane %v4790, %v4794
      %v4796 = vlaneseq
      %v4797 = vshrl.u32 %v4796, 7
      %v4798 = vsub.s32 1, %v4797
      %v4799 = vrot.slane %v4790, %v4798
      %v4802 = vmul.f32 %v4774, %v4795
      %v4803 = vmul.f32 %v4775, %v4799
      %v4804 = vmul.f32 %v4776, %v4795
      %v4805 = vmul.f32 %v4777, %v4799
      %v4806 = vmul.f32 %v4778, %v4795
      %v4807 = vmul.f32 %v4779, %v4799
      %v4808 = vmul.f32 %v4780, %v4795
      %v4809 = vmul.f32 %v4781, %v4799
      %v4810 = vmul.f32 %v4782, %v4795
      %v4811 = vmul.f32 %v4783, %v4799
      %v4812 = vmul.f32 %v4784, %v4795
      %v4813 = vmul.f32 %v4785, %v4799
      %v4814 = vmul.f32 %v4786, %v4795
      %v4815 = vmul.f32 %v4787, %v4799
      %v4816 = vmul.f32 %v4788, %v4795
      %v4817 = vmul.f32 %v4789, %v4799
      %v4818 = vadd.f32 %v4802, %v4803
      %v4819 = vadd.f32 %v4818, %v4804
      %v4820 = vadd.f32 %v4819, %v4805
      %v4821 = vadd.f32 %v4820, %v4806
      %v4822 = vadd.f32 %v4821, %v4807
      %v4823 = vadd.f32 %v4822, %v4808
      %v4824 = vadd.f32 %v4823, %v4809
      %v4825 = vadd.f32 %v4824, %v4810
      %v4826 = vadd.f32 %v4825, %v4811
      %v4827 = vadd.f32 %v4826, %v4812
      %v4828 = vadd.f32 %v4827, %v4813
      %v4829 = vadd.f32 %v4828, %v4814
      %v4830 = vadd.f32 %v4829, %v4815
      %v4831 = vadd.f32 %v4830, %v4816
      %v4832 = vadd.f32 %v4831, %v4817
      %4833 = vadd.xlane.f32.xlu0 %v4832
      %v4834 = vpop.xlane.xlu0 %4833
      %v4835 = vrot.slane %v4834, 4
      %v4836 = vadd.f32 %v4834, %v4835
      %v4837 = vrot.slane %v4836, 2
      %v4838 = vadd.f32 %v4836, %v4837
      %v4839 = vrot.slane %v4838, 1
      %v4840 = vadd.f32 %v4838, %v4839
      %s4841 = vtos %v4840
      %v4842 = vstv %s4841
      %v4843 = vadd.f32 %v4452, %v4842
      %v4844 = vld [vmem:[%s17 + $0x18] sm:$0xff]
      %v4845 = vld [vmem:[%s17 + $0x50] sm:$0xff]
      %v4846 = vld [vmem:[%s17 + $0x88] sm:$0xff]
      %v4847 = vld [vmem:[%s17 + $0xc0] sm:$0xff]
      %v4848 = vld [vmem:[%s17 + $0xf8] sm:$0xff]
      %v4849 = vld [vmem:[%s17 + $0x130] sm:$0xff]
      %v4850 = vld [vmem:[%s17 + $0x168] sm:$0xff]
      %v4851 = vld [vmem:[%s17 + $0x1a0] sm:$0xff]
      %v4852 = vld [vmem:[%s17 + $0x1d8] sm:$0xff]
      %v4853 = vld [vmem:[%s17 + $0x210] sm:$0xff]
      %v4854 = vld [vmem:[%s17 + $0x248] sm:$0xff]
      %v4855 = vld [vmem:[%s17 + $0x280] sm:$0xff]
      %v4856 = vld [vmem:[%s17 + $0x2b8] sm:$0xff]
      %v4857 = vld [vmem:[%s17 + $0x2f0] sm:$0xff]
      %v4858 = vld [vmem:[%s17 + $0x328] sm:$0xff]
      %v4859 = vld [vmem:[%s17 + $0x360] sm:$0xff]
      %v4876 = vunpack.c.l.b16 %v4844
      %v4877 = vunpack.c.h.b16 %v4844
      %v4878 = vunpack.c.l.b16 %v4845
      %v4879 = vunpack.c.h.b16 %v4845
      %v4880 = vunpack.c.l.b16 %v4846
      %v4881 = vunpack.c.h.b16 %v4846
      %v4882 = vunpack.c.l.b16 %v4847
      %v4883 = vunpack.c.h.b16 %v4847
      %v4884 = vunpack.c.l.b16 %v4848
      %v4885 = vunpack.c.h.b16 %v4848
      %v4886 = vunpack.c.l.b16 %v4849
      %v4887 = vunpack.c.h.b16 %v4849
      %v4888 = vunpack.c.l.b16 %v4850
      %v4889 = vunpack.c.h.b16 %v4850
      %v4890 = vunpack.c.l.b16 %v4851
      %v4891 = vunpack.c.h.b16 %v4851
      %v4892 = vunpack.c.l.b16 %v4852
      %v4893 = vunpack.c.h.b16 %v4852
      %v4894 = vunpack.c.l.b16 %v4853
      %v4895 = vunpack.c.h.b16 %v4853
      %v4896 = vunpack.c.l.b16 %v4854
      %v4897 = vunpack.c.h.b16 %v4854
      %v4898 = vunpack.c.l.b16 %v4855
      %v4899 = vunpack.c.h.b16 %v4855
      %v4900 = vunpack.c.l.b16 %v4856
      %v4901 = vunpack.c.h.b16 %v4856
      %v4902 = vunpack.c.l.b16 %v4857
      %v4903 = vunpack.c.h.b16 %v4857
      %v4904 = vunpack.c.l.b16 %v4858
      %v4905 = vunpack.c.h.b16 %v4858
      %v4906 = vunpack.c.l.b16 %v4859
      %v4907 = vunpack.c.h.b16 %v4859
      %v4908 = vpack.c.b16 %v4878, %v4876
      %v4909 = vpack.c.b16 %v4879, %v4877
      %v4910 = vpack.c.b16 %v4882, %v4880
      %v4911 = vpack.c.b16 %v4883, %v4881
      %v4912 = vpack.c.b16 %v4886, %v4884
      %v4913 = vpack.c.b16 %v4887, %v4885
      %v4914 = vpack.c.b16 %v4890, %v4888
      %v4915 = vpack.c.b16 %v4891, %v4889
      %v4916 = vpack.c.b16 %v4894, %v4892
      %v4917 = vpack.c.b16 %v4895, %v4893
      %v4918 = vpack.c.b16 %v4898, %v4896
      %v4919 = vpack.c.b16 %v4899, %v4897
      %v4920 = vpack.c.b16 %v4902, %v4900
      %v4921 = vpack.c.b16 %v4903, %v4901
      %v4922 = vpack.c.b16 %v4906, %v4904
      %v4923 = vpack.c.b16 %v4907, %v4905
      %4940 = vmatprep.subr.bf16.mxu0 %v4909
      %4941 = vmatpush1.bf16.msra.mxu0 %v4908
      %4942 = vmatprep.subr.bf16.mxu0 %v4911
      %4943 = vmatpush1.bf16.msra.mxu0 %v4910
      %4944 = vmatprep.subr.bf16.mxu0 %v4913
      %4945 = vmatpush1.bf16.msra.mxu0 %v4912
      %4946 = vmatprep.subr.bf16.mxu0 %v4915
      %4947 = vmatpush1.bf16.msra.mxu0 %v4914
      %4948 = vmatprep.subr.bf16.mxu0 %v4917
      %4949 = vmatpush1.bf16.msra.mxu0 %v4916
      %4950 = vmatprep.subr.bf16.mxu0 %v4919
      %4951 = vmatpush1.bf16.msra.mxu0 %v4918
      %4952 = vmatprep.subr.bf16.mxu0 %v4921
      %4953 = vmatpush1.bf16.msra.mxu0 %v4920
      %4954 = vmatprep.subr.bf16.mxu0 %v4923
      %4955 = vmatpush1.bf16.msra.mxu0 %v4922
      %4956 = vmatprep.subr.bf16.mxu0 0
      %4957 = vmatpush1.bf16.msra.mxu0 0
      %4958 = vmatprep.subr.bf16.mxu0 0
      %4959 = vmatpush1.bf16.msra.mxu0 0
      %4960 = vmatprep.subr.bf16.mxu0 0
      %4961 = vmatpush1.bf16.msra.mxu0 0
      %4962 = vmatprep.subr.bf16.mxu0 0
      %4963 = vmatpush1.bf16.msra.mxu0 0
      %4964 = vmatprep.subr.bf16.mxu0 0
      %4965 = vmatpush1.bf16.msra.mxu0 0
      %4966 = vmatprep.subr.bf16.mxu0 0
      %4967 = vmatpush1.bf16.msra.mxu0 0
      %4968 = vmatprep.subr.bf16.mxu0 0
      %4969 = vmatpush1.bf16.msra.mxu0 0
      %4970 = vmatprep.subr.bf16.mxu0 0
      %4971 = vmatpush1.bf16.msra.mxu0 0
      %4972 = vmatprep.mubr.bf16.mxu0 0
      %4973 = vmatmul.mubr.bf16.gmra.mrb[0].mxu0 %v3667
      %v4974 = vpop.f32.mrb[0].mxu0
      %v4975 = vadd.f32 0.0, %v4974
      %v4976 = vpop.f32.mrb[0].mxu0
      %v4977 = vadd.f32 0.0, %v4976
      %v4978 = vpop.f32.mrb[0].mxu0
      %v4979 = vadd.f32 0.0, %v4978
      %v4980 = vpop.f32.mrb[0].mxu0
      %v4981 = vadd.f32 0.0, %v4980
      %4982 = vmatprep.mubr.bf16.mxu0 0
      %4983 = vmatmul.mubr.bf16.gmra.mrb[0].mxu0 %v3668
      %v4984 = vpop.f32.mrb[0].mxu0
      %v4985 = vadd.f32 0.0, %v4984
      %v4986 = vpop.f32.mrb[0].mxu0
      %v4987 = vadd.f32 0.0, %v4986
      %v4988 = vpop.f32.mrb[0].mxu0
      %v4989 = vadd.f32 0.0, %v4988
      %v4990 = vpop.f32.mrb[0].mxu0
      %v4991 = vadd.f32 0.0, %v4990
      %4992 = vmatprep.mubr.bf16.mxu0 0
      %4993 = vmatmul.mubr.bf16.gmra.mrb[0].mxu0 %v3669
      %v4994 = vpop.f32.mrb[0].mxu0
      %v4995 = vadd.f32 0.0, %v4994
      %v4996 = vpop.f32.mrb[0].mxu0
      %v4997 = vadd.f32 0.0, %v4996
      %v4998 = vpop.f32.mrb[0].mxu0
      %v4999 = vadd.f32 0.0, %v4998
      %v5000 = vpop.f32.mrb[0].mxu0
      %v5001 = vadd.f32 0.0, %v5000
      %5002 = vmatprep.mubr.bf16.mxu0 0
      %5003 = vmatmul.mubr.bf16.gmra.mrb[0].mxu0 %v3670
      %v5004 = vpop.f32.mrb[0].mxu0
      %v5005 = vadd.f32 0.0, %v5004
      %v5006 = vpop.f32.mrb[0].mxu0
      %v5007 = vadd.f32 0.0, %v5006
      %v5008 = vpop.f32.mrb[0].mxu0
      %v5009 = vadd.f32 0.0, %v5008
      %v5010 = vpop.f32.mrb[0].mxu0
      %v5011 = vadd.f32 0.0, %v5010
      %5012 = vdwg.mxu0
      %v5013 = vld [vmem:[%s18 + $0x6] sm:$0x3]
      %v5015 = vlaneseq
      %v5016 = vshrl.u32 %v5015, 7
      %v5017 = vsub.s32 0, %v5016
      %v5018 = vrot.slane %v5013, %v5017
      %v5019 = vlaneseq
      %v5020 = vshrl.u32 %v5019, 7
      %v5021 = vsub.s32 1, %v5020
      %v5022 = vrot.slane %v5013, %v5021
      %v5025 = vmul.f32 %v4975, %v5018
      %v5026 = vmul.f32 %v4977, %v5022
      %v5027 = vmul.f32 %v4979, %v5018
      %v5028 = vmul.f32 %v4981, %v5022
      %v5029 = vmul.f32 %v4985, %v5018
      %v5030 = vmul.f32 %v4987, %v5022
      %v5031 = vmul.f32 %v4989, %v5018
      %v5032 = vmul.f32 %v4991, %v5022
      %v5033 = vmul.f32 %v4995, %v5018
      %v5034 = vmul.f32 %v4997, %v5022
      %v5035 = vmul.f32 %v4999, %v5018
      %v5036 = vmul.f32 %v5001, %v5022
      %v5037 = vmul.f32 %v5005, %v5018
      %v5038 = vmul.f32 %v5007, %v5022
      %v5039 = vmul.f32 %v5009, %v5018
      %v5040 = vmul.f32 %v5011, %v5022
      %v5041 = vld [vmem:[%s19 + $0x6] sm:$0x3]
      %v5043 = vlaneseq
      %v5044 = vshrl.u32 %v5043, 7
      %v5045 = vsub.s32 0, %v5044
      %v5046 = vrot.slane %v5041, %v5045
      %v5047 = vlaneseq
      %v5048 = vshrl.u32 %v5047, 7
      %v5049 = vsub.s32 1, %v5048
      %v5050 = vrot.slane %v5041, %v5049
      %v5053 = vadd.f32 %v5025, %v5046
      %v5054 = vadd.f32 %v5026, %v5050
      %v5055 = vadd.f32 %v5027, %v5046
      %v5056 = vadd.f32 %v5028, %v5050
      %v5057 = vadd.f32 %v5029, %v5046
      %v5058 = vadd.f32 %v5030, %v5050
      %v5059 = vadd.f32 %v5031, %v5046
      %v5060 = vadd.f32 %v5032, %v5050
      %v5061 = vadd.f32 %v5033, %v5046
      %v5062 = vadd.f32 %v5034, %v5050
      %v5063 = vadd.f32 %v5035, %v5046
      %v5064 = vadd.f32 %v5036, %v5050
      %v5065 = vadd.f32 %v5037, %v5046
      %v5066 = vadd.f32 %v5038, %v5050
      %v5067 = vadd.f32 %v5039, %v5046
      %v5068 = vadd.f32 %v5040, %v5050
      %v5069 = vxor.u32 %v5053, 2147483648
      %v5070 = vxor.u32 %v5054, 2147483648
      %v5071 = vxor.u32 %v5055, 2147483648
      %v5072 = vxor.u32 %v5056, 2147483648
      %v5073 = vxor.u32 %v5057, 2147483648
      %v5074 = vxor.u32 %v5058, 2147483648
      %v5075 = vxor.u32 %v5059, 2147483648
      %v5076 = vxor.u32 %v5060, 2147483648
      %v5077 = vxor.u32 %v5061, 2147483648
      %v5078 = vxor.u32 %v5062, 2147483648
      %v5079 = vxor.u32 %v5063, 2147483648
      %v5080 = vxor.u32 %v5064, 2147483648
      %v5081 = vxor.u32 %v5065, 2147483648
      %v5082 = vxor.u32 %v5066, 2147483648
      %v5083 = vxor.u32 %v5067, 2147483648
      %v5084 = vxor.u32 %v5068, 2147483648
      %v5085 = vmul.f32 %v5069, 1.442695
      %v5086 = vpow.pop %v5085
      %v5087 = vmul.f32 %v5070, 1.442695
      %v5088 = vpow.pop %v5087
      %v5089 = vmul.f32 %v5071, 1.442695
      %v5090 = vpow.pop %v5089
      %v5091 = vmul.f32 %v5072, 1.442695
      %v5092 = vpow.pop %v5091
      %v5093 = vmul.f32 %v5073, 1.442695
      %v5094 = vpow.pop %v5093
      %v5095 = vmul.f32 %v5074, 1.442695
      %v5096 = vpow.pop %v5095
      %v5097 = vmul.f32 %v5075, 1.442695
      %v5098 = vpow.pop %v5097
      %v5099 = vmul.f32 %v5076, 1.442695
      %v5100 = vpow.pop %v5099
      %v5101 = vmul.f32 %v5077, 1.442695
      %v5102 = vpow.pop %v5101
      %v5103 = vmul.f32 %v5078, 1.442695
      %v5104 = vpow.pop %v5103
      %v5105 = vmul.f32 %v5079, 1.442695
      %v5106 = vpow.pop %v5105
      %v5107 = vmul.f32 %v5080, 1.442695
      %v5108 = vpow.pop %v5107
      %v5109 = vmul.f32 %v5081, 1.442695
      %v5110 = vpow.pop %v5109
      %v5111 = vmul.f32 %v5082, 1.442695
      %v5112 = vpow.pop %v5111
      %v5113 = vmul.f32 %v5083, 1.442695
      %v5114 = vpow.pop %v5113
      %v5115 = vmul.f32 %v5084, 1.442695
      %v5116 = vpow.pop %v5115
      %v5117 = vadd.f32 %v5086, 1.0
      %v5118 = vadd.f32 %v5088, 1.0
      %v5119 = vadd.f32 %v5090, 1.0
      %v5120 = vadd.f32 %v5092, 1.0
      %v5121 = vadd.f32 %v5094, 1.0
      %v5122 = vadd.f32 %v5096, 1.0
      %v5123 = vadd.f32 %v5098, 1.0
      %v5124 = vadd.f32 %v5100, 1.0
      %v5125 = vadd.f32 %v5102, 1.0
      %v5126 = vadd.f32 %v5104, 1.0
      %v5127 = vadd.f32 %v5106, 1.0
      %v5128 = vadd.f32 %v5108, 1.0
      %v5129 = vadd.f32 %v5110, 1.0
      %v5130 = vadd.f32 %v5112, 1.0
      %v5131 = vadd.f32 %v5114, 1.0
      %v5132 = vadd.f32 %v5116, 1.0
      %v5133 = vrcp.pop %v5117
      %v5134 = vmul.f32 1.0, %v5133
      %v5135 = vrcp.pop %v5118
      %v5136 = vmul.f32 1.0, %v5135
      %v5137 = vrcp.pop %v5119
      %v5138 = vmul.f32 1.0, %v5137
      %v5139 = vrcp.pop %v5120
      %v5140 = vmul.f32 1.0, %v5139
      %v5141 = vrcp.pop %v5121
      %v5142 = vmul.f32 1.0, %v5141
      %v5143 = vrcp.pop %v5122
      %v5144 = vmul.f32 1.0, %v5143
      %v5145 = vrcp.pop %v5123
      %v5146 = vmul.f32 1.0, %v5145
      %v5147 = vrcp.pop %v5124
      %v5148 = vmul.f32 1.0, %v5147
      %v5149 = vrcp.pop %v5125
      %v5150 = vmul.f32 1.0, %v5149
      %v5151 = vrcp.pop %v5126
      %v5152 = vmul.f32 1.0, %v5151
      %v5153 = vrcp.pop %v5127
      %v5154 = vmul.f32 1.0, %v5153
      %v5155 = vrcp.pop %v5128
      %v5156 = vmul.f32 1.0, %v5155
      %v5157 = vrcp.pop %v5129
      %v5158 = vmul.f32 1.0, %v5157
      %v5159 = vrcp.pop %v5130
      %v5160 = vmul.f32 1.0, %v5159
      %v5161 = vrcp.pop %v5131
      %v5162 = vmul.f32 1.0, %v5161
      %v5163 = vrcp.pop %v5132
      %v5164 = vmul.f32 1.0, %v5163
      %v5165 = vmul.f32 %v5053, %v5134
      %v5166 = vmul.f32 %v5054, %v5136
      %v5167 = vmul.f32 %v5055, %v5138
      %v5168 = vmul.f32 %v5056, %v5140
      %v5169 = vmul.f32 %v5057, %v5142
      %v5170 = vmul.f32 %v5058, %v5144
      %v5171 = vmul.f32 %v5059, %v5146
      %v5172 = vmul.f32 %v5060, %v5148
      %v5173 = vmul.f32 %v5061, %v5150
      %v5174 = vmul.f32 %v5062, %v5152
      %v5175 = vmul.f32 %v5063, %v5154
      %v5176 = vmul.f32 %v5064, %v5156
      %v5177 = vmul.f32 %v5065, %v5158
      %v5178 = vmul.f32 %v5066, %v5160
      %v5179 = vmul.f32 %v5067, %v5162
      %v5180 = vmul.f32 %v5068, %v5164
      %v5181 = vld [vmem:[%s20 + $0x6] sm:$0x3]
      %v5183 = vlaneseq
      %v5184 = vshrl.u32 %v5183, 7
      %v5185 = vsub.s32 0, %v5184
      %v5186 = vrot.slane %v5181, %v5185
      %v5187 = vlaneseq
      %v5188 = vshrl.u32 %v5187, 7
      %v5189 = vsub.s32 1, %v5188
      %v5190 = vrot.slane %v5181, %v5189
      %v5193 = vmul.f32 %v5165, %v5186
      %v5194 = vmul.f32 %v5166, %v5190
      %v5195 = vmul.f32 %v5167, %v5186
      %v5196 = vmul.f32 %v5168, %v5190
      %v5197 = vmul.f32 %v5169, %v5186
      %v5198 = vmul.f32 %v5170, %v5190
      %v5199 = vmul.f32 %v5171, %v5186
      %v5200 = vmul.f32 %v5172, %v5190
      %v5201 = vmul.f32 %v5173, %v5186
      %v5202 = vmul.f32 %v5174, %v5190
      %v5203 = vmul.f32 %v5175, %v5186
      %v5204 = vmul.f32 %v5176, %v5190
      %v5205 = vmul.f32 %v5177, %v5186
      %v5206 = vmul.f32 %v5178, %v5190
      %v5207 = vmul.f32 %v5179, %v5186
      %v5208 = vmul.f32 %v5180, %v5190
      %v5209 = vadd.f32 %v5193, %v5194
      %v5210 = vadd.f32 %v5209, %v5195
      %v5211 = vadd.f32 %v5210, %v5196
      %v5212 = vadd.f32 %v5211, %v5197
      %v5213 = vadd.f32 %v5212, %v5198
      %v5214 = vadd.f32 %v5213, %v5199
      %v5215 = vadd.f32 %v5214, %v5200
      %v5216 = vadd.f32 %v5215, %v5201
      %v5217 = vadd.f32 %v5216, %v5202
      %v5218 = vadd.f32 %v5217, %v5203
      %v5219 = vadd.f32 %v5218, %v5204
      %v5220 = vadd.f32 %v5219, %v5205
      %v5221 = vadd.f32 %v5220, %v5206
      %v5222 = vadd.f32 %v5221, %v5207
      %v5223 = vadd.f32 %v5222, %v5208
      %5224 = vadd.xlane.f32.xlu0 %v5223
      %v5225 = vpop.xlane.xlu0 %5224
      %v5226 = vrot.slane %v5225, 4
      %v5227 = vadd.f32 %v5225, %v5226
      %v5228 = vrot.slane %v5227, 2
      %v5229 = vadd.f32 %v5227, %v5228
      %v5230 = vrot.slane %v5229, 1
      %v5231 = vadd.f32 %v5229, %v5230
      %s5232 = vtos %v5231
      %v5233 = vstv %s5232
      %v5234 = vadd.f32 %v4843, %v5233
      %v5235 = vld [vmem:[%s17 + $0x20] sm:$0xff]
      %v5236 = vld [vmem:[%s17 + $0x58] sm:$0xff]
      %v5237 = vld [vmem:[%s17 + $0x90] sm:$0xff]
      %v5238 = vld [vmem:[%s17 + $0xc8] sm:$0xff]
      %v5239 = vld [vmem:[%s17 + $0x100] sm:$0xff]
      %v5240 = vld [vmem:[%s17 + $0x138] sm:$0xff]
      %v5241 = vld [vmem:[%s17 + $0x170] sm:$0xff]
      %v5242 = vld [vmem:[%s17 + $0x1a8] sm:$0xff]
      %v5243 = vld [vmem:[%s17 + $0x1e0] sm:$0xff]
      %v5244 = vld [vmem:[%s17 + $0x218] sm:$0xff]
      %v5245 = vld [vmem:[%s17 + $0x250] sm:$0xff]
      %v5246 = vld [vmem:[%s17 + $0x288] sm:$0xff]
      %v5247 = vld [vmem:[%s17 + $0x2c0] sm:$0xff]
      %v5248 = vld [vmem:[%s17 + $0x2f8] sm:$0xff]
      %v5249 = vld [vmem:[%s17 + $0x330] sm:$0xff]
      %v5250 = vld [vmem:[%s17 + $0x368] sm:$0xff]
      %v5267 = vunpack.c.l.b16 %v5235
      %v5268 = vunpack.c.h.b16 %v5235
      %v5269 = vunpack.c.l.b16 %v5236
      %v5270 = vunpack.c.h.b16 %v5236
      %v5271 = vunpack.c.l.b16 %v5237
      %v5272 = vunpack.c.h.b16 %v5237
      %v5273 = vunpack.c.l.b16 %v5238
      %v5274 = vunpack.c.h.b16 %v5238
      %v5275 = vunpack.c.l.b16 %v5239
      %v5276 = vunpack.c.h.b16 %v5239
      %v5277 = vunpack.c.l.b16 %v5240
      %v5278 = vunpack.c.h.b16 %v5240
      %v5279 = vunpack.c.l.b16 %v5241
      %v5280 = vunpack.c.h.b16 %v5241
      %v5281 = vunpack.c.l.b16 %v5242
      %v5282 = vunpack.c.h.b16 %v5242
      %v5283 = vunpack.c.l.b16 %v5243
      %v5284 = vunpack.c.h.b16 %v5243
      %v5285 = vunpack.c.l.b16 %v5244
      %v5286 = vunpack.c.h.b16 %v5244
      %v5287 = vunpack.c.l.b16 %v5245
      %v5288 = vunpack.c.h.b16 %v5245
      %v5289 = vunpack.c.l.b16 %v5246
      %v5290 = vunpack.c.h.b16 %v5246
      %v5291 = vunpack.c.l.b16 %v5247
      %v5292 = vunpack.c.h.b16 %v5247
      %v5293 = vunpack.c.l.b16 %v5248
      %v5294 = vunpack.c.h.b16 %v5248
      %v5295 = vunpack.c.l.b16 %v5249
      %v5296 = vunpack.c.h.b16 %v5249
      %v5297 = vunpack.c.l.b16 %v5250
      %v5298 = vunpack.c.h.b16 %v5250
      %v5299 = vpack.c.b16 %v5269, %v5267
      %v5300 = vpack.c.b16 %v5270, %v5268
      %v5301 = vpack.c.b16 %v5273, %v5271
      %v5302 = vpack.c.b16 %v5274, %v5272
      %v5303 = vpack.c.b16 %v5277, %v5275
      %v5304 = vpack.c.b16 %v5278, %v5276
      %v5305 = vpack.c.b16 %v5281, %v5279
      %v5306 = vpack.c.b16 %v5282, %v5280
      %v5307 = vpack.c.b16 %v5285, %v5283
      %v5308 = vpack.c.b16 %v5286, %v5284
      %v5309 = vpack.c.b16 %v5289, %v5287
      %v5310 = vpack.c.b16 %v5290, %v5288
      %v5311 = vpack.c.b16 %v5293, %v5291
      %v5312 = vpack.c.b16 %v5294, %v5292
      %v5313 = vpack.c.b16 %v5297, %v5295
      %v5314 = vpack.c.b16 %v5298, %v5296
      %5331 = vmatprep.subr.bf16.mxu0 %v5300
      %5332 = vmatpush1.bf16.msra.mxu0 %v5299
      %5333 = vmatprep.subr.bf16.mxu0 %v5302
      %5334 = vmatpush1.bf16.msra.mxu0 %v5301
      %5335 = vmatprep.subr.bf16.mxu0 %v5304
      %5336 = vmatpush1.bf16.msra.mxu0 %v5303
      %5337 = vmatprep.subr.bf16.mxu0 %v5306
      %5338 = vmatpush1.bf16.msra.mxu0 %v5305
      %5339 = vmatprep.subr.bf16.mxu0 %v5308
      %5340 = vmatpush1.bf16.msra.mxu0 %v5307
      %5341 = vmatprep.subr.bf16.mxu0 %v5310
      %5342 = vmatpush1.bf16.msra.mxu0 %v5309
      %5343 = vmatprep.subr.bf16.mxu0 %v5312
      %5344 = vmatpush1.bf16.msra.mxu0 %v5311
      %5345 = vmatprep.subr.bf16.mxu0 %v5314
      %5346 = vmatpush1.bf16.msra.mxu0 %v5313
      %5347 = vmatprep.subr.bf16.mxu0 0
      %5348 = vmatpush1.bf16.msra.mxu0 0
      %5349 = vmatprep.subr.bf16.mxu0 0
      %5350 = vmatpush1.bf16.msra.mxu0 0
      %5351 = vmatprep.subr.bf16.mxu0 0
      %5352 = vmatpush1.bf16.msra.mxu0 0
      %5353 = vmatprep.subr.bf16.mxu0 0
      %5354 = vmatpush1.bf16.msra.mxu0 0
      %5355 = vmatprep.subr.bf16.mxu0 0
      %5356 = vmatpush1.bf16.msra.mxu0 0
      %5357 = vmatprep.subr.bf16.mxu0 0
      %5358 = vmatpush1.bf16.msra.mxu0 0
      %5359 = vmatprep.subr.bf16.mxu0 0
      %5360 = vmatpush1.bf16.msra.mxu0 0
      %5361 = vmatprep.subr.bf16.mxu0 0
      %5362 = vmatpush1.bf16.msra.mxu0 0
      %5363 = vmatprep.mubr.bf16.mxu0 0
      %5364 = vmatmul.mubr.bf16.gmra.mrb[0].mxu0 %v3667
      %v5365 = vpop.f32.mrb[0].mxu0
      %v5366 = vadd.f32 0.0, %v5365
      %v5367 = vpop.f32.mrb[0].mxu0
      %v5368 = vadd.f32 0.0, %v5367
      %v5369 = vpop.f32.mrb[0].mxu0
      %v5370 = vadd.f32 0.0, %v5369
      %v5371 = vpop.f32.mrb[0].mxu0
      %v5372 = vadd.f32 0.0, %v5371
      %5373 = vmatprep.mubr.bf16.mxu0 0
      %5374 = vmatmul.mubr.bf16.gmra.mrb[0].mxu0 %v3668
      %v5375 = vpop.f32.mrb[0].mxu0
      %v5376 = vadd.f32 0.0, %v5375
      %v5377 = vpop.f32.mrb[0].mxu0
      %v5378 = vadd.f32 0.0, %v5377
      %v5379 = vpop.f32.mrb[0].mxu0
      %v5380 = vadd.f32 0.0, %v5379
      %v5381 = vpop.f32.mrb[0].mxu0
      %v5382 = vadd.f32 0.0, %v5381
      %5383 = vmatprep.mubr.bf16.mxu0 0
      %5384 = vmatmul.mubr.bf16.gmra.mrb[0].mxu0 %v3669
      %v5385 = vpop.f32.mrb[0].mxu0
      %v5386 = vadd.f32 0.0, %v5385
      %v5387 = vpop.f32.mrb[0].mxu0
      %v5388 = vadd.f32 0.0, %v5387
      %v5389 = vpop.f32.mrb[0].mxu0
      %v5390 = vadd.f32 0.0, %v5389
      %v5391 = vpop.f32.mrb[0].mxu0
      %v5392 = vadd.f32 0.0, %v5391
      %5393 = vmatprep.mubr.bf16.mxu0 0
      %5394 = vmatmul.mubr.bf16.gmra.mrb[0].mxu0 %v3670
      %v5395 = vpop.f32.mrb[0].mxu0
      %v5396 = vadd.f32 0.0, %v5395
      %v5397 = vpop.f32.mrb[0].mxu0
      %v5398 = vadd.f32 0.0, %v5397
      %v5399 = vpop.f32.mrb[0].mxu0
      %v5400 = vadd.f32 0.0, %v5399
      %v5401 = vpop.f32.mrb[0].mxu0
      %v5402 = vadd.f32 0.0, %v5401
      %5403 = vdwg.mxu0
      %v5404 = vld [vmem:[%s18 + $0x8] sm:$0x3]
      %v5406 = vlaneseq
      %v5407 = vshrl.u32 %v5406, 7
      %v5408 = vsub.s32 0, %v5407
      %v5409 = vrot.slane %v5404, %v5408
      %v5410 = vlaneseq
      %v5411 = vshrl.u32 %v5410, 7
      %v5412 = vsub.s32 1, %v5411
      %v5413 = vrot.slane %v5404, %v5412
      %v5416 = vmul.f32 %v5366, %v5409
      %v5417 = vmul.f32 %v5368, %v5413
      %v5418 = vmul.f32 %v5370, %v5409
      %v5419 = vmul.f32 %v5372, %v5413
      %v5420 = vmul.f32 %v5376, %v5409
      %v5421 = vmul.f32 %v5378, %v5413
      %v5422 = vmul.f32 %v5380, %v5409
      %v5423 = vmul.f32 %v5382, %v5413
      %v5424 = vmul.f32 %v5386, %v5409
      %v5425 = vmul.f32 %v5388, %v5413
      %v5426 = vmul.f32 %v5390, %v5409
      %v5427 = vmul.f32 %v5392, %v5413
      %v5428 = vmul.f32 %v5396, %v5409
      %v5429 = vmul.f32 %v5398, %v5413
      %v5430 = vmul.f32 %v5400, %v5409
      %v5431 = vmul.f32 %v5402, %v5413
      %v5432 = vld [vmem:[%s19 + $0x8] sm:$0x3]
      %v5434 = vlaneseq
      %v5435 = vshrl.u32 %v5434, 7
      %v5436 = vsub.s32 0, %v5435
      %v5437 = vrot.slane %v5432, %v5436
      %v5438 = vlaneseq
      %v5439 = vshrl.u32 %v5438, 7
      %v5440 = vsub.s32 1, %v5439
      %v5441 = vrot.slane %v5432, %v5440
      %v5444 = vadd.f32 %v5416, %v5437
      %v5445 = vadd.f32 %v5417, %v5441
      %v5446 = vadd.f32 %v5418, %v5437
      %v5447 = vadd.f32 %v5419, %v5441
      %v5448 = vadd.f32 %v5420, %v5437
      %v5449 = vadd.f32 %v5421, %v5441
      %v5450 = vadd.f32 %v5422, %v5437
      %v5451 = vadd.f32 %v5423, %v5441
      %v5452 = vadd.f32 %v5424, %v5437
      %v5453 = vadd.f32 %v5425, %v5441
      %v5454 = vadd.f32 %v5426, %v5437
      %v5455 = vadd.f32 %v5427, %v5441
      %v5456 = vadd.f32 %v5428, %v5437
      %v5457 = vadd.f32 %v5429, %v5441
      %v5458 = vadd.f32 %v5430, %v5437
      %v5459 = vadd.f32 %v5431, %v5441
      %v5460 = vxor.u32 %v5444, 2147483648
      %v5461 = vxor.u32 %v5445, 2147483648
      %v5462 = vxor.u32 %v5446, 2147483648
      %v5463 = vxor.u32 %v5447, 2147483648
      %v5464 = vxor.u32 %v5448, 2147483648
      %v5465 = vxor.u32 %v5449, 2147483648
      %v5466 = vxor.u32 %v5450, 2147483648
      %v5467 = vxor.u32 %v5451, 2147483648
      %v5468 = vxor.u32 %v5452, 2147483648
      %v5469 = vxor.u32 %v5453, 2147483648
      %v5470 = vxor.u32 %v5454, 2147483648
      %v5471 = vxor.u32 %v5455, 2147483648
      %v5472 = vxor.u32 %v5456, 2147483648
      %v5473 = vxor.u32 %v5457, 2147483648
      %v5474 = vxor.u32 %v5458, 2147483648
      %v5475 = vxor.u32 %v5459, 2147483648
      %v5476 = vmul.f32 %v5460, 1.442695
      %v5477 = vpow.pop %v5476
      %v5478 = vmul.f32 %v5461, 1.442695
      %v5479 = vpow.pop %v5478
      %v5480 = vmul.f32 %v5462, 1.442695
      %v5481 = vpow.pop %v5480
      %v5482 = vmul.f32 %v5463, 1.442695
      %v5483 = vpow.pop %v5482
      %v5484 = vmul.f32 %v5464, 1.442695
      %v5485 = vpow.pop %v5484
      %v5486 = vmul.f32 %v5465, 1.442695
      %v5487 = vpow.pop %v5486
      %v5488 = vmul.f32 %v5466, 1.442695
      %v5489 = vpow.pop %v5488
      %v5490 = vmul.f32 %v5467, 1.442695
      %v5491 = vpow.pop %v5490
      %v5492 = vmul.f32 %v5468, 1.442695
      %v5493 = vpow.pop %v5492
      %v5494 = vmul.f32 %v5469, 1.442695
      %v5495 = vpow.pop %v5494
      %v5496 = vmul.f32 %v5470, 1.442695
      %v5497 = vpow.pop %v5496
      %v5498 = vmul.f32 %v5471, 1.442695
      %v5499 = vpow.pop %v5498
      %v5500 = vmul.f32 %v5472, 1.442695
      %v5501 = vpow.pop %v5500
      %v5502 = vmul.f32 %v5473, 1.442695
      %v5503 = vpow.pop %v5502
      %v5504 = vmul.f32 %v5474, 1.442695
      %v5505 = vpow.pop %v5504
      %v5506 = vmul.f32 %v5475, 1.442695
      %v5507 = vpow.pop %v5506
      %v5508 = vadd.f32 %v5477, 1.0
      %v5509 = vadd.f32 %v5479, 1.0
      %v5510 = vadd.f32 %v5481, 1.0
      %v5511 = vadd.f32 %v5483, 1.0
      %v5512 = vadd.f32 %v5485, 1.0
      %v5513 = vadd.f32 %v5487, 1.0
      %v5514 = vadd.f32 %v5489, 1.0
      %v5515 = vadd.f32 %v5491, 1.0
      %v5516 = vadd.f32 %v5493, 1.0
      %v5517 = vadd.f32 %v5495, 1.0
      %v5518 = vadd.f32 %v5497, 1.0
      %v5519 = vadd.f32 %v5499, 1.0
      %v5520 = vadd.f32 %v5501, 1.0
      %v5521 = vadd.f32 %v5503, 1.0
      %v5522 = vadd.f32 %v5505, 1.0
      %v5523 = vadd.f32 %v5507, 1.0
      %v5524 = vrcp.pop %v5508
      %v5525 = vmul.f32 1.0, %v5524
      %v5526 = vrcp.pop %v5509
      %v5527 = vmul.f32 1.0, %v5526
      %v5528 = vrcp.pop %v5510
      %v5529 = vmul.f32 1.0, %v5528
      %v5530 = vrcp.pop %v5511
      %v5531 = vmul.f32 1.0, %v5530
      %v5532 = vrcp.pop %v5512
      %v5533 = vmul.f32 1.0, %v5532
      %v5534 = vrcp.pop %v5513
      %v5535 = vmul.f32 1.0, %v5534
      %v5536 = vrcp.pop %v5514
      %v5537 = vmul.f32 1.0, %v5536
      %v5538 = vrcp.pop %v5515
      %v5539 = vmul.f32 1.0, %v5538
      %v5540 = vrcp.pop %v5516
      %v5541 = vmul.f32 1.0, %v5540
      %v5542 = vrcp.pop %v5517
      %v5543 = vmul.f32 1.0, %v5542
      %v5544 = vrcp.pop %v5518
      %v5545 = vmul.f32 1.0, %v5544
      %v5546 = vrcp.pop %v5519
      %v5547 = vmul.f32 1.0, %v5546
      %v5548 = vrcp.pop %v5520
      %v5549 = vmul.f32 1.0, %v5548
      %v5550 = vrcp.pop %v5521
      %v5551 = vmul.f32 1.0, %v5550
      %v5552 = vrcp.pop %v5522
      %v5553 = vmul.f32 1.0, %v5552
      %v5554 = vrcp.pop %v5523
      %v5555 = vmul.f32 1.0, %v5554
      %v5556 = vmul.f32 %v5444, %v5525
      %v5557 = vmul.f32 %v5445, %v5527
      %v5558 = vmul.f32 %v5446, %v5529
      %v5559 = vmul.f32 %v5447, %v5531
      %v5560 = vmul.f32 %v5448, %v5533
      %v5561 = vmul.f32 %v5449, %v5535
      %v5562 = vmul.f32 %v5450, %v5537
      %v5563 = vmul.f32 %v5451, %v5539
      %v5564 = vmul.f32 %v5452, %v5541
      %v5565 = vmul.f32 %v5453, %v5543
      %v5566 = vmul.f32 %v5454, %v5545
      %v5567 = vmul.f32 %v5455, %v5547
      %v5568 = vmul.f32 %v5456, %v5549
      %v5569 = vmul.f32 %v5457, %v5551
      %v5570 = vmul.f32 %v5458, %v5553
      %v5571 = vmul.f32 %v5459, %v5555
      %v5572 = vld [vmem:[%s20 + $0x8] sm:$0x3]
      %v5574 = vlaneseq
      %v5575 = vshrl.u32 %v5574, 7
      %v5576 = vsub.s32 0, %v5575
      %v5577 = vrot.slane %v5572, %v5576
      %v5578 = vlaneseq
      %v5579 = vshrl.u32 %v5578, 7
      %v5580 = vsub.s32 1, %v5579
      %v5581 = vrot.slane %v5572, %v5580
      %v5584 = vmul.f32 %v5556, %v5577
      %v5585 = vmul.f32 %v5557, %v5581
      %v5586 = vmul.f32 %v5558, %v5577
      %v5587 = vmul.f32 %v5559, %v5581
      %v5588 = vmul.f32 %v5560, %v5577
      %v5589 = vmul.f32 %v5561, %v5581
      %v5590 = vmul.f32 %v5562, %v5577
      %v5591 = vmul.f32 %v5563, %v5581
      %v5592 = vmul.f32 %v5564, %v5577
      %v5593 = vmul.f32 %v5565, %v5581
      %v5594 = vmul.f32 %v5566, %v5577
      %v5595 = vmul.f32 %v5567, %v5581
      %v5596 = vmul.f32 %v5568, %v5577
      %v5597 = vmul.f32 %v5569, %v5581
      %v5598 = vmul.f32 %v5570, %v5577
      %v5599 = vmul.f32 %v5571, %v5581
      %v5600 = vadd.f32 %v5584, %v5585
      %v5601 = vadd.f32 %v5600, %v5586
      %v5602 = vadd.f32 %v5601, %v5587
      %v5603 = vadd.f32 %v5602, %v5588
      %v5604 = vadd.f32 %v5603, %v5589
      %v5605 = vadd.f32 %v5604, %v5590
      %v5606 = vadd.f32 %v5605, %v5591
      %v5607 = vadd.f32 %v5606, %v5592
      %v5608 = vadd.f32 %v5607, %v5593
      %v5609 = vadd.f32 %v5608, %v5594
      %v5610 = vadd.f32 %v5609, %v5595
      %v5611 = vadd.f32 %v5610, %v5596
      %v5612 = vadd.f32 %v5611, %v5597
      %v5613 = vadd.f32 %v5612, %v5598
      %v5614 = vadd.f32 %v5613, %v5599
      %5615 = vadd.xlane.f32.xlu0 %v5614
      %v5616 = vpop.xlane.xlu0 %5615
      %v5617 = vrot.slane %v5616, 4
      %v5618 = vadd.f32 %v5616, %v5617
      %v5619 = vrot.slane %v5618, 2
      %v5620 = vadd.f32 %v5618, %v5619
      %v5621 = vrot.slane %v5620, 1
      %v5622 = vadd.f32 %v5620, %v5621
      %s5623 = vtos %v5622
      %v5624 = vstv %s5623
      %v5625 = vadd.f32 %v5234, %v5624
      %v5626 = vld [vmem:[%s17 + $0x28] sm:$0xff]
      %v5627 = vld [vmem:[%s17 + $0x60] sm:$0xff]
      %v5628 = vld [vmem:[%s17 + $0x98] sm:$0xff]
      %v5629 = vld [vmem:[%s17 + $0xd0] sm:$0xff]
      %v5630 = vld [vmem:[%s17 + $0x108] sm:$0xff]
      %v5631 = vld [vmem:[%s17 + $0x140] sm:$0xff]
      %v5632 = vld [vmem:[%s17 + $0x178] sm:$0xff]
      %v5633 = vld [vmem:[%s17 + $0x1b0] sm:$0xff]
      %v5634 = vld [vmem:[%s17 + $0x1e8] sm:$0xff]
      %v5635 = vld [vmem:[%s17 + $0x220] sm:$0xff]
      %v5636 = vld [vmem:[%s17 + $0x258] sm:$0xff]
      %v5637 = vld [vmem:[%s17 + $0x290] sm:$0xff]
      %v5638 = vld [vmem:[%s17 + $0x2c8] sm:$0xff]
      %v5639 = vld [vmem:[%s17 + $0x300] sm:$0xff]
      %v5640 = vld [vmem:[%s17 + $0x338] sm:$0xff]
      %v5641 = vld [vmem:[%s17 + $0x370] sm:$0xff]
      %v5658 = vunpack.c.l.b16 %v5626
      %v5659 = vunpack.c.h.b16 %v5626
      %v5660 = vunpack.c.l.b16 %v5627
      %v5661 = vunpack.c.h.b16 %v5627
      %v5662 = vunpack.c.l.b16 %v5628
      %v5663 = vunpack.c.h.b16 %v5628
      %v5664 = vunpack.c.l.b16 %v5629
      %v5665 = vunpack.c.h.b16 %v5629
      %v5666 = vunpack.c.l.b16 %v5630
      %v5667 = vunpack.c.h.b16 %v5630
      %v5668 = vunpack.c.l.b16 %v5631
      %v5669 = vunpack.c.h.b16 %v5631
      %v5670 = vunpack.c.l.b16 %v5632
      %v5671 = vunpack.c.h.b16 %v5632
      %v5672 = vunpack.c.l.b16 %v5633
      %v5673 = vunpack.c.h.b16 %v5633
      %v5674 = vunpack.c.l.b16 %v5634
      %v5675 = vunpack.c.h.b16 %v5634
      %v5676 = vunpack.c.l.b16 %v5635
      %v5677 = vunpack.c.h.b16 %v5635
      %v5678 = vunpack.c.l.b16 %v5636
      %v5679 = vunpack.c.h.b16 %v5636
      %v5680 = vunpack.c.l.b16 %v5637
      %v5681 = vunpack.c.h.b16 %v5637
      %v5682 = vunpack.c.l.b16 %v5638
      %v5683 = vunpack.c.h.b16 %v5638
      %v5684 = vunpack.c.l.b16 %v5639
      %v5685 = vunpack.c.h.b16 %v5639
      %v5686 = vunpack.c.l.b16 %v5640
      %v5687 = vunpack.c.h.b16 %v5640
      %v5688 = vunpack.c.l.b16 %v5641
      %v5689 = vunpack.c.h.b16 %v5641
      %v5690 = vpack.c.b16 %v5660, %v5658
      %v5691 = vpack.c.b16 %v5661, %v5659
      %v5692 = vpack.c.b16 %v5664, %v5662
      %v5693 = vpack.c.b16 %v5665, %v5663
      %v5694 = vpack.c.b16 %v5668, %v5666
      %v5695 = vpack.c.b16 %v5669, %v5667
      %v5696 = vpack.c.b16 %v5672, %v5670
      %v5697 = vpack.c.b16 %v5673, %v5671
      %v5698 = vpack.c.b16 %v5676, %v5674
      %v5699 = vpack.c.b16 %v5677, %v5675
      %v5700 = vpack.c.b16 %v5680, %v5678
      %v5701 = vpack.c.b16 %v5681, %v5679
      %v5702 = vpack.c.b16 %v5684, %v5682
      %v5703 = vpack.c.b16 %v5685, %v5683
      %v5704 = vpack.c.b16 %v5688, %v5686
      %v5705 = vpack.c.b16 %v5689, %v5687
      %5722 = vmatprep.subr.bf16.mxu0 %v5691
      %5723 = vmatpush1.bf16.msra.mxu0 %v5690
      %5724 = vmatprep.subr.bf16.mxu0 %v5693
      %5725 = vmatpush1.bf16.msra.mxu0 %v5692
      %5726 = vmatprep.subr.bf16.mxu0 %v5695
      %5727 = vmatpush1.bf16.msra.mxu0 %v5694
      %5728 = vmatprep.subr.bf16.mxu0 %v5697
      %5729 = vmatpush1.bf16.msra.mxu0 %v5696
      %5730 = vmatprep.subr.bf16.mxu0 %v5699
      %5731 = vmatpush1.bf16.msra.mxu0 %v5698
      %5732 = vmatprep.subr.bf16.mxu0 %v5701
      %5733 = vmatpush1.bf16.msra.mxu0 %v5700
      %5734 = vmatprep.subr.bf16.mxu0 %v5703
      %5735 = vmatpush1.bf16.msra.mxu0 %v5702
      %5736 = vmatprep.subr.bf16.mxu0 %v5705
      %5737 = vmatpush1.bf16.msra.mxu0 %v5704
      %5738 = vmatprep.subr.bf16.mxu0 0
      %5739 = vmatpush1.bf16.msra.mxu0 0
      %5740 = vmatprep.subr.bf16.mxu0 0
      %5741 = vmatpush1.bf16.msra.mxu0 0
      %5742 = vmatprep.subr.bf16.mxu0 0
      %5743 = vmatpush1.bf16.msra.mxu0 0
      %5744 = vmatprep.subr.bf16.mxu0 0
      %5745 = vmatpush1.bf16.msra.mxu0 0
      %5746 = vmatprep.subr.bf16.mxu0 0
      %5747 = vmatpush1.bf16.msra.mxu0 0
      %5748 = vmatprep.subr.bf16.mxu0 0
      %5749 = vmatpush1.bf16.msra.mxu0 0
      %5750 = vmatprep.subr.bf16.mxu0 0
      %5751 = vmatpush1.bf16.msra.mxu0 0
      %5752 = vmatprep.subr.bf16.mxu0 0
      %5753 = vmatpush1.bf16.msra.mxu0 0
      %5754 = vmatprep.mubr.bf16.mxu0 0
      %5755 = vmatmul.mubr.bf16.gmra.mrb[0].mxu0 %v3667
      %v5756 = vpop.f32.mrb[0].mxu0
      %v5757 = vadd.f32 0.0, %v5756
      %v5758 = vpop.f32.mrb[0].mxu0
      %v5759 = vadd.f32 0.0, %v5758
      %v5760 = vpop.f32.mrb[0].mxu0
      %v5761 = vadd.f32 0.0, %v5760
      %v5762 = vpop.f32.mrb[0].mxu0
      %v5763 = vadd.f32 0.0, %v5762
      %5764 = vmatprep.mubr.bf16.mxu0 0
      %5765 = vmatmul.mubr.bf16.gmra.mrb[0].mxu0 %v3668
      %v5766 = vpop.f32.mrb[0].mxu0
      %v5767 = vadd.f32 0.0, %v5766
      %v5768 = vpop.f32.mrb[0].mxu0
      %v5769 = vadd.f32 0.0, %v5768
      %v5770 = vpop.f32.mrb[0].mxu0
      %v5771 = vadd.f32 0.0, %v5770
      %v5772 = vpop.f32.mrb[0].mxu0
      %v5773 = vadd.f32 0.0, %v5772
      %5774 = vmatprep.mubr.bf16.mxu0 0
      %5775 = vmatmul.mubr.bf16.gmra.mrb[0].mxu0 %v3669
      %v5776 = vpop.f32.mrb[0].mxu0
      %v5777 = vadd.f32 0.0, %v5776
      %v5778 = vpop.f32.mrb[0].mxu0
      %v5779 = vadd.f32 0.0, %v5778
      %v5780 = vpop.f32.mrb[0].mxu0
      %v5781 = vadd.f32 0.0, %v5780
      %v5782 = vpop.f32.mrb[0].mxu0
      %v5783 = vadd.f32 0.0, %v5782
      %5784 = vmatprep.mubr.bf16.mxu0 0
      %5785 = vmatmul.mubr.bf16.gmra.mrb[0].mxu0 %v3670
      %v5786 = vpop.f32.mrb[0].mxu0
      %v5787 = vadd.f32 0.0, %v5786
      %v5788 = vpop.f32.mrb[0].mxu0
      %v5789 = vadd.f32 0.0, %v5788
      %v5790 = vpop.f32.mrb[0].mxu0
      %v5791 = vadd.f32 0.0, %v5790
      %v5792 = vpop.f32.mrb[0].mxu0
      %v5793 = vadd.f32 0.0, %v5792
      %5794 = vdwg.mxu0
      %v5795 = vld [vmem:[%s18 + $0xa] sm:$0x3]
      %v5797 = vlaneseq
      %v5798 = vshrl.u32 %v5797, 7
      %v5799 = vsub.s32 0, %v5798
      %v5800 = vrot.slane %v5795, %v5799
      %v5801 = vlaneseq
      %v5802 = vshrl.u32 %v5801, 7
      %v5803 = vsub.s32 1, %v5802
      %v5804 = vrot.slane %v5795, %v5803
      %v5807 = vmul.f32 %v5757, %v5800
      %v5808 = vmul.f32 %v5759, %v5804
      %v5809 = vmul.f32 %v5761, %v5800
      %v5810 = vmul.f32 %v5763, %v5804
      %v5811 = vmul.f32 %v5767, %v5800
      %v5812 = vmul.f32 %v5769, %v5804
      %v5813 = vmul.f32 %v5771, %v5800
      %v5814 = vmul.f32 %v5773, %v5804
      %v5815 = vmul.f32 %v5777, %v5800
      %v5816 = vmul.f32 %v5779, %v5804
      %v5817 = vmul.f32 %v5781, %v5800
      %v5818 = vmul.f32 %v5783, %v5804
      %v5819 = vmul.f32 %v5787, %v5800
      %v5820 = vmul.f32 %v5789, %v5804
      %v5821 = vmul.f32 %v5791, %v5800
      %v5822 = vmul.f32 %v5793, %v5804
      %v5823 = vld [vmem:[%s19 + $0xa] sm:$0x3]
      %v5825 = vlaneseq
      %v5826 = vshrl.u32 %v5825, 7
      %v5827 = vsub.s32 0, %v5826
      %v5828 = vrot.slane %v5823, %v5827
      %v5829 = vlaneseq
      %v5830 = vshrl.u32 %v5829, 7
      %v5831 = vsub.s32 1, %v5830
      %v5832 = vrot.slane %v5823, %v5831
      %v5835 = vadd.f32 %v5807, %v5828
      %v5836 = vadd.f32 %v5808, %v5832
      %v5837 = vadd.f32 %v5809, %v5828
      %v5838 = vadd.f32 %v5810, %v5832
      %v5839 = vadd.f32 %v5811, %v5828
      %v5840 = vadd.f32 %v5812, %v5832
      %v5841 = vadd.f32 %v5813, %v5828
      %v5842 = vadd.f32 %v5814, %v5832
      %v5843 = vadd.f32 %v5815, %v5828
      %v5844 = vadd.f32 %v5816, %v5832
      %v5845 = vadd.f32 %v5817, %v5828
      %v5846 = vadd.f32 %v5818, %v5832
      %v5847 = vadd.f32 %v5819, %v5828
      %v5848 = vadd.f32 %v5820, %v5832
      %v5849 = vadd.f32 %v5821, %v5828
      %v5850 = vadd.f32 %v5822, %v5832
      %v5851 = vxor.u32 %v5835, 2147483648
      %v5852 = vxor.u32 %v5836, 2147483648
      %v5853 = vxor.u32 %v5837, 2147483648
      %v5854 = vxor.u32 %v5838, 2147483648
      %v5855 = vxor.u32 %v5839, 2147483648
      %v5856 = vxor.u32 %v5840, 2147483648
      %v5857 = vxor.u32 %v5841, 2147483648
      %v5858 = vxor.u32 %v5842, 2147483648
      %v5859 = vxor.u32 %v5843, 2147483648
      %v5860 = vxor.u32 %v5844, 2147483648
      %v5861 = vxor.u32 %v5845, 2147483648
      %v5862 = vxor.u32 %v5846, 2147483648
      %v5863 = vxor.u32 %v5847, 2147483648
      %v5864 = vxor.u32 %v5848, 2147483648
      %v5865 = vxor.u32 %v5849, 2147483648
      %v5866 = vxor.u32 %v5850, 2147483648
      %v5867 = vmul.f32 %v5851, 1.442695
      %v5868 = vpow.pop %v5867
      %v5869 = vmul.f32 %v5852, 1.442695
      %v5870 = vpow.pop %v5869
      %v5871 = vmul.f32 %v5853, 1.442695
      %v5872 = vpow.pop %v5871
      %v5873 = vmul.f32 %v5854, 1.442695
      %v5874 = vpow.pop %v5873
      %v5875 = vmul.f32 %v5855, 1.442695
      %v5876 = vpow.pop %v5875
      %v5877 = vmul.f32 %v5856, 1.442695
      %v5878 = vpow.pop %v5877
      %v5879 = vmul.f32 %v5857, 1.442695
      %v5880 = vpow.pop %v5879
      %v5881 = vmul.f32 %v5858, 1.442695
      %v5882 = vpow.pop %v5881
      %v5883 = vmul.f32 %v5859, 1.442695
      %v5884 = vpow.pop %v5883
      %v5885 = vmul.f32 %v5860, 1.442695
      %v5886 = vpow.pop %v5885
      %v5887 = vmul.f32 %v5861, 1.442695
      %v5888 = vpow.pop %v5887
      %v5889 = vmul.f32 %v5862, 1.442695
      %v5890 = vpow.pop %v5889
      %v5891 = vmul.f32 %v5863, 1.442695
      %v5892 = vpow.pop %v5891
      %v5893 = vmul.f32 %v5864, 1.442695
      %v5894 = vpow.pop %v5893
      %v5895 = vmul.f32 %v5865, 1.442695
      %v5896 = vpow.pop %v5895
      %v5897 = vmul.f32 %v5866, 1.442695
      %v5898 = vpow.pop %v5897
      %v5899 = vadd.f32 %v5868, 1.0
      %v5900 = vadd.f32 %v5870, 1.0
      %v5901 = vadd.f32 %v5872, 1.0
      %v5902 = vadd.f32 %v5874, 1.0
      %v5903 = vadd.f32 %v5876, 1.0
      %v5904 = vadd.f32 %v5878, 1.0
      %v5905 = vadd.f32 %v5880, 1.0
      %v5906 = vadd.f32 %v5882, 1.0
      %v5907 = vadd.f32 %v5884, 1.0
      %v5908 = vadd.f32 %v5886, 1.0
      %v5909 = vadd.f32 %v5888, 1.0
      %v5910 = vadd.f32 %v5890, 1.0
      %v5911 = vadd.f32 %v5892, 1.0
      %v5912 = vadd.f32 %v5894, 1.0
      %v5913 = vadd.f32 %v5896, 1.0
      %v5914 = vadd.f32 %v5898, 1.0
      %v5915 = vrcp.pop %v5899
      %v5916 = vmul.f32 1.0, %v5915
      %v5917 = vrcp.pop %v5900
      %v5918 = vmul.f32 1.0, %v5917
      %v5919 = vrcp.pop %v5901
      %v5920 = vmul.f32 1.0, %v5919
      %v5921 = vrcp.pop %v5902
      %v5922 = vmul.f32 1.0, %v5921
      %v5923 = vrcp.pop %v5903
      %v5924 = vmul.f32 1.0, %v5923
      %v5925 = vrcp.pop %v5904
      %v5926 = vmul.f32 1.0, %v5925
      %v5927 = vrcp.pop %v5905
      %v5928 = vmul.f32 1.0, %v5927
      %v5929 = vrcp.pop %v5906
      %v5930 = vmul.f32 1.0, %v5929
      %v5931 = vrcp.pop %v5907
      %v5932 = vmul.f32 1.0, %v5931
      %v5933 = vrcp.pop %v5908
      %v5934 = vmul.f32 1.0, %v5933
      %v5935 = vrcp.pop %v5909
      %v5936 = vmul.f32 1.0, %v5935
      %v5937 = vrcp.pop %v5910
      %v5938 = vmul.f32 1.0, %v5937
      %v5939 = vrcp.pop %v5911
      %v5940 = vmul.f32 1.0, %v5939
      %v5941 = vrcp.pop %v5912
      %v5942 = vmul.f32 1.0, %v5941
      %v5943 = vrcp.pop %v5913
      %v5944 = vmul.f32 1.0, %v5943
      %v5945 = vrcp.pop %v5914
      %v5946 = vmul.f32 1.0, %v5945
      %v5947 = vmul.f32 %v5835, %v5916
      %v5948 = vmul.f32 %v5836, %v5918
      %v5949 = vmul.f32 %v5837, %v5920
      %v5950 = vmul.f32 %v5838, %v5922
      %v5951 = vmul.f32 %v5839, %v5924
      %v5952 = vmul.f32 %v5840, %v5926
      %v5953 = vmul.f32 %v5841, %v5928
      %v5954 = vmul.f32 %v5842, %v5930
      %v5955 = vmul.f32 %v5843, %v5932
      %v5956 = vmul.f32 %v5844, %v5934
      %v5957 = vmul.f32 %v5845, %v5936
      %v5958 = vmul.f32 %v5846, %v5938
      %v5959 = vmul.f32 %v5847, %v5940
      %v5960 = vmul.f32 %v5848, %v5942
      %v5961 = vmul.f32 %v5849, %v5944
      %v5962 = vmul.f32 %v5850, %v5946
      %v5963 = vld [vmem:[%s20 + $0xa] sm:$0x3]
      %v5965 = vlaneseq
      %v5966 = vshrl.u32 %v5965, 7
      %v5967 = vsub.s32 0, %v5966
      %v5968 = vrot.slane %v5963, %v5967
      %v5969 = vlaneseq
      %v5970 = vshrl.u32 %v5969, 7
      %v5971 = vsub.s32 1, %v5970
      %v5972 = vrot.slane %v5963, %v5971
      %v5975 = vmul.f32 %v5947, %v5968
      %v5976 = vmul.f32 %v5948, %v5972
      %v5977 = vmul.f32 %v5949, %v5968
      %v5978 = vmul.f32 %v5950, %v5972
      %v5979 = vmul.f32 %v5951, %v5968
      %v5980 = vmul.f32 %v5952, %v5972
      %v5981 = vmul.f32 %v5953, %v5968
      %v5982 = vmul.f32 %v5954, %v5972
      %v5983 = vmul.f32 %v5955, %v5968
      %v5984 = vmul.f32 %v5956, %v5972
      %v5985 = vmul.f32 %v5957, %v5968
      %v5986 = vmul.f32 %v5958, %v5972
      %v5987 = vmul.f32 %v5959, %v5968
      %v5988 = vmul.f32 %v5960, %v5972
      %v5989 = vmul.f32 %v5961, %v5968
      %v5990 = vmul.f32 %v5962, %v5972
      %v5991 = vadd.f32 %v5975, %v5976
      %v5992 = vadd.f32 %v5991, %v5977
      %v5993 = vadd.f32 %v5992, %v5978
      %v5994 = vadd.f32 %v5993, %v5979
      %v5995 = vadd.f32 %v5994, %v5980
      %v5996 = vadd.f32 %v5995, %v5981
      %v5997 = vadd.f32 %v5996, %v5982
      %v5998 = vadd.f32 %v5997, %v5983
      %v5999 = vadd.f32 %v5998, %v5984
      %v6000 = vadd.f32 %v5999, %v5985
      %v6001 = vadd.f32 %v6000, %v5986
      %v6002 = vadd.f32 %v6001, %v5987
      %v6003 = vadd.f32 %v6002, %v5988
      %v6004 = vadd.f32 %v6003, %v5989
      %v6005 = vadd.f32 %v6004, %v5990
      %6006 = vadd.xlane.f32.xlu0 %v6005
      %v6007 = vpop.xlane.xlu0 %6006
      %v6008 = vrot.slane %v6007, 4
      %v6009 = vadd.f32 %v6007, %v6008
      %v6010 = vrot.slane %v6009, 2
      %v6011 = vadd.f32 %v6009, %v6010
      %v6012 = vrot.slane %v6011, 1
      %v6013 = vadd.f32 %v6011, %v6012
      %s6014 = vtos %v6013
      %v6015 = vstv %s6014
      %v6016 = vadd.f32 %v5625, %v6015
      %v6017 = vld [vmem:[%s17 + $0x30] sm:$0xff]
      %v6018 = vld [vmem:[%s17 + $0x68] sm:$0xff]
      %v6019 = vld [vmem:[%s17 + $0xa0] sm:$0xff]
      %v6020 = vld [vmem:[%s17 + $0xd8] sm:$0xff]
      %v6021 = vld [vmem:[%s17 + $0x110] sm:$0xff]
      %v6022 = vld [vmem:[%s17 + $0x148] sm:$0xff]
      %v6023 = vld [vmem:[%s17 + $0x180] sm:$0xff]
      %v6024 = vld [vmem:[%s17 + $0x1b8] sm:$0xff]
      %v6025 = vld [vmem:[%s17 + $0x1f0] sm:$0xff]
      %v6026 = vld [vmem:[%s17 + $0x228] sm:$0xff]
      %v6027 = vld [vmem:[%s17 + $0x260] sm:$0xff]
      %v6028 = vld [vmem:[%s17 + $0x298] sm:$0xff]
      %v6029 = vld [vmem:[%s17 + $0x2d0] sm:$0xff]
      %v6030 = vld [vmem:[%s17 + $0x308] sm:$0xff]
      %v6031 = vld [vmem:[%s17 + $0x340] sm:$0xff]
      %v6032 = vld [vmem:[%s17 + $0x378] sm:$0xff]
      %v6049 = vunpack.c.l.b16 %v6017
      %v6050 = vunpack.c.h.b16 %v6017
      %v6051 = vunpack.c.l.b16 %v6018
      %v6052 = vunpack.c.h.b16 %v6018
      %v6053 = vunpack.c.l.b16 %v6019
      %v6054 = vunpack.c.h.b16 %v6019
      %v6055 = vunpack.c.l.b16 %v6020
      %v6056 = vunpack.c.h.b16 %v6020
      %v6057 = vunpack.c.l.b16 %v6021
      %v6058 = vunpack.c.h.b16 %v6021
      %v6059 = vunpack.c.l.b16 %v6022
      %v6060 = vunpack.c.h.b16 %v6022
      %v6061 = vunpack.c.l.b16 %v6023
      %v6062 = vunpack.c.h.b16 %v6023
      %v6063 = vunpack.c.l.b16 %v6024
      %v6064 = vunpack.c.h.b16 %v6024
      %v6065 = vunpack.c.l.b16 %v6025
      %v6066 = vunpack.c.h.b16 %v6025
      %v6067 = vunpack.c.l.b16 %v6026
      %v6068 = vunpack.c.h.b16 %v6026
      %v6069 = vunpack.c.l.b16 %v6027
      %v6070 = vunpack.c.h.b16 %v6027
      %v6071 = vunpack.c.l.b16 %v6028
      %v6072 = vunpack.c.h.b16 %v6028
      %v6073 = vunpack.c.l.b16 %v6029
      %v6074 = vunpack.c.h.b16 %v6029
      %v6075 = vunpack.c.l.b16 %v6030
      %v6076 = vunpack.c.h.b16 %v6030
      %v6077 = vunpack.c.l.b16 %v6031
      %v6078 = vunpack.c.h.b16 %v6031
      %v6079 = vunpack.c.l.b16 %v6032
      %v6080 = vunpack.c.h.b16 %v6032
      %v6081 = vpack.c.b16 %v6051, %v6049
      %v6082 = vpack.c.b16 %v6052, %v6050
      %v6083 = vpack.c.b16 %v6055, %v6053
      %v6084 = vpack.c.b16 %v6056, %v6054
      %v6085 = vpack.c.b16 %v6059, %v6057
      %v6086 = vpack.c.b16 %v6060, %v6058
      %v6087 = vpack.c.b16 %v6063, %v6061
      %v6088 = vpack.c.b16 %v6064, %v6062
      %v6089 = vpack.c.b16 %v6067, %v6065
      %v6090 = vpack.c.b16 %v6068, %v6066
      %v6091 = vpack.c.b16 %v6071, %v6069
      %v6092 = vpack.c.b16 %v6072, %v6070
      %v6093 = vpack.c.b16 %v6075, %v6073
      %v6094 = vpack.c.b16 %v6076, %v6074
      %v6095 = vpack.c.b16 %v6079, %v6077
      %v6096 = vpack.c.b16 %v6080, %v6078
      %6113 = vmatprep.subr.bf16.mxu0 %v6082
      %6114 = vmatpush1.bf16.msra.mxu0 %v6081
      %6115 = vmatprep.subr.bf16.mxu0 %v6084
      %6116 = vmatpush1.bf16.msra.mxu0 %v6083
      %6117 = vmatprep.subr.bf16.mxu0 %v6086
      %6118 = vmatpush1.bf16.msra.mxu0 %v6085
      %6119 = vmatprep.subr.bf16.mxu0 %v6088
      %6120 = vmatpush1.bf16.msra.mxu0 %v6087
      %6121 = vmatprep.subr.bf16.mxu0 %v6090
      %6122 = vmatpush1.bf16.msra.mxu0 %v6089
      %6123 = vmatprep.subr.bf16.mxu0 %v6092
      %6124 = vmatpush1.bf16.msra.mxu0 %v6091
      %6125 = vmatprep.subr.bf16.mxu0 %v6094
      %6126 = vmatpush1.bf16.msra.mxu0 %v6093
      %6127 = vmatprep.subr.bf16.mxu0 %v6096
      %6128 = vmatpush1.bf16.msra.mxu0 %v6095
      %6129 = vmatprep.subr.bf16.mxu0 0
      %6130 = vmatpush1.bf16.msra.mxu0 0
      %6131 = vmatprep.subr.bf16.mxu0 0
      %6132 = vmatpush1.bf16.msra.mxu0 0
      %6133 = vmatprep.subr.bf16.mxu0 0
      %6134 = vmatpush1.bf16.msra.mxu0 0
      %6135 = vmatprep.subr.bf16.mxu0 0
      %6136 = vmatpush1.bf16.msra.mxu0 0
      %6137 = vmatprep.subr.bf16.mxu0 0
      %6138 = vmatpush1.bf16.msra.mxu0 0
      %6139 = vmatprep.subr.bf16.mxu0 0
      %6140 = vmatpush1.bf16.msra.mxu0 0
      %6141 = vmatprep.subr.bf16.mxu0 0
      %6142 = vmatpush1.bf16.msra.mxu0 0
      %6143 = vmatprep.subr.bf16.mxu0 0
      %6144 = vmatpush1.bf16.msra.mxu0 0
      %6145 = vmatprep.mubr.bf16.mxu0 0
      %6146 = vmatmul.mubr.bf16.gmra.mrb[0].mxu0 %v3667
      %v6147 = vpop.f32.mrb[0].mxu0
      %v6148 = vadd.f32 0.0, %v6147
      %v6149 = vpop.f32.mrb[0].mxu0
      %v6150 = vadd.f32 0.0, %v6149
      %v6151 = vpop.f32.mrb[0].mxu0
      %v6152 = vadd.f32 0.0, %v6151
      %v6153 = vpop.f32.mrb[0].mxu0
      %v6154 = vadd.f32 0.0, %v6153
      %6155 = vmatprep.mubr.bf16.mxu0 0
      %6156 = vmatmul.mubr.bf16.gmra.mrb[0].mxu0 %v3668
      %v6157 = vpop.f32.mrb[0].mxu0
      %v6158 = vadd.f32 0.0, %v6157
      %v6159 = vpop.f32.mrb[0].mxu0
      %v6160 = vadd.f32 0.0, %v6159
      %v6161 = vpop.f32.mrb[0].mxu0
      %v6162 = vadd.f32 0.0, %v6161
      %v6163 = vpop.f32.mrb[0].mxu0
      %v6164 = vadd.f32 0.0, %v6163
      %6165 = vmatprep.mubr.bf16.mxu0 0
      %6166 = vmatmul.mubr.bf16.gmra.mrb[0].mxu0 %v3669
      %v6167 = vpop.f32.mrb[0].mxu0
      %v6168 = vadd.f32 0.0, %v6167
      %v6169 = vpop.f32.mrb[0].mxu0
      %v6170 = vadd.f32 0.0, %v6169
      %v6171 = vpop.f32.mrb[0].mxu0
      %v6172 = vadd.f32 0.0, %v6171
      %v6173 = vpop.f32.mrb[0].mxu0
      %v6174 = vadd.f32 0.0, %v6173
      %6175 = vmatprep.mubr.bf16.mxu0 0
      %6176 = vmatmul.mubr.bf16.gmra.mrb[0].mxu0 %v3670
      %v6177 = vpop.f32.mrb[0].mxu0
      %v6178 = vadd.f32 0.0, %v6177
      %v6179 = vpop.f32.mrb[0].mxu0
      %v6180 = vadd.f32 0.0, %v6179
      %v6181 = vpop.f32.mrb[0].mxu0
      %v6182 = vadd.f32 0.0, %v6181
      %v6183 = vpop.f32.mrb[0].mxu0
      %v6184 = vadd.f32 0.0, %v6183
      %6185 = vdwg.mxu0
      %v6186 = vld [vmem:[%s18 + $0xc] sm:$0x3]
      %v6188 = vlaneseq
      %v6189 = vshrl.u32 %v6188, 7
      %v6190 = vsub.s32 0, %v6189
      %v6191 = vrot.slane %v6186, %v6190
      %v6192 = vlaneseq
      %v6193 = vshrl.u32 %v6192, 7
      %v6194 = vsub.s32 1, %v6193
      %v6195 = vrot.slane %v6186, %v6194
      %v6198 = vmul.f32 %v6148, %v6191
      %v6199 = vmul.f32 %v6150, %v6195
      %v6200 = vmul.f32 %v6152, %v6191
      %v6201 = vmul.f32 %v6154, %v6195
      %v6202 = vmul.f32 %v6158, %v6191
      %v6203 = vmul.f32 %v6160, %v6195
      %v6204 = vmul.f32 %v6162, %v6191
      %v6205 = vmul.f32 %v6164, %v6195
      %v6206 = vmul.f32 %v6168, %v6191
      %v6207 = vmul.f32 %v6170, %v6195
      %v6208 = vmul.f32 %v6172, %v6191
      %v6209 = vmul.f32 %v6174, %v6195
      %v6210 = vmul.f32 %v6178, %v6191
      %v6211 = vmul.f32 %v6180, %v6195
      %v6212 = vmul.f32 %v6182, %v6191
      %v6213 = vmul.f32 %v6184, %v6195
      %v6214 = vld [vmem:[%s19 + $0xc] sm:$0x3]
      %v6216 = vlaneseq
      %v6217 = vshrl.u32 %v6216, 7
      %v6218 = vsub.s32 0, %v6217
      %v6219 = vrot.slane %v6214, %v6218
      %v6220 = vlaneseq
      %v6221 = vshrl.u32 %v6220, 7
      %v6222 = vsub.s32 1, %v6221
      %v6223 = vrot.slane %v6214, %v6222
      %v6226 = vadd.f32 %v6198, %v6219
      %v6227 = vadd.f32 %v6199, %v6223
      %v6228 = vadd.f32 %v6200, %v6219
      %v6229 = vadd.f32 %v6201, %v6223
      %v6230 = vadd.f32 %v6202, %v6219
      %v6231 = vadd.f32 %v6203, %v6223
      %v6232 = vadd.f32 %v6204, %v6219
      %v6233 = vadd.f32 %v6205, %v6223
      %v6234 = vadd.f32 %v6206, %v6219
      %v6235 = vadd.f32 %v6207, %v6223
      %v6236 = vadd.f32 %v6208, %v6219
      %v6237 = vadd.f32 %v6209, %v6223
      %v6238 = vadd.f32 %v6210, %v6219
      %v6239 = vadd.f32 %v6211, %v6223
      %v6240 = vadd.f32 %v6212, %v6219
      %v6241 = vadd.f32 %v6213, %v6223
      %v6242 = vxor.u32 %v6226, 2147483648
      %v6243 = vxor.u32 %v6227, 2147483648
      %v6244 = vxor.u32 %v6228, 2147483648
      %v6245 = vxor.u32 %v6229, 2147483648
      %v6246 = vxor.u32 %v6230, 2147483648
      %v6247 = vxor.u32 %v6231, 2147483648
      %v6248 = vxor.u32 %v6232, 2147483648
      %v6249 = vxor.u32 %v6233, 2147483648
      %v6250 = vxor.u32 %v6234, 2147483648
      %v6251 = vxor.u32 %v6235, 2147483648
      %v6252 = vxor.u32 %v6236, 2147483648
      %v6253 = vxor.u32 %v6237, 2147483648
      %v6254 = vxor.u32 %v6238, 2147483648
      %v6255 = vxor.u32 %v6239, 2147483648
      %v6256 = vxor.u32 %v6240, 2147483648
      %v6257 = vxor.u32 %v6241, 2147483648
      %v6258 = vmul.f32 %v6242, 1.442695
      %v6259 = vpow.pop %v6258
      %v6260 = vmul.f32 %v6243, 1.442695
      %v6261 = vpow.pop %v6260
      %v6262 = vmul.f32 %v6244, 1.442695
      %v6263 = vpow.pop %v6262
      %v6264 = vmul.f32 %v6245, 1.442695
      %v6265 = vpow.pop %v6264
      %v6266 = vmul.f32 %v6246, 1.442695
      %v6267 = vpow.pop %v6266
      %v6268 = vmul.f32 %v6247, 1.442695
      %v6269 = vpow.pop %v6268
      %v6270 = vmul.f32 %v6248, 1.442695
      %v6271 = vpow.pop %v6270
      %v6272 = vmul.f32 %v6249, 1.442695
      %v6273 = vpow.pop %v6272
      %v6274 = vmul.f32 %v6250, 1.442695
      %v6275 = vpow.pop %v6274
      %v6276 = vmul.f32 %v6251, 1.442695
      %v6277 = vpow.pop %v6276
      %v6278 = vmul.f32 %v6252, 1.442695
      %v6279 = vpow.pop %v6278
      %v6280 = vmul.f32 %v6253, 1.442695
      %v6281 = vpow.pop %v6280
      %v6282 = vmul.f32 %v6254, 1.442695
      %v6283 = vpow.pop %v6282
      %v6284 = vmul.f32 %v6255, 1.442695
      %v6285 = vpow.pop %v6284
      %v6286 = vmul.f32 %v6256, 1.442695
      %v6287 = vpow.pop %v6286
      %v6288 = vmul.f32 %v6257, 1.442695
      %v6289 = vpow.pop %v6288
      %v6290 = vadd.f32 %v6259, 1.0
      %v6291 = vadd.f32 %v6261, 1.0
      %v6292 = vadd.f32 %v6263, 1.0
      %v6293 = vadd.f32 %v6265, 1.0
      %v6294 = vadd.f32 %v6267, 1.0
      %v6295 = vadd.f32 %v6269, 1.0
      %v6296 = vadd.f32 %v6271, 1.0
      %v6297 = vadd.f32 %v6273, 1.0
      %v6298 = vadd.f32 %v6275, 1.0
      %v6299 = vadd.f32 %v6277, 1.0
      %v6300 = vadd.f32 %v6279, 1.0
      %v6301 = vadd.f32 %v6281, 1.0
      %v6302 = vadd.f32 %v6283, 1.0
      %v6303 = vadd.f32 %v6285, 1.0
      %v6304 = vadd.f32 %v6287, 1.0
      %v6305 = vadd.f32 %v6289, 1.0
      %v6306 = vrcp.pop %v6290
      %v6307 = vmul.f32 1.0, %v6306
      %v6308 = vrcp.pop %v6291
      %v6309 = vmul.f32 1.0, %v6308
      %v6310 = vrcp.pop %v6292
      %v6311 = vmul.f32 1.0, %v6310
      %v6312 = vrcp.pop %v6293
      %v6313 = vmul.f32 1.0, %v6312
      %v6314 = vrcp.pop %v6294
      %v6315 = vmul.f32 1.0, %v6314
      %v6316 = vrcp.pop %v6295
      %v6317 = vmul.f32 1.0, %v6316
      %v6318 = vrcp.pop %v6296
      %v6319 = vmul.f32 1.0, %v6318
      %v6320 = vrcp.pop %v6297
      %v6321 = vmul.f32 1.0, %v6320
      %v6322 = vrcp.pop %v6298
      %v6323 = vmul.f32 1.0, %v6322
      %v6324 = vrcp.pop %v6299
      %v6325 = vmul.f32 1.0, %v6324
      %v6326 = vrcp.pop %v6300
      %v6327 = vmul.f32 1.0, %v6326
      %v6328 = vrcp.pop %v6301
      %v6329 = vmul.f32 1.0, %v6328
      %v6330 = vrcp.pop %v6302
      %v6331 = vmul.f32 1.0, %v6330
      %v6332 = vrcp.pop %v6303
      %v6333 = vmul.f32 1.0, %v6332
      %v6334 = vrcp.pop %v6304
      %v6335 = vmul.f32 1.0, %v6334
      %v6336 = vrcp.pop %v6305
      %v6337 = vmul.f32 1.0, %v6336
      %v6338 = vmul.f32 %v6226, %v6307
      %v6339 = vmul.f32 %v6227, %v6309
      %v6340 = vmul.f32 %v6228, %v6311
      %v6341 = vmul.f32 %v6229, %v6313
      %v6342 = vmul.f32 %v6230, %v6315
      %v6343 = vmul.f32 %v6231, %v6317
      %v6344 = vmul.f32 %v6232, %v6319
      %v6345 = vmul.f32 %v6233, %v6321
      %v6346 = vmul.f32 %v6234, %v6323
      %v6347 = vmul.f32 %v6235, %v6325
      %v6348 = vmul.f32 %v6236, %v6327
      %v6349 = vmul.f32 %v6237, %v6329
      %v6350 = vmul.f32 %v6238, %v6331
      %v6351 = vmul.f32 %v6239, %v6333
      %v6352 = vmul.f32 %v6240, %v6335
      %v6353 = vmul.f32 %v6241, %v6337
      %v6354 = vld [vmem:[%s20 + $0xc] sm:$0x3]
      %v6356 = vlaneseq
      %v6357 = vshrl.u32 %v6356, 7
      %v6358 = vsub.s32 0, %v6357
      %v6359 = vrot.slane %v6354, %v6358
      %v6360 = vlaneseq
      %v6361 = vshrl.u32 %v6360, 7
      %v6362 = vsub.s32 1, %v6361
      %v6363 = vrot.slane %v6354, %v6362
      %v6366 = vmul.f32 %v6338, %v6359
      %v6367 = vmul.f32 %v6339, %v6363
      %v6368 = vmul.f32 %v6340, %v6359
      %v6369 = vmul.f32 %v6341, %v6363
      %v6370 = vmul.f32 %v6342, %v6359
      %v6371 = vmul.f32 %v6343, %v6363
      %v6372 = vmul.f32 %v6344, %v6359
      %v6373 = vmul.f32 %v6345, %v6363
      %v6374 = vmul.f32 %v6346, %v6359
      %v6375 = vmul.f32 %v6347, %v6363
      %v6376 = vmul.f32 %v6348, %v6359
      %v6377 = vmul.f32 %v6349, %v6363
      %v6378 = vmul.f32 %v6350, %v6359
      %v6379 = vmul.f32 %v6351, %v6363
      %v6380 = vmul.f32 %v6352, %v6359
      %v6381 = vmul.f32 %v6353, %v6363
      %v6382 = vadd.f32 %v6366, %v6367
      %v6383 = vadd.f32 %v6382, %v6368
      %v6384 = vadd.f32 %v6383, %v6369
      %v6385 = vadd.f32 %v6384, %v6370
      %v6386 = vadd.f32 %v6385, %v6371
      %v6387 = vadd.f32 %v6386, %v6372
      %v6388 = vadd.f32 %v6387, %v6373
      %v6389 = vadd.f32 %v6388, %v6374
      %v6390 = vadd.f32 %v6389, %v6375
      %v6391 = vadd.f32 %v6390, %v6376
      %v6392 = vadd.f32 %v6391, %v6377
      %v6393 = vadd.f32 %v6392, %v6378
      %v6394 = vadd.f32 %v6393, %v6379
      %v6395 = vadd.f32 %v6394, %v6380
      %v6396 = vadd.f32 %v6395, %v6381
      %6397 = vadd.xlane.f32.xlu0 %v6396
      %v6398 = vpop.xlane.xlu0 %6397
      %v6399 = vrot.slane %v6398, 4
      %v6400 = vadd.f32 %v6398, %v6399
      %v6401 = vrot.slane %v6400, 2
      %v6402 = vadd.f32 %v6400, %v6401
      %v6403 = vrot.slane %v6402, 1
      %v6404 = vadd.f32 %v6402, %v6403
      %s6405 = vtos %v6404
      %v6406 = vstv %s6405
      %v6407 = vadd.f32 %v6016, %v6406
      %v6408 = vmul.f32 %v6407, 0.015625
      %v6409 = vld [vmem:[#allocation3] sm:$0x1]
      %v6410 = vadd.f32 %v6408, %v6409
      %v6412 = vlaneseq
      %v6413 = vshrl.u32 %v6412, 7
      %v6414 = vsub.s32 0, %v6413
      %v6415 = vrot.slane %v6410, %v6414
      %6416 = vset.pattern.permute.xlu0 0
      %6417 = vperm.xlu0 %6416, %v6415
      %v6418 = vpop.permute.xlu0 %6417
      %6420 = vst [vmem:[%s683] sm:$0xff] %v6418
      %p6421 = scmp.lt.s32.totalorder %s35, 1
      %s6422 = scalar_select %p6421, %s35, 1
      %s6423 = smul.addr %s6422, 8
      %s6424 = scalar_lea.vmem %s22, %s6423
      // Predicated region
      $region109: #{forward.1} parent=107 // pred_check
        %p6425 = pneg %p520
      $region110: #{forward.1} parent=107 // pred_check_branch
        %6427 = sbr.rel (%p6425) target = $region112
      $region111: #{forward.1} parent=107 // pred_region
        _
      $region112: #{forward.1} parent=107 // pred_fallthru
        _
    $region108: #{forward.1} parent=5 // pred_fallthru
      _
    %p6428 = scmp.le.s32.totalorder 2, %s30
    // Predicated region
    $region113: #{forward.1} parent=5 // pred_check
      %p6429 = pneg %p6428
    $region114: #{forward.1} parent=5 // pred_check_branch
      %6431 = sbr.rel (%p6429) target = $region116
    $region115: #{forward.1} parent=5 // pred_region
      %s6432 = ssub.s32 %s30, 2
      // Predicated region
      $region117: #{forward.1} parent=115 // pred_check
        %p6433 = pneg %p526
      $region118: #{forward.1} parent=115 // pred_check_branch
        %6435 = sbr.rel (%p6433) target = $region120
      $region119: #{forward.1} parent=115 // pred_region
        %p6436 = scmp.lt.s32.totalorder %s36, 1
        %s6437 = scalar_select %p6436, %s36, 1
        %s6438 = smul.addr %s6437, 8
        %s6439 = scalar_lea.vmem %s22, %s6438
      $region120: #{forward.1} parent=115 // pred_fallthru
        _
    $region116: #{forward.1} parent=5 // pred_fallthru
      _
  $region6: #{forward.1} parent=0 // loop_footer
    %s34 = sadd.s32 1, %s30
  $region7: #{forward.1} parent=0 // loop_footer_branch
    %29 = sbr.rel target = $region3
  $region8: #{forward.1} parent=0 // loop_exit
    _

</llo_original>
